<compile_context>
chip_gen: v7x
topology: tpu7x:2x2x1
jax: 0.10.0
libtpu: 0.0.40
codegen_flags: <defaults>
</compile_context>

<pallas_src>
import functools

import jax
import jax.numpy as jnp
from jax.experimental import pallas as pl
from jax.experimental.pallas import tpu as pltpu


# ----------------------------------------------------------------------------
# helpers
# ----------------------------------------------------------------------------
def _full_spec(shape):
    # Single-block spec: whole (small) array lives in VMEM.
    return pl.BlockSpec(shape, lambda i: (0,) * len(shape))


_CPARAMS = pltpu.CompilerParams(
    dimension_semantics=("arbitrary",),
    vmem_limit_bytes=48 * 1024 * 1024,
)


def _fold_cols(x, groups, width):
    """Sum `groups` adjacent column blocks of width `width`: (1, g*w) -> (1, w)."""
    acc = x[:, 0:width]
    for t in range(1, groups):
        acc = acc + x[:, t * width:(t + 1) * width]
    return acc


def _tile_cols(v, reps):
    """(1, w) -> (1, reps*w) by concatenation along lanes."""
    return jnp.concatenate([v] * reps, axis=1)


# ----------------------------------------------------------------------------
# Pallas kernels
# ----------------------------------------------------------------------------
def _l1_kernel(z_ref, c_ref, w_ref, gamma_ref, beta_ref, o_ref, *,
               z_scale, method, cout, taps, eps):
    """Layer 1: condition(z) -> GEMM (ConvT on 1x1) -> BN(batch stats) -> ReLU."""
    z = z_scale * z_ref[...]                          # f32 prologue (condition)
    if method == "mul":
        z = z * c_ref[...]
    else:  # "add"
        z = z + c_ref[...]
    acc = jnp.dot(z.astype(jnp.bfloat16), w_ref[...],
                  preferred_element_type=jnp.float32)   # (N, taps*cout) f32
    inv_cnt = 1.0 / float(acc.shape[0] * taps)          # N * 4*4 pixels/channel
    s1 = jnp.sum(acc, axis=0, keepdims=True)
    s2 = jnp.sum(acc * acc, axis=0, keepdims=True)
    mean = _fold_cols(s1, taps, cout) * inv_cnt
    var = jnp.maximum(_fold_cols(s2, taps, cout) * inv_cnt - mean * mean, 0.0)
    scale = gamma_ref[...] * jax.lax.rsqrt(var + eps)
    shift = beta_ref[...] - mean * scale
    y = acc * _tile_cols(scale, taps) + _tile_cols(shift, taps)
    o_ref[...] = jnp.maximum(y, 0.0).astype(o_ref.dtype)


def _convt_bn_relu_kernel(p_ref, w_ref, gamma_ref, beta_ref, o_ref, *,
                          n_batch, grid_g, cout, eps):
    """K-fused phase-decomposed ConvT(4,2,1) GEMM + masked BN(batch) + ReLU."""
    acc = jnp.dot(p_ref[...], w_ref[...],
                  preferred_element_type=jnp.float32)   # (M, 4*cout) f32
    mrows, ncols = acc.shape
    g = grid_g
    gf = float(g)
    inv_g = 1.0 / gf

    # In-kernel border masks (entries cropped after the kernel must be excluded
    # from the BN statistics).  Flat row r of M = N*g*g decomposes as
    # gi=(r//g)%g, hi=r%g; the floor-div is done in exact f32 arithmetic
    # (+0.5 bias keeps it exact for r << 2^22, far beyond single-block sizes),
    # avoiding any reliance on vector integer div/mod.
    rf = jax.lax.broadcasted_iota(jnp.int32, (mrows, 1), 0).astype(jnp.float32)
    q1 = ((rf + 0.5) * inv_g).astype(jnp.int32).astype(jnp.float32)   # r // g
    hi = rf - gf * q1                                                  # r %  g
    q2 = ((q1 + 0.5) * inv_g).astype(jnp.int32).astype(jnp.float32)   # r//g//g
    gi = q1 - gf * q2                                                  # (r//g)%g
    gi0 = (gi < 0.5).astype(jnp.float32)           # (M,1)
    giL = (gi > gf - 1.5).astype(jnp.float32)
    hi0 = (hi < 0.5).astype(jnp.float32)
    hiL = (hi > gf - 1.5).astype(jnp.float32)
    # Columns are ordered (ph, pw, co) with cout a power of 2: ph is the high
    # bit, pw is bit log2(cout).
    c_i = jax.lax.broadcasted_iota(jnp.int32, (1, ncols), 1)
    ph1 = (c_i >= 2 * cout).astype(jnp.float32)    # (1, 4*cout)
    pw1 = (jnp.bitwise_and(c_i, cout) > 0).astype(jnp.float32)
    ph0 = 1.0 - ph1
    pw0 = 1.0 - pw1
    invalid = gi0 * ph0 + giL * ph1 + hi0 * pw0 + hiL * pw1   # broadcast (M,4c)
    valid = (invalid < 0.5).astype(jnp.float32)

    am = acc * valid
    s1 = jnp.sum(am, axis=0, keepdims=True)
    s2 = jnp.sum(am * acc, axis=0, keepdims=True)              # reuse am
    hout = 2 * (g - 1)
    inv_cnt = 1.0 / float(n_batch * hout * hout)                # valid px/chan
    mean = _fold_cols(s1, 4, cout) * inv_cnt
    var = jnp.maximum(_fold_cols(s2, 4, cout) * inv_cnt - mean * mean, 0.0)
    scale = gamma_ref[...] * jax.lax.rsqrt(var + eps)
    shift = beta_ref[...] - mean * scale
    y = acc * _tile_cols(scale, 4) + _tile_cols(shift, 4)
    o_ref[...] = jnp.maximum(y, 0.0).astype(o_ref.dtype)


def _convt_tanh_kernel(p_ref, w_ref, o_ref):
    """Final K-fused phase-decomposed ConvT GEMM with fused tanh (bf16 store)."""
    acc = jnp.dot(p_ref[...], w_ref[...], preferred_element_type=jnp.float32)
    o_ref[...] = jnp.tanh(acc).astype(o_ref.dtype)


# ----------------------------------------------------------------------------
# kernel wrappers
# ----------------------------------------------------------------------------
def l1_cond_gemm_bn_relu(z_prime, c, wmat, gamma, beta, *, z_scale, method,
                         cout, taps=16, eps=1e-5):
    n, k = z_prime.shape
    np_ = wmat.shape[1]
    kernel = functools.partial(_l1_kernel, z_scale=float(z_scale),
                               method=method, cout=cout, taps=taps, eps=eps)
    return pl.pallas_call(
        kernel, grid=(1,),
        out_shape=jax.ShapeDtypeStruct((n, np_), jnp.bfloat16),
        in_specs=[_full_spec((n, k)), _full_spec((n, k)), _full_spec((k, np_)),
                  _full_spec((1, cout)), _full_spec((1, cout))],
        out_specs=_full_spec((n, np_)),
        compiler_params=_CPARAMS,
    )(z_prime.astype(jnp.float32), c.astype(jnp.float32), wmat,
      gamma.reshape(1, cout).astype(jnp.float32),
      beta.reshape(1, cout).astype(jnp.float32))


def convt_phase_bn_relu(patches, wmat, gamma, beta, *, n_batch, grid_g, cout,
                        eps=1e-5):
    assert cout & (cout - 1) == 0, "in-kernel column mask needs power-of-2 cout"
    m, k = patches.shape
    ncols = wmat.shape[1]                       # 4*cout
    kernel = functools.partial(_convt_bn_relu_kernel, n_batch=n_batch,
                               grid_g=grid_g, cout=cout, eps=eps)
    return pl.pallas_call(
        kernel, grid=(1,),
        out_shape=jax.ShapeDtypeStruct((m, ncols), jnp.bfloat16),
        in_specs=[_full_spec((m, k)), _full_spec((k, ncols)),
                  _full_spec((1, cout)), _full_spec((1, cout))],
        out_specs=_full_spec((m, ncols)),
        compiler_params=_CPARAMS,
    )(patches, wmat,
      gamma.reshape(1, cout).astype(jnp.float32),
      beta.reshape(1, cout).astype(jnp.float32))


def convt_phase_tanh(patches, wmat):
    m, k = patches.shape
    ncols = wmat.shape[1]                       # 4*cout_pad (lane-dense, 128)
    return pl.pallas_call(
        _convt_tanh_kernel, grid=(1,),
        out_shape=jax.ShapeDtypeStruct((m, ncols), jnp.bfloat16),
        in_specs=[_full_spec((m, k)), _full_spec((k, ncols))],
        out_specs=_full_spec((m, ncols)),
        compiler_params=_CPARAMS,
    )(patches, wmat)


# ----------------------------------------------------------------------------
# phase-decomposition glue (cheap XLA pad/slice/transpose, fused under jit)
# ----------------------------------------------------------------------------
def _make_phase_weights(w, cout_pad=None):
    """PyTorch ConvTranspose2d weight (Cin,Cout,4,4) -> (4*Cin, 4*Cout) bf16.

    Rows are ordered (q=dr*2+dc, ci); columns are ordered (ph, pw, co); tap q
    maps to kernel position (kh, kw) = (ph + 2*(1-dr), pw + 2*(1-dc)).
    Optionally zero-pads Cout (lane-dense output for tiny channel counts).
    """
    cin, cout = w.shape[0], w.shape[1]
    if cout_pad is not None and cout_pad > cout:
        w = jnp.pad(w, ((0, 0), (0, cout_pad - cout), (0, 0), (0, 0)))
        cout = cout_pad
    taps = []
    for dr in (0, 1):
        for dc in (0, 1):
            sub = w[:, :, 2 * (1 - dr):2 * (1 - dr) + 2,
                       2 * (1 - dc):2 * (1 - dc) + 2]          # (cin,cout,ph,pw)
            taps.append(sub.transpose(0, 2, 3, 1).reshape(cin, 4 * cout))
    return jnp.concatenate(taps, axis=0).astype(jnp.bfloat16)  # (4*cin, 4*cout)


def _phase_patches(x_nhwc):
    """Single (M, 4*Cin) patch slab (K-concat of the 4 shifted phase windows)."""
    n, h, _, c = x_nhwc.shape
    xp = jnp.pad(x_nhwc, ((0, 0), (1, 1), (1, 1), (0, 0)))
    g = h + 1
    p = jnp.concatenate([xp[:, dr:dr + g, dc:dc + g, :]
                         for dr in (0, 1) for dc in (0, 1)], axis=-1)
    return p.reshape(n * g * g, 4 * c), g


def _phase_to_nhwc(out2d, n, g, cout, keep=None):
    """De-interleave phases (cols ordered ph,pw,co), crop border, drop pad chans."""
    o = out2d.reshape(n, g, g, 2, 2, cout)
    o = o.transpose(0, 1, 3, 2, 4, 5).reshape(n, 2 * g, 2 * g, cout)
    o = o[:, 1:2 * g - 1, 1:2 * g - 1, :]
    if keep is not None and keep < cout:
        o = o[..., :keep]
    return o


# ----------------------------------------------------------------------------
# ConditionalGenerator (imgSize=32) in JAX
# ----------------------------------------------------------------------------
class ConditionalGeneratorPallas:
    def __init__(self, key, *, nz=32, ngf=16, nc=3, n_conditions=10,
                 z_scale=1.0, conditioning_method="mul"):
        if conditioning_method not in ("mul", "add"):
            raise ValueError(conditioning_method)   # 'cat' is NotImplemented in ref
        self.nz = nz
        self.nc = nc
        self.z_scale = z_scale
        self.conditioning_method = conditioning_method
        self.n_conditions = n_conditions
        self.c1, self.c2, self.c3 = ngf * 8, ngf * 4, ngf * 2
        self.c4p = max(nc, 32)                      # lane-dense padded Cout

        ks = jax.random.split(key, 8)
        std = 0.02  # DCGAN-style deterministic init
        # ConvTranspose2d weights in PyTorch layout (Cin, Cout, 4, 4)
        w1 = std * jax.random.normal(ks[0], (nz, self.c1, 4, 4), jnp.float32)
        w2 = std * jax.random.normal(ks[1], (self.c1, self.c2, 4, 4), jnp.float32)
        w3 = std * jax.random.normal(ks[2], (self.c2, self.c3, 4, 4), jnp.float32)
        w4 = std * jax.random.normal(ks[3], (self.c3, nc, 4, 4), jnp.float32)
        # Layer 1 (1x1 input): GEMM weight with columns ordered (kh, kw, co)
        # so the output reshapes directly to NHWC.
        self.wmat1 = w1.transpose(0, 2, 3, 1).reshape(nz, 16 * self.c1).astype(jnp.bfloat16)
        # Layers 2-4: K-fused phase-decomposed weights (4*Cin, 4*Cout) bf16.
        self.wp2 = _make_phase_weights(w2)
        self.wp3 = _make_phase_weights(w3)
        self.wp4 = _make_phase_weights(w4, cout_pad=self.c4p)   # 3 -> 32 chans
        # BN affine params.
        self.gamma1 = jnp.ones((self.c1,), jnp.float32); self.beta1 = jnp.zeros((self.c1,), jnp.float32)
        self.gamma2 = jnp.ones((self.c2,), jnp.float32); self.beta2 = jnp.zeros((self.c2,), jnp.float32)
        self.gamma3 = jnp.ones((self.c3,), jnp.float32); self.beta3 = jnp.zeros((self.c3,), jnp.float32)
        # nn.Embedding default init: N(0, 1)
        self.label_emb = jax.random.normal(ks[4], (n_conditions, nz), jnp.float32)
        # TODO(synk): nn.Linear(cdim, nz) path (embed_condition=False) and
        # spectral-norm conv (sn=True) are not exercised by this config.
        self._fwd = jax.jit(self._forward_impl)

    def _forward_impl(self, z_prime, y):
        n = z_prime.shape[0]
        z_prime = z_prime.reshape(n, self.nz)
        c = jnp.take(self.label_emb, y, axis=0)            # embedding gather

        # Layer 1: condition + ConvT(nz->8ngf,4,1,0) + BN + ReLU (one kernel)
        h = l1_cond_gemm_bn_relu(z_prime, c, self.wmat1, self.gamma1, self.beta1,
                                 z_scale=self.z_scale,
                                 method=self.conditioning_method, cout=self.c1)
        x = h.reshape(n, 4, 4, self.c1)                    # NHWC, bf16

        # Layer 2: ConvT 4x4->8x8 + BN + ReLU (one kernel, one K-fused matmul)
        p, g = _phase_patches(x)
        o = convt_phase_bn_relu(p, self.wp2, self.gamma2, self.beta2,
                                n_batch=n, grid_g=g, cout=self.c2)
        x = _phase_to_nhwc(o, n, g, self.c2)               # (n,8,8,c2) bf16

        # Layer 3: ConvT 8x8->16x16 + BN + ReLU
        p, g = _phase_patches(x)
        o = convt_phase_bn_relu(p, self.wp3, self.gamma3, self.beta3,
                                n_batch=n, grid_g=g, cout=self.c3)
        x = _phase_to_nhwc(o, n, g, self.c3)               # (n,16,16,c3) bf16

        # Layer 4: ConvT 16x16->32x32 + tanh (lane-dense padded channels)
        p, g = _phase_patches(x)
        o = convt_phase_tanh(p, self.wp4)
        x = _phase_to_nhwc(o, n, g, self.c4p, keep=self.nc)   # (n,32,32,nc) bf16

        return x.transpose(0, 3, 1, 2).astype(jnp.float32)    # single NCHW convert

    def forward(self, z_prime, y):
        return self._fwd(z_prime, y)


if __name__ == "__main__":
    key = jax.random.PRNGKey(0)
    k_param, k_z, k_y = jax.random.split(key, 3)

    gen = ConditionalGeneratorPallas(k_param, nz=32, ngf=16, nc=3,
                                     n_conditions=10, z_scale=1.0,
                                     conditioning_method="mul")

    N = 2
    z_prime = jax.random.normal(k_z, (N, 32), jnp.float32)
    y = jax.random.randint(k_y, (N,), 0, 10, jnp.int32)

    out = gen.forward(z_prime, y)
    out = jax.block_until_ready(out)
    assert out.shape == (N, 3, 32, 32), out.shape
    assert bool(jnp.all(jnp.isfinite(out)))
    assert bool(jnp.all(jnp.abs(out) <= 1.0 + 1e-6))  # tanh range
    print("KERNEL_OK")
</pallas_src>

<mosaic_0001>
module attributes {stable_mosaic.version = 11 : i64} {
  func.func @_l1_kernel(%arg0: i32, %arg1: memref<2x32xf32, #tpu.memory_space<vmem>>, %arg2: memref<2x32xf32, #tpu.memory_space<vmem>>, %arg3: memref<32x2048xbf16, #tpu.memory_space<vmem>>, %arg4: memref<1x128xf32, #tpu.memory_space<vmem>>, %arg5: memref<1x128xf32, #tpu.memory_space<vmem>>, %arg6: memref<2x2048xbf16, #tpu.memory_space<vmem>>) attributes {dimension_semantics = [#tpu.dimension_semantics<arbitrary>], iteration_bounds = array<i64: 1>, scalar_prefetch = 0 : i64, scratch_operands = 0 : i64, tpu.core_type = #tpu.core_type<tc>, window_params = [{pipeline_mode = #tpu.pipeline_mode<synchronous>, transform_indices = @transform_0, window_bounds = array<i64: 2, 32>}, {pipeline_mode = #tpu.pipeline_mode<synchronous>, transform_indices = @transform_1, window_bounds = array<i64: 2, 32>}, {pipeline_mode = #tpu.pipeline_mode<synchronous>, transform_indices = @transform_2, window_bounds = array<i64: 32, 2048>}, {pipeline_mode = #tpu.pipeline_mode<synchronous>, transform_indices = @transform_3, window_bounds = array<i64: 1, 128>}, {pipeline_mode = #tpu.pipeline_mode<synchronous>, transform_indices = @transform_4, window_bounds = array<i64: 1, 128>}, {pipeline_mode = #tpu.pipeline_mode<synchronous>, transform_indices = @transform_5, window_bounds = array<i64: 2, 2048>}]} {
    %c0 = arith.constant 0 : index
    %c0_0 = arith.constant 0 : index
    %0 = vector.load %arg1[%c0, %c0_0] : memref<2x32xf32, #tpu.memory_space<vmem>>, vector<2x32xf32>
    %cst = arith.constant 1.000000e+00 : f32
    %1 = vector.broadcast %cst : f32 to vector<2x32xf32>
    %2 = arith.mulf %1, %0 : vector<2x32xf32>
    %c0_1 = arith.constant 0 : index
    %c0_2 = arith.constant 0 : index
    %3 = vector.load %arg2[%c0_1, %c0_2] : memref<2x32xf32, #tpu.memory_space<vmem>>, vector<2x32xf32>
    %4 = arith.mulf %2, %3 : vector<2x32xf32>
    %5 = arith.truncf %4 : vector<2x32xf32> to vector<2x32xbf16>
    %c0_3 = arith.constant 0 : index
    %c0_4 = arith.constant 0 : index
    %6 = vector.load %arg3[%c0_3, %c0_4] : memref<32x2048xbf16, #tpu.memory_space<vmem>>, vector<32x2048xbf16>
    %cst_5 = arith.constant dense<0.000000e+00> : vector<2x2048xf32>
    %7 = tpu.matmul %5, %6, %cst_5 {dimension_numbers = #tpu.dot_dimension_numbers<[1], [0], [0], [1], [0, 0, 1, 1], [], []>} : vector<2x32xbf16>, vector<32x2048xbf16>, vector<2x2048xf32> -> vector<2x2048xf32>
    %cst_6 = arith.constant dense<0.000000e+00> : vector<2048xf32>
    %8 = vector.multi_reduction <add>, %7, %cst_6 [0] : vector<2x2048xf32> to vector<2048xf32>
    %9 = vector.shape_cast %8 : vector<2048xf32> to vector<1x2048xf32>
    %10 = arith.mulf %7, %7 : vector<2x2048xf32>
    %cst_7 = arith.constant dense<0.000000e+00> : vector<2048xf32>
    %11 = vector.multi_reduction <add>, %10, %cst_7 [0] : vector<2x2048xf32> to vector<2048xf32>
    %12 = vector.shape_cast %11 : vector<2048xf32> to vector<1x2048xf32>
    %13 = vector.extract_strided_slice %9 {offsets = [0, 0], sizes = [1, 128], strides = [1, 1]} : vector<1x2048xf32> to vector<1x128xf32>
    %14 = vector.extract_strided_slice %9 {offsets = [0, 128], sizes = [1, 128], strides = [1, 1]} : vector<1x2048xf32> to vector<1x128xf32>
    %15 = arith.addf %13, %14 : vector<1x128xf32>
    %16 = vector.extract_strided_slice %9 {offsets = [0, 256], sizes = [1, 128], strides = [1, 1]} : vector<1x2048xf32> to vector<1x128xf32>
    %17 = arith.addf %15, %16 : vector<1x128xf32>
    %18 = vector.extract_strided_slice %9 {offsets = [0, 384], sizes = [1, 128], strides = [1, 1]} : vector<1x2048xf32> to vector<1x128xf32>
    %19 = arith.addf %17, %18 : vector<1x128xf32>
    %20 = vector.extract_strided_slice %9 {offsets = [0, 512], sizes = [1, 128], strides = [1, 1]} : vector<1x2048xf32> to vector<1x128xf32>
    %21 = arith.addf %19, %20 : vector<1x128xf32>
    %22 = vector.extract_strided_slice %9 {offsets = [0, 640], sizes = [1, 128], strides = [1, 1]} : vector<1x2048xf32> to vector<1x128xf32>
    %23 = arith.addf %21, %22 : vector<1x128xf32>
    %24 = vector.extract_strided_slice %9 {offsets = [0, 768], sizes = [1, 128], strides = [1, 1]} : vector<1x2048xf32> to vector<1x128xf32>
    %25 = arith.addf %23, %24 : vector<1x128xf32>
    %26 = vector.extract_strided_slice %9 {offsets = [0, 896], sizes = [1, 128], strides = [1, 1]} : vector<1x2048xf32> to vector<1x128xf32>
    %27 = arith.addf %25, %26 : vector<1x128xf32>
    %28 = vector.extract_strided_slice %9 {offsets = [0, 1024], sizes = [1, 128], strides = [1, 1]} : vector<1x2048xf32> to vector<1x128xf32>
    %29 = arith.addf %27, %28 : vector<1x128xf32>
    %30 = vector.extract_strided_slice %9 {offsets = [0, 1152], sizes = [1, 128], strides = [1, 1]} : vector<1x2048xf32> to vector<1x128xf32>
    %31 = arith.addf %29, %30 : vector<1x128xf32>
    %32 = vector.extract_strided_slice %9 {offsets = [0, 1280], sizes = [1, 128], strides = [1, 1]} : vector<1x2048xf32> to vector<1x128xf32>
    %33 = arith.addf %31, %32 : vector<1x128xf32>
    %34 = vector.extract_strided_slice %9 {offsets = [0, 1408], sizes = [1, 128], strides = [1, 1]} : vector<1x2048xf32> to vector<1x128xf32>
    %35 = arith.addf %33, %34 : vector<1x128xf32>
    %36 = vector.extract_strided_slice %9 {offsets = [0, 1536], sizes = [1, 128], strides = [1, 1]} : vector<1x2048xf32> to vector<1x128xf32>
    %37 = arith.addf %35, %36 : vector<1x128xf32>
    %38 = vector.extract_strided_slice %9 {offsets = [0, 1664], sizes = [1, 128], strides = [1, 1]} : vector<1x2048xf32> to vector<1x128xf32>
    %39 = arith.addf %37, %38 : vector<1x128xf32>
    %40 = vector.extract_strided_slice %9 {offsets = [0, 1792], sizes = [1, 128], strides = [1, 1]} : vector<1x2048xf32> to vector<1x128xf32>
    %41 = arith.addf %39, %40 : vector<1x128xf32>
    %42 = vector.extract_strided_slice %9 {offsets = [0, 1920], sizes = [1, 128], strides = [1, 1]} : vector<1x2048xf32> to vector<1x128xf32>
    %43 = arith.addf %41, %42 : vector<1x128xf32>
    %cst_8 = arith.constant 3.125000e-02 : f32
    %44 = vector.broadcast %cst_8 : f32 to vector<1x128xf32>
    %45 = arith.mulf %43, %44 : vector<1x128xf32>
    %46 = vector.extract_strided_slice %12 {offsets = [0, 0], sizes = [1, 128], strides = [1, 1]} : vector<1x2048xf32> to vector<1x128xf32>
    %47 = vector.extract_strided_slice %12 {offsets = [0, 128], sizes = [1, 128], strides = [1, 1]} : vector<1x2048xf32> to vector<1x128xf32>
    %48 = arith.addf %46, %47 : vector<1x128xf32>
    %49 = vector.extract_strided_slice %12 {offsets = [0, 256], sizes = [1, 128], strides = [1, 1]} : vector<1x2048xf32> to vector<1x128xf32>
    %50 = arith.addf %48, %49 : vector<1x128xf32>
    %51 = vector.extract_strided_slice %12 {offsets = [0, 384], sizes = [1, 128], strides = [1, 1]} : vector<1x2048xf32> to vector<1x128xf32>
    %52 = arith.addf %50, %51 : vector<1x128xf32>
    %53 = vector.extract_strided_slice %12 {offsets = [0, 512], sizes = [1, 128], strides = [1, 1]} : vector<1x2048xf32> to vector<1x128xf32>
    %54 = arith.addf %52, %53 : vector<1x128xf32>
    %55 = vector.extract_strided_slice %12 {offsets = [0, 640], sizes = [1, 128], strides = [1, 1]} : vector<1x2048xf32> to vector<1x128xf32>
    %56 = arith.addf %54, %55 : vector<1x128xf32>
    %57 = vector.extract_strided_slice %12 {offsets = [0, 768], sizes = [1, 128], strides = [1, 1]} : vector<1x2048xf32> to vector<1x128xf32>
    %58 = arith.addf %56, %57 : vector<1x128xf32>
    %59 = vector.extract_strided_slice %12 {offsets = [0, 896], sizes = [1, 128], strides = [1, 1]} : vector<1x2048xf32> to vector<1x128xf32>
    %60 = arith.addf %58, %59 : vector<1x128xf32>
    %61 = vector.extract_strided_slice %12 {offsets = [0, 1024], sizes = [1, 128], strides = [1, 1]} : vector<1x2048xf32> to vector<1x128xf32>
    %62 = arith.addf %60, %61 : vector<1x128xf32>
    %63 = vector.extract_strided_slice %12 {offsets = [0, 1152], sizes = [1, 128], strides = [1, 1]} : vector<1x2048xf32> to vector<1x128xf32>
    %64 = arith.addf %62, %63 : vector<1x128xf32>
    %65 = vector.extract_strided_slice %12 {offsets = [0, 1280], sizes = [1, 128], strides = [1, 1]} : vector<1x2048xf32> to vector<1x128xf32>
    %66 = arith.addf %64, %65 : vector<1x128xf32>
    %67 = vector.extract_strided_slice %12 {offsets = [0, 1408], sizes = [1, 128], strides = [1, 1]} : vector<1x2048xf32> to vector<1x128xf32>
    %68 = arith.addf %66, %67 : vector<1x128xf32>
    %69 = vector.extract_strided_slice %12 {offsets = [0, 1536], sizes = [1, 128], strides = [1, 1]} : vector<1x2048xf32> to vector<1x128xf32>
    %70 = arith.addf %68, %69 : vector<1x128xf32>
    %71 = vector.extract_strided_slice %12 {offsets = [0, 1664], sizes = [1, 128], strides = [1, 1]} : vector<1x2048xf32> to vector<1x128xf32>
    %72 = arith.addf %70, %71 : vector<1x128xf32>
    %73 = vector.extract_strided_slice %12 {offsets = [0, 1792], sizes = [1, 128], strides = [1, 1]} : vector<1x2048xf32> to vector<1x128xf32>
    %74 = arith.addf %72, %73 : vector<1x128xf32>
    %75 = vector.extract_strided_slice %12 {offsets = [0, 1920], sizes = [1, 128], strides = [1, 1]} : vector<1x2048xf32> to vector<1x128xf32>
    %76 = arith.addf %74, %75 : vector<1x128xf32>
    %cst_9 = arith.constant 3.125000e-02 : f32
    %77 = vector.broadcast %cst_9 : f32 to vector<1x128xf32>
    %78 = arith.mulf %76, %77 : vector<1x128xf32>
    %79 = arith.mulf %45, %45 : vector<1x128xf32>
    %80 = arith.subf %78, %79 : vector<1x128xf32>
    %cst_10 = arith.constant 0.000000e+00 : f32
    %81 = vector.broadcast %cst_10 : f32 to vector<1x128xf32>
    %82 = arith.maximumf %80, %81 : vector<1x128xf32>
    %c0_11 = arith.constant 0 : index
    %c0_12 = arith.constant 0 : index
    %83 = vector.load %arg4[%c0_11, %c0_12] : memref<1x128xf32, #tpu.memory_space<vmem>>, vector<1x128xf32>
    %cst_13 = arith.constant 9.99999974E-6 : f32
    %84 = vector.broadcast %cst_13 : f32 to vector<1x128xf32>
    %85 = arith.addf %82, %84 : vector<1x128xf32>
    %86 = math.rsqrt %85 : vector<1x128xf32>
    %87 = arith.mulf %83, %86 : vector<1x128xf32>
    %c0_14 = arith.constant 0 : index
    %c0_15 = arith.constant 0 : index
    %88 = vector.load %arg5[%c0_14, %c0_15] : memref<1x128xf32, #tpu.memory_space<vmem>>, vector<1x128xf32>
    %89 = arith.mulf %45, %87 : vector<1x128xf32>
    %90 = arith.subf %88, %89 : vector<1x128xf32>
    %91 = tpu.concatenate %87, %87, %87, %87, %87, %87, %87, %87, %87, %87, %87, %87, %87, %87, %87, %87 in 1 : vector<1x128xf32>, vector<1x128xf32>, vector<1x128xf32>, vector<1x128xf32>, vector<1x128xf32>, vector<1x128xf32>, vector<1x128xf32>, vector<1x128xf32>, vector<1x128xf32>, vector<1x128xf32>, vector<1x128xf32>, vector<1x128xf32>, vector<1x128xf32>, vector<1x128xf32>, vector<1x128xf32>, vector<1x128xf32> -> vector<1x2048xf32>
    %92 = vector.broadcast %91 : vector<1x2048xf32> to vector<2x2048xf32>
    %93 = arith.mulf %7, %92 : vector<2x2048xf32>
    %94 = tpu.concatenate %90, %90, %90, %90, %90, %90, %90, %90, %90, %90, %90, %90, %90, %90, %90, %90 in 1 : vector<1x128xf32>, vector<1x128xf32>, vector<1x128xf32>, vector<1x128xf32>, vector<1x128xf32>, vector<1x128xf32>, vector<1x128xf32>, vector<1x128xf32>, vector<1x128xf32>, vector<1x128xf32>, vector<1x128xf32>, vector<1x128xf32>, vector<1x128xf32>, vector<1x128xf32>, vector<1x128xf32>, vector<1x128xf32> -> vector<1x2048xf32>
    %95 = vector.broadcast %94 : vector<1x2048xf32> to vector<2x2048xf32>
    %96 = arith.addf %93, %95 : vector<2x2048xf32>
    %cst_16 = arith.constant 0.000000e+00 : f32
    %97 = vector.broadcast %cst_16 : f32 to vector<2x2048xf32>
    %98 = arith.maximumf %96, %97 : vector<2x2048xf32>
    %99 = arith.truncf %98 : vector<2x2048xf32> to vector<2x2048xbf16>
    %c0_17 = arith.constant 0 : index
    %c0_18 = arith.constant 0 : index
    %100 = vector.load %arg6[%c0_17, %c0_18] : memref<2x2048xbf16, #tpu.memory_space<vmem>>, vector<2x2048xbf16>
    tpu.vector_store %arg6[%c0_17, %c0_18], %99 {strides = array<i32>} : memref<2x2048xbf16, #tpu.memory_space<vmem>>, vector<2x2048xbf16>,
    return
  }
  func.func @transform_0(%arg0: i32) -> (i32, i32) {
    %c0_i32 = arith.constant 0 : i32
    %c0_i32_0 = arith.constant 0 : i32
    %c0_i32_1 = arith.constant 0 : i32
    return %c0_i32, %c0_i32_0 : i32, i32
  }
  func.func @transform_1(%arg0: i32) -> (i32, i32) {
    %c0_i32 = arith.constant 0 : i32
    %c0_i32_0 = arith.constant 0 : i32
    %c0_i32_1 = arith.constant 0 : i32
    return %c0_i32, %c0_i32_0 : i32, i32
  }
  func.func @transform_2(%arg0: i32) -> (i32, i32) {
    %c0_i32 = arith.constant 0 : i32
    %c0_i32_0 = arith.constant 0 : i32
    %c0_i32_1 = arith.constant 0 : i32
    return %c0_i32, %c0_i32_0 : i32, i32
  }
  func.func @transform_3(%arg0: i32) -> (i32, i32) {
    %c0_i32 = arith.constant 0 : i32
    %c0_i32_0 = arith.constant 0 : i32
    %c0_i32_1 = arith.constant 0 : i32
    return %c0_i32, %c0_i32_0 : i32, i32
  }
  func.func @transform_4(%arg0: i32) -> (i32, i32) {
    %c0_i32 = arith.constant 0 : i32
    %c0_i32_0 = arith.constant 0 : i32
    %c0_i32_1 = arith.constant 0 : i32
    return %c0_i32, %c0_i32_0 : i32, i32
  }
  func.func @transform_5(%arg0: i32) -> (i32, i32) {
    %c0_i32 = arith.constant 0 : i32
    %c0_i32_0 = arith.constant 0 : i32
    %c0_i32_1 = arith.constant 0 : i32
    return %c0_i32, %c0_i32_0 : i32, i32
  }
}

module attributes {stable_mosaic.version = 11 : i64} {
  func.func @_convt_bn_relu_kernel(%arg0: i32, %arg1: memref<50x512xbf16, #tpu.memory_space<vmem>>, %arg2: memref<512x256xbf16, #tpu.memory_space<vmem>>, %arg3: memref<1x64xf32, #tpu.memory_space<vmem>>, %arg4: memref<1x64xf32, #tpu.memory_space<vmem>>, %arg5: memref<50x256xbf16, #tpu.memory_space<vmem>>) attributes {dimension_semantics = [#tpu.dimension_semantics<arbitrary>], iteration_bounds = array<i64: 1>, scalar_prefetch = 0 : i64, scratch_operands = 0 : i64, tpu.core_type = #tpu.core_type<tc>, window_params = [{pipeline_mode = #tpu.pipeline_mode<synchronous>, transform_indices = @transform_0, window_bounds = array<i64: 50, 512>}, {pipeline_mode = #tpu.pipeline_mode<synchronous>, transform_indices = @transform_1, window_bounds = array<i64: 512, 256>}, {pipeline_mode = #tpu.pipeline_mode<synchronous>, transform_indices = @transform_2, window_bounds = array<i64: 1, 64>}, {pipeline_mode = #tpu.pipeline_mode<synchronous>, transform_indices = @transform_3, window_bounds = array<i64: 1, 64>}, {pipeline_mode = #tpu.pipeline_mode<synchronous>, transform_indices = @transform_4, window_bounds = array<i64: 50, 256>}]} {
    %c0 = arith.constant 0 : index
    %c0_0 = arith.constant 0 : index
    %0 = vector.load %arg1[%c0, %c0_0] : memref<50x512xbf16, #tpu.memory_space<vmem>>, vector<50x512xbf16>
    %c0_1 = arith.constant 0 : index
    %c0_2 = arith.constant 0 : index
    %1 = vector.load %arg2[%c0_1, %c0_2] : memref<512x256xbf16, #tpu.memory_space<vmem>>, vector<512x256xbf16>
    %cst = arith.constant dense<0.000000e+00> : vector<50x256xf32>
    %2 = tpu.matmul %0, %1, %cst {dimension_numbers = #tpu.dot_dimension_numbers<[1], [0], [0], [1], [0, 0, 1, 1], [], []>} : vector<50x512xbf16>, vector<512x256xbf16>, vector<50x256xf32> -> vector<50x256xf32>
    %3 = tpu.iota {dimensions = array<i32: 0>} : vector<50x1xi32>
    %4 = arith.sitofp %3 : vector<50x1xi32> to vector<50x1xf32>
    %cst_3 = arith.constant 5.000000e-01 : f32
    %5 = vector.broadcast %cst_3 : f32 to vector<50x1xf32>
    %6 = arith.addf %4, %5 : vector<50x1xf32>
    %cst_4 = arith.constant 2.000000e-01 : f32
    %7 = vector.broadcast %cst_4 : f32 to vector<50x1xf32>
    %8 = arith.mulf %6, %7 : vector<50x1xf32>
    %9 = arith.fptosi %8 : vector<50x1xf32> to vector<50x1xi32>
    %10 = arith.sitofp %9 : vector<50x1xi32> to vector<50x1xf32>
    %cst_5 = arith.constant 5.000000e+00 : f32
    %11 = vector.broadcast %cst_5 : f32 to vector<50x1xf32>
    %12 = arith.mulf %11, %10 : vector<50x1xf32>
    %13 = arith.subf %4, %12 : vector<50x1xf32>
    %cst_6 = arith.constant 5.000000e-01 : f32
    %14 = vector.broadcast %cst_6 : f32 to vector<50x1xf32>
    %15 = arith.addf %10, %14 : vector<50x1xf32>
    %cst_7 = arith.constant 2.000000e-01 : f32
    %16 = vector.broadcast %cst_7 : f32 to vector<50x1xf32>
    %17 = arith.mulf %15, %16 : vector<50x1xf32>
    %18 = arith.fptosi %17 : vector<50x1xf32> to vector<50x1xi32>
    %19 = arith.sitofp %18 : vector<50x1xi32> to vector<50x1xf32>
    %cst_8 = arith.constant 5.000000e+00 : f32
    %20 = vector.broadcast %cst_8 : f32 to vector<50x1xf32>
    %21 = arith.mulf %20, %19 : vector<50x1xf32>
    %22 = arith.subf %10, %21 : vector<50x1xf32>
    %cst_9 = arith.constant 5.000000e-01 : f32
    %23 = vector.broadcast %cst_9 : f32 to vector<50x1xf32>
    %24 = arith.cmpf olt, %22, %23 : vector<50x1xf32>
    %25 = arith.extui %24 : vector<50x1xi1> to vector<50x1xi32>
    %26 = arith.sitofp %25 : vector<50x1xi32> to vector<50x1xf32>
    %cst_10 = arith.constant 3.500000e+00 : f32
    %27 = vector.broadcast %cst_10 : f32 to vector<50x1xf32>
    %28 = arith.cmpf ogt, %22, %27 : vector<50x1xf32>
    %29 = arith.extui %28 : vector<50x1xi1> to vector<50x1xi32>
    %30 = arith.sitofp %29 : vector<50x1xi32> to vector<50x1xf32>
    %cst_11 = arith.constant 5.000000e-01 : f32
    %31 = vector.broadcast %cst_11 : f32 to vector<50x1xf32>
    %32 = arith.cmpf olt, %13, %31 : vector<50x1xf32>
    %33 = arith.extui %32 : vector<50x1xi1> to vector<50x1xi32>
    %34 = arith.sitofp %33 : vector<50x1xi32> to vector<50x1xf32>
    %cst_12 = arith.constant 3.500000e+00 : f32
    %35 = vector.broadcast %cst_12 : f32 to vector<50x1xf32>
    %36 = arith.cmpf ogt, %13, %35 : vector<50x1xf32>
    %37 = arith.extui %36 : vector<50x1xi1> to vector<50x1xi32>
    %38 = arith.sitofp %37 : vector<50x1xi32> to vector<50x1xf32>
    %39 = tpu.iota {dimensions = array<i32: 1>} : vector<1x256xi32>
    %c128_i32 = arith.constant 128 : i32
    %40 = vector.broadcast %c128_i32 : i32 to vector<1x256xi32>
    %41 = arith.cmpi sge, %39, %40 : vector<1x256xi32>
    %42 = arith.extui %41 : vector<1x256xi1> to vector<1x256xi32>
    %43 = arith.sitofp %42 : vector<1x256xi32> to vector<1x256xf32>
    %c64_i32 = arith.constant 64 : i32
    %44 = vector.broadcast %c64_i32 : i32 to vector<1x256xi32>
    %45 = arith.andi %39, %44 : vector<1x256xi32>
    %c0_i32 = arith.constant 0 : i32
    %46 = vector.broadcast %c0_i32 : i32 to vector<1x256xi32>
    %47 = arith.cmpi sgt, %45, %46 : vector<1x256xi32>
    %48 = arith.extui %47 : vector<1x256xi1> to vector<1x256xi32>
    %49 = arith.sitofp %48 : vector<1x256xi32> to vector<1x256xf32>
    %cst_13 = arith.constant 1.000000e+00 : f32
    %50 = vector.broadcast %cst_13 : f32 to vector<1x256xf32>
    %51 = arith.subf %50, %43 : vector<1x256xf32>
    %cst_14 = arith.constant 1.000000e+00 : f32
    %52 = vector.broadcast %cst_14 : f32 to vector<1x256xf32>
    %53 = arith.subf %52, %49 : vector<1x256xf32>
    %54 = vector.broadcast %26 : vector<50x1xf32> to vector<50x256xf32>
    %55 = vector.broadcast %51 : vector<1x256xf32> to vector<50x256xf32>
    %56 = arith.mulf %54, %55 : vector<50x256xf32>
    %57 = vector.broadcast %30 : vector<50x1xf32> to vector<50x256xf32>
    %58 = vector.broadcast %43 : vector<1x256xf32> to vector<50x256xf32>
    %59 = arith.mulf %57, %58 : vector<50x256xf32>
    %60 = arith.addf %56, %59 : vector<50x256xf32>
    %61 = vector.broadcast %34 : vector<50x1xf32> to vector<50x256xf32>
    %62 = vector.broadcast %53 : vector<1x256xf32> to vector<50x256xf32>
    %63 = arith.mulf %61, %62 : vector<50x256xf32>
    %64 = arith.addf %60, %63 : vector<50x256xf32>
    %65 = vector.broadcast %38 : vector<50x1xf32> to vector<50x256xf32>
    %66 = vector.broadcast %49 : vector<1x256xf32> to vector<50x256xf32>
    %67 = arith.mulf %65, %66 : vector<50x256xf32>
    %68 = arith.addf %64, %67 : vector<50x256xf32>
    %cst_15 = arith.constant 5.000000e-01 : f32
    %69 = vector.broadcast %cst_15 : f32 to vector<50x256xf32>
    %70 = arith.cmpf olt, %68, %69 : vector<50x256xf32>
    %71 = arith.extui %70 : vector<50x256xi1> to vector<50x256xi32>
    %72 = arith.sitofp %71 : vector<50x256xi32> to vector<50x256xf32>
    %73 = arith.mulf %2, %72 : vector<50x256xf32>
    %cst_16 = arith.constant dense<0.000000e+00> : vector<256xf32>
    %74 = vector.multi_reduction <add>, %73, %cst_16 [0] : vector<50x256xf32> to vector<256xf32>
    %75 = vector.shape_cast %74 : vector<256xf32> to vector<1x256xf32>
    %76 = arith.mulf %73, %2 : vector<50x256xf32>
    %cst_17 = arith.constant dense<0.000000e+00> : vector<256xf32>
    %77 = vector.multi_reduction <add>, %76, %cst_17 [0] : vector<50x256xf32> to vector<256xf32>
    %78 = vector.shape_cast %77 : vector<256xf32> to vector<1x256xf32>
    %79 = vector.extract_strided_slice %75 {offsets = [0, 0], sizes = [1, 64], strides = [1, 1]} : vector<1x256xf32> to vector<1x64xf32>
    %80 = vector.extract_strided_slice %75 {offsets = [0, 64], sizes = [1, 64], strides = [1, 1]} : vector<1x256xf32> to vector<1x64xf32>
    %81 = arith.addf %79, %80 : vector<1x64xf32>
    %82 = vector.extract_strided_slice %75 {offsets = [0, 128], sizes = [1, 64], strides = [1, 1]} : vector<1x256xf32> to vector<1x64xf32>
    %83 = arith.addf %81, %82 : vector<1x64xf32>
    %84 = vector.extract_strided_slice %75 {offsets = [0, 192], sizes = [1, 64], strides = [1, 1]} : vector<1x256xf32> to vector<1x64xf32>
    %85 = arith.addf %83, %84 : vector<1x64xf32>
    %cst_18 = arith.constant 7.812500e-03 : f32
    %86 = vector.broadcast %cst_18 : f32 to vector<1x64xf32>
    %87 = arith.mulf %85, %86 : vector<1x64xf32>
    %88 = vector.extract_strided_slice %78 {offsets = [0, 0], sizes = [1, 64], strides = [1, 1]} : vector<1x256xf32> to vector<1x64xf32>
    %89 = vector.extract_strided_slice %78 {offsets = [0, 64], sizes = [1, 64], strides = [1, 1]} : vector<1x256xf32> to vector<1x64xf32>
    %90 = arith.addf %88, %89 : vector<1x64xf32>
    %91 = vector.extract_strided_slice %78 {offsets = [0, 128], sizes = [1, 64], strides = [1, 1]} : vector<1x256xf32> to vector<1x64xf32>
    %92 = arith.addf %90, %91 : vector<1x64xf32>
    %93 = vector.extract_strided_slice %78 {offsets = [0, 192], sizes = [1, 64], strides = [1, 1]} : vector<1x256xf32> to vector<1x64xf32>
    %94 = arith.addf %92, %93 : vector<1x64xf32>
    %cst_19 = arith.constant 7.812500e-03 : f32
    %95 = vector.broadcast %cst_19 : f32 to vector<1x64xf32>
    %96 = arith.mulf %94, %95 : vector<1x64xf32>
    %97 = arith.mulf %87, %87 : vector<1x64xf32>
    %98 = arith.subf %96, %97 : vector<1x64xf32>
    %cst_20 = arith.constant 0.000000e+00 : f32
    %99 = vector.broadcast %cst_20 : f32 to vector<1x64xf32>
    %100 = arith.maximumf %98, %99 : vector<1x64xf32>
    %c0_21 = arith.constant 0 : index
    %c0_22 = arith.constant 0 : index
    %101 = vector.load %arg3[%c0_21, %c0_22] : memref<1x64xf32, #tpu.memory_space<vmem>>, vector<1x64xf32>
    %cst_23 = arith.constant 9.99999974E-6 : f32
    %102 = vector.broadcast %cst_23 : f32 to vector<1x64xf32>
    %103 = arith.addf %100, %102 : vector<1x64xf32>
    %104 = math.rsqrt %103 : vector<1x64xf32>
    %105 = arith.mulf %101, %104 : vector<1x64xf32>
    %c0_24 = arith.constant 0 : index
    %c0_25 = arith.constant 0 : index
    %106 = vector.load %arg4[%c0_24, %c0_25] : memref<1x64xf32, #tpu.memory_space<vmem>>, vector<1x64xf32>
    %107 = arith.mulf %87, %105 : vector<1x64xf32>
    %108 = arith.subf %106, %107 : vector<1x64xf32>
    %109 = tpu.concatenate %105, %105, %105, %105 in 1 : vector<1x64xf32>, vector<1x64xf32>, vector<1x64xf32>, vector<1x64xf32> -> vector<1x256xf32>
    %110 = vector.broadcast %109 : vector<1x256xf32> to vector<50x256xf32>
    %111 = arith.mulf %2, %110 : vector<50x256xf32>
    %112 = tpu.concatenate %108, %108, %108, %108 in 1 : vector<1x64xf32>, vector<1x64xf32>, vector<1x64xf32>, vector<1x64xf32> -> vector<1x256xf32>
    %113 = vector.broadcast %112 : vector<1x256xf32> to vector<50x256xf32>
    %114 = arith.addf %111, %113 : vector<50x256xf32>
    %cst_26 = arith.constant 0.000000e+00 : f32
    %115 = vector.broadcast %cst_26 : f32 to vector<50x256xf32>
    %116 = arith.maximumf %114, %115 : vector<50x256xf32>
    %117 = arith.truncf %116 : vector<50x256xf32> to vector<50x256xbf16>
    %c0_27 = arith.constant 0 : index
    %c0_28 = arith.constant 0 : index
    %118 = vector.load %arg5[%c0_27, %c0_28] : memref<50x256xbf16, #tpu.memory_space<vmem>>, vector<50x256xbf16>
    tpu.vector_store %arg5[%c0_27, %c0_28], %117 {strides = array<i32>} : memref<50x256xbf16, #tpu.memory_space<vmem>>, vector<50x256xbf16>,
    return
  }
  func.func @transform_0(%arg0: i32) -> (i32, i32) {
    %c0_i32 = arith.constant 0 : i32
    %c0_i32_0 = arith.constant 0 : i32
    %c0_i32_1 = arith.constant 0 : i32
    return %c0_i32, %c0_i32_0 : i32, i32
  }
  func.func @transform_1(%arg0: i32) -> (i32, i32) {
    %c0_i32 = arith.constant 0 : i32
    %c0_i32_0 = arith.constant 0 : i32
    %c0_i32_1 = arith.constant 0 : i32
    return %c0_i32, %c0_i32_0 : i32, i32
  }
  func.func @transform_2(%arg0: i32) -> (i32, i32) {
    %c0_i32 = arith.constant 0 : i32
    %c0_i32_0 = arith.constant 0 : i32
    %c0_i32_1 = arith.constant 0 : i32
    return %c0_i32, %c0_i32_0 : i32, i32
  }
  func.func @transform_3(%arg0: i32) -> (i32, i32) {
    %c0_i32 = arith.constant 0 : i32
    %c0_i32_0 = arith.constant 0 : i32
    %c0_i32_1 = arith.constant 0 : i32
    return %c0_i32, %c0_i32_0 : i32, i32
  }
  func.func @transform_4(%arg0: i32) -> (i32, i32) {
    %c0_i32 = arith.constant 0 : i32
    %c0_i32_0 = arith.constant 0 : i32
    %c0_i32_1 = arith.constant 0 : i32
    return %c0_i32, %c0_i32_0 : i32, i32
  }
}

module attributes {stable_mosaic.version = 11 : i64} {
  func.func @_convt_bn_relu_kernel(%arg0: i32, %arg1: memref<162x256xbf16, #tpu.memory_space<vmem>>, %arg2: memref<256x128xbf16, #tpu.memory_space<vmem>>, %arg3: memref<1x32xf32, #tpu.memory_space<vmem>>, %arg4: memref<1x32xf32, #tpu.memory_space<vmem>>, %arg5: memref<162x128xbf16, #tpu.memory_space<vmem>>) attributes {dimension_semantics = [#tpu.dimension_semantics<arbitrary>], iteration_bounds = array<i64: 1>, scalar_prefetch = 0 : i64, scratch_operands = 0 : i64, tpu.core_type = #tpu.core_type<tc>, window_params = [{pipeline_mode = #tpu.pipeline_mode<synchronous>, transform_indices = @transform_0, window_bounds = array<i64: 162, 256>}, {pipeline_mode = #tpu.pipeline_mode<synchronous>, transform_indices = @transform_1, window_bounds = array<i64: 256, 128>}, {pipeline_mode = #tpu.pipeline_mode<synchronous>, transform_indices = @transform_2, window_bounds = array<i64: 1, 32>}, {pipeline_mode = #tpu.pipeline_mode<synchronous>, transform_indices = @transform_3, window_bounds = array<i64: 1, 32>}, {pipeline_mode = #tpu.pipeline_mode<synchronous>, transform_indices = @transform_4, window_bounds = array<i64: 162, 128>}]} {
    %c0 = arith.constant 0 : index
    %c0_0 = arith.constant 0 : index
    %0 = vector.load %arg1[%c0, %c0_0] : memref<162x256xbf16, #tpu.memory_space<vmem>>, vector<162x256xbf16>
    %c0_1 = arith.constant 0 : index
    %c0_2 = arith.constant 0 : index
    %1 = vector.load %arg2[%c0_1, %c0_2] : memref<256x128xbf16, #tpu.memory_space<vmem>>, vector<256x128xbf16>
    %cst = arith.constant dense<0.000000e+00> : vector<162x128xf32>
    %2 = tpu.matmul %0, %1, %cst {dimension_numbers = #tpu.dot_dimension_numbers<[1], [0], [0], [1], [0, 0, 1, 1], [], []>} : vector<162x256xbf16>, vector<256x128xbf16>, vector<162x128xf32> -> vector<162x128xf32>
    %3 = tpu.iota {dimensions = array<i32: 0>} : vector<162x1xi32>
    %4 = arith.sitofp %3 : vector<162x1xi32> to vector<162x1xf32>
    %cst_3 = arith.constant 5.000000e-01 : f32
    %5 = vector.broadcast %cst_3 : f32 to vector<162x1xf32>
    %6 = arith.addf %4, %5 : vector<162x1xf32>
    %cst_4 = arith.constant 0.111111112 : f32
    %7 = vector.broadcast %cst_4 : f32 to vector<162x1xf32>
    %8 = arith.mulf %6, %7 : vector<162x1xf32>
    %9 = arith.fptosi %8 : vector<162x1xf32> to vector<162x1xi32>
    %10 = arith.sitofp %9 : vector<162x1xi32> to vector<162x1xf32>
    %cst_5 = arith.constant 9.000000e+00 : f32
    %11 = vector.broadcast %cst_5 : f32 to vector<162x1xf32>
    %12 = arith.mulf %11, %10 : vector<162x1xf32>
    %13 = arith.subf %4, %12 : vector<162x1xf32>
    %cst_6 = arith.constant 5.000000e-01 : f32
    %14 = vector.broadcast %cst_6 : f32 to vector<162x1xf32>
    %15 = arith.addf %10, %14 : vector<162x1xf32>
    %cst_7 = arith.constant 0.111111112 : f32
    %16 = vector.broadcast %cst_7 : f32 to vector<162x1xf32>
    %17 = arith.mulf %15, %16 : vector<162x1xf32>
    %18 = arith.fptosi %17 : vector<162x1xf32> to vector<162x1xi32>
    %19 = arith.sitofp %18 : vector<162x1xi32> to vector<162x1xf32>
    %cst_8 = arith.constant 9.000000e+00 : f32
    %20 = vector.broadcast %cst_8 : f32 to vector<162x1xf32>
    %21 = arith.mulf %20, %19 : vector<162x1xf32>
    %22 = arith.subf %10, %21 : vector<162x1xf32>
    %cst_9 = arith.constant 5.000000e-01 : f32
    %23 = vector.broadcast %cst_9 : f32 to vector<162x1xf32>
    %24 = arith.cmpf olt, %22, %23 : vector<162x1xf32>
    %25 = arith.extui %24 : vector<162x1xi1> to vector<162x1xi32>
    %26 = arith.sitofp %25 : vector<162x1xi32> to vector<162x1xf32>
    %cst_10 = arith.constant 7.500000e+00 : f32
    %27 = vector.broadcast %cst_10 : f32 to vector<162x1xf32>
    %28 = arith.cmpf ogt, %22, %27 : vector<162x1xf32>
    %29 = arith.extui %28 : vector<162x1xi1> to vector<162x1xi32>
    %30 = arith.sitofp %29 : vector<162x1xi32> to vector<162x1xf32>
    %cst_11 = arith.constant 5.000000e-01 : f32
    %31 = vector.broadcast %cst_11 : f32 to vector<162x1xf32>
    %32 = arith.cmpf olt, %13, %31 : vector<162x1xf32>
    %33 = arith.extui %32 : vector<162x1xi1> to vector<162x1xi32>
    %34 = arith.sitofp %33 : vector<162x1xi32> to vector<162x1xf32>
    %cst_12 = arith.constant 7.500000e+00 : f32
    %35 = vector.broadcast %cst_12 : f32 to vector<162x1xf32>
    %36 = arith.cmpf ogt, %13, %35 : vector<162x1xf32>
    %37 = arith.extui %36 : vector<162x1xi1> to vector<162x1xi32>
    %38 = arith.sitofp %37 : vector<162x1xi32> to vector<162x1xf32>
    %39 = tpu.iota {dimensions = array<i32: 1>} : vector<1x128xi32>
    %c64_i32 = arith.constant 64 : i32
    %40 = vector.broadcast %c64_i32 : i32 to vector<1x128xi32>
    %41 = arith.cmpi sge, %39, %40 : vector<1x128xi32>
    %42 = arith.extui %41 : vector<1x128xi1> to vector<1x128xi32>
    %43 = arith.sitofp %42 : vector<1x128xi32> to vector<1x128xf32>
    %c32_i32 = arith.constant 32 : i32
    %44 = vector.broadcast %c32_i32 : i32 to vector<1x128xi32>
    %45 = arith.andi %39, %44 : vector<1x128xi32>
    %c0_i32 = arith.constant 0 : i32
    %46 = vector.broadcast %c0_i32 : i32 to vector<1x128xi32>
    %47 = arith.cmpi sgt, %45, %46 : vector<1x128xi32>
    %48 = arith.extui %47 : vector<1x128xi1> to vector<1x128xi32>
    %49 = arith.sitofp %48 : vector<1x128xi32> to vector<1x128xf32>
    %cst_13 = arith.constant 1.000000e+00 : f32
    %50 = vector.broadcast %cst_13 : f32 to vector<1x128xf32>
    %51 = arith.subf %50, %43 : vector<1x128xf32>
    %cst_14 = arith.constant 1.000000e+00 : f32
    %52 = vector.broadcast %cst_14 : f32 to vector<1x128xf32>
    %53 = arith.subf %52, %49 : vector<1x128xf32>
    %54 = vector.broadcast %26 : vector<162x1xf32> to vector<162x128xf32>
    %55 = vector.broadcast %51 : vector<1x128xf32> to vector<162x128xf32>
    %56 = arith.mulf %54, %55 : vector<162x128xf32>
    %57 = vector.broadcast %30 : vector<162x1xf32> to vector<162x128xf32>
    %58 = vector.broadcast %43 : vector<1x128xf32> to vector<162x128xf32>
    %59 = arith.mulf %57, %58 : vector<162x128xf32>
    %60 = arith.addf %56, %59 : vector<162x128xf32>
    %61 = vector.broadcast %34 : vector<162x1xf32> to vector<162x128xf32>
    %62 = vector.broadcast %53 : vector<1x128xf32> to vector<162x128xf32>
    %63 = arith.mulf %61, %62 : vector<162x128xf32>
    %64 = arith.addf %60, %63 : vector<162x128xf32>
    %65 = vector.broadcast %38 : vector<162x1xf32> to vector<162x128xf32>
    %66 = vector.broadcast %49 : vector<1x128xf32> to vector<162x128xf32>
    %67 = arith.mulf %65, %66 : vector<162x128xf32>
    %68 = arith.addf %64, %67 : vector<162x128xf32>
    %cst_15 = arith.constant 5.000000e-01 : f32
    %69 = vector.broadcast %cst_15 : f32 to vector<162x128xf32>
    %70 = arith.cmpf olt, %68, %69 : vector<162x128xf32>
    %71 = arith.extui %70 : vector<162x128xi1> to vector<162x128xi32>
    %72 = arith.sitofp %71 : vector<162x128xi32> to vector<162x128xf32>
    %73 = arith.mulf %2, %72 : vector<162x128xf32>
    %cst_16 = arith.constant dense<0.000000e+00> : vector<128xf32>
    %74 = vector.multi_reduction <add>, %73, %cst_16 [0] : vector<162x128xf32> to vector<128xf32>
    %75 = vector.shape_cast %74 : vector<128xf32> to vector<1x128xf32>
    %76 = arith.mulf %73, %2 : vector<162x128xf32>
    %cst_17 = arith.constant dense<0.000000e+00> : vector<128xf32>
    %77 = vector.multi_reduction <add>, %76, %cst_17 [0] : vector<162x128xf32> to vector<128xf32>
    %78 = vector.shape_cast %77 : vector<128xf32> to vector<1x128xf32>
    %79 = vector.extract_strided_slice %75 {offsets = [0, 0], sizes = [1, 32], strides = [1, 1]} : vector<1x128xf32> to vector<1x32xf32>
    %80 = vector.extract_strided_slice %75 {offsets = [0, 32], sizes = [1, 32], strides = [1, 1]} : vector<1x128xf32> to vector<1x32xf32>
    %81 = arith.addf %79, %80 : vector<1x32xf32>
    %82 = vector.extract_strided_slice %75 {offsets = [0, 64], sizes = [1, 32], strides = [1, 1]} : vector<1x128xf32> to vector<1x32xf32>
    %83 = arith.addf %81, %82 : vector<1x32xf32>
    %84 = vector.extract_strided_slice %75 {offsets = [0, 96], sizes = [1, 32], strides = [1, 1]} : vector<1x128xf32> to vector<1x32xf32>
    %85 = arith.addf %83, %84 : vector<1x32xf32>
    %cst_18 = arith.constant 0.001953125 : f32
    %86 = vector.broadcast %cst_18 : f32 to vector<1x32xf32>
    %87 = arith.mulf %85, %86 : vector<1x32xf32>
    %88 = vector.extract_strided_slice %78 {offsets = [0, 0], sizes = [1, 32], strides = [1, 1]} : vector<1x128xf32> to vector<1x32xf32>
    %89 = vector.extract_strided_slice %78 {offsets = [0, 32], sizes = [1, 32], strides = [1, 1]} : vector<1x128xf32> to vector<1x32xf32>
    %90 = arith.addf %88, %89 : vector<1x32xf32>
    %91 = vector.extract_strided_slice %78 {offsets = [0, 64], sizes = [1, 32], strides = [1, 1]} : vector<1x128xf32> to vector<1x32xf32>
    %92 = arith.addf %90, %91 : vector<1x32xf32>
    %93 = vector.extract_strided_slice %78 {offsets = [0, 96], sizes = [1, 32], strides = [1, 1]} : vector<1x128xf32> to vector<1x32xf32>
    %94 = arith.addf %92, %93 : vector<1x32xf32>
    %cst_19 = arith.constant 0.001953125 : f32
    %95 = vector.broadcast %cst_19 : f32 to vector<1x32xf32>
    %96 = arith.mulf %94, %95 : vector<1x32xf32>
    %97 = arith.mulf %87, %87 : vector<1x32xf32>
    %98 = arith.subf %96, %97 : vector<1x32xf32>
    %cst_20 = arith.constant 0.000000e+00 : f32
    %99 = vector.broadcast %cst_20 : f32 to vector<1x32xf32>
    %100 = arith.maximumf %98, %99 : vector<1x32xf32>
    %c0_21 = arith.constant 0 : index
    %c0_22 = arith.constant 0 : index
    %101 = vector.load %arg3[%c0_21, %c0_22] : memref<1x32xf32, #tpu.memory_space<vmem>>, vector<1x32xf32>
    %cst_23 = arith.constant 9.99999974E-6 : f32
    %102 = vector.broadcast %cst_23 : f32 to vector<1x32xf32>
    %103 = arith.addf %100, %102 : vector<1x32xf32>
    %104 = math.rsqrt %103 : vector<1x32xf32>
    %105 = arith.mulf %101, %104 : vector<1x32xf32>
    %c0_24 = arith.constant 0 : index
    %c0_25 = arith.constant 0 : index
    %106 = vector.load %arg4[%c0_24, %c0_25] : memref<1x32xf32, #tpu.memory_space<vmem>>, vector<1x32xf32>
    %107 = arith.mulf %87, %105 : vector<1x32xf32>
    %108 = arith.subf %106, %107 : vector<1x32xf32>
    %109 = tpu.concatenate %105, %105, %105, %105 in 1 : vector<1x32xf32>, vector<1x32xf32>, vector<1x32xf32>, vector<1x32xf32> -> vector<1x128xf32>
    %110 = vector.broadcast %109 : vector<1x128xf32> to vector<162x128xf32>
    %111 = arith.mulf %2, %110 : vector<162x128xf32>
    %112 = tpu.concatenate %108, %108, %108, %108 in 1 : vector<1x32xf32>, vector<1x32xf32>, vector<1x32xf32>, vector<1x32xf32> -> vector<1x128xf32>
    %113 = vector.broadcast %112 : vector<1x128xf32> to vector<162x128xf32>
    %114 = arith.addf %111, %113 : vector<162x128xf32>
    %cst_26 = arith.constant 0.000000e+00 : f32
    %115 = vector.broadcast %cst_26 : f32 to vector<162x128xf32>
    %116 = arith.maximumf %114, %115 : vector<162x128xf32>
    %117 = arith.truncf %116 : vector<162x128xf32> to vector<162x128xbf16>
    %c0_27 = arith.constant 0 : index
    %c0_28 = arith.constant 0 : index
    %118 = vector.load %arg5[%c0_27, %c0_28] : memref<162x128xbf16, #tpu.memory_space<vmem>>, vector<162x128xbf16>
    tpu.vector_store %arg5[%c0_27, %c0_28], %117 {strides = array<i32>} : memref<162x128xbf16, #tpu.memory_space<vmem>>, vector<162x128xbf16>,
    return
  }
  func.func @transform_0(%arg0: i32) -> (i32, i32) {
    %c0_i32 = arith.constant 0 : i32
    %c0_i32_0 = arith.constant 0 : i32
    %c0_i32_1 = arith.constant 0 : i32
    return %c0_i32, %c0_i32_0 : i32, i32
  }
  func.func @transform_1(%arg0: i32) -> (i32, i32) {
    %c0_i32 = arith.constant 0 : i32
    %c0_i32_0 = arith.constant 0 : i32
    %c0_i32_1 = arith.constant 0 : i32
    return %c0_i32, %c0_i32_0 : i32, i32
  }
  func.func @transform_2(%arg0: i32) -> (i32, i32) {
    %c0_i32 = arith.constant 0 : i32
    %c0_i32_0 = arith.constant 0 : i32
    %c0_i32_1 = arith.constant 0 : i32
    return %c0_i32, %c0_i32_0 : i32, i32
  }
  func.func @transform_3(%arg0: i32) -> (i32, i32) {
    %c0_i32 = arith.constant 0 : i32
    %c0_i32_0 = arith.constant 0 : i32
    %c0_i32_1 = arith.constant 0 : i32
    return %c0_i32, %c0_i32_0 : i32, i32
  }
  func.func @transform_4(%arg0: i32) -> (i32, i32) {
    %c0_i32 = arith.constant 0 : i32
    %c0_i32_0 = arith.constant 0 : i32
    %c0_i32_1 = arith.constant 0 : i32
    return %c0_i32, %c0_i32_0 : i32, i32
  }
}

module attributes {stable_mosaic.version = 11 : i64} {
  func.func @_convt_tanh_kernel(%arg0: i32, %arg1: memref<578x128xbf16, #tpu.memory_space<vmem>>, %arg2: memref<128x128xbf16, #tpu.memory_space<vmem>>, %arg3: memref<578x128xbf16, #tpu.memory_space<vmem>>) attributes {dimension_semantics = [#tpu.dimension_semantics<arbitrary>], iteration_bounds = array<i64: 1>, scalar_prefetch = 0 : i64, scratch_operands = 0 : i64, tpu.core_type = #tpu.core_type<tc>, window_params = [{pipeline_mode = #tpu.pipeline_mode<synchronous>, transform_indices = @transform_0, window_bounds = array<i64: 578, 128>}, {pipeline_mode = #tpu.pipeline_mode<synchronous>, transform_indices = @transform_1, window_bounds = array<i64: 128, 128>}, {pipeline_mode = #tpu.pipeline_mode<synchronous>, transform_indices = @transform_2, window_bounds = array<i64: 578, 128>}]} {
    %c0 = arith.constant 0 : index
    %c0_0 = arith.constant 0 : index
    %0 = vector.load %arg1[%c0, %c0_0] : memref<578x128xbf16, #tpu.memory_space<vmem>>, vector<578x128xbf16>
    %c0_1 = arith.constant 0 : index
    %c0_2 = arith.constant 0 : index
    %1 = vector.load %arg2[%c0_1, %c0_2] : memref<128x128xbf16, #tpu.memory_space<vmem>>, vector<128x128xbf16>
    %cst = arith.constant dense<0.000000e+00> : vector<578x128xf32>
    %2 = tpu.matmul %0, %1, %cst {dimension_numbers = #tpu.dot_dimension_numbers<[1], [0], [0], [1], [0, 0, 1, 1], [], []>} : vector<578x128xbf16>, vector<128x128xbf16>, vector<578x128xf32> -> vector<578x128xf32>
    %3 = math.tanh %2 : vector<578x128xf32>
    %4 = arith.truncf %3 : vector<578x128xf32> to vector<578x128xbf16>
    %c0_3 = arith.constant 0 : index
    %c0_4 = arith.constant 0 : index
    %5 = vector.load %arg3[%c0_3, %c0_4] : memref<578x128xbf16, #tpu.memory_space<vmem>>, vector<578x128xbf16>
    tpu.vector_store %arg3[%c0_3, %c0_4], %4 {strides = array<i32>} : memref<578x128xbf16, #tpu.memory_space<vmem>>, vector<578x128xbf16>,
    return
  }
  func.func @transform_0(%arg0: i32) -> (i32, i32) {
    %c0_i32 = arith.constant 0 : i32
    %c0_i32_0 = arith.constant 0 : i32
    %c0_i32_1 = arith.constant 0 : i32
    return %c0_i32, %c0_i32_0 : i32, i32
  }
  func.func @transform_1(%arg0: i32) -> (i32, i32) {
    %c0_i32 = arith.constant 0 : i32
    %c0_i32_0 = arith.constant 0 : i32
    %c0_i32_1 = arith.constant 0 : i32
    return %c0_i32, %c0_i32_0 : i32, i32
  }
  func.func @transform_2(%arg0: i32) -> (i32, i32) {
    %c0_i32 = arith.constant 0 : i32
    %c0_i32_0 = arith.constant 0 : i32
    %c0_i32_1 = arith.constant 0 : i32
    return %c0_i32, %c0_i32_0 : i32, i32
  }
}

</mosaic_0001>

<llo_original>
// kernel: _forward_impl.4
$region0: #{_forward_impl.4}
  #allocation0 [shape = 'u32[]', space=smem, size = 0x4, offset = 0x4, fixed_abs, tag = 'smem constant byte address 0x4 - core index']
  #allocation1 [shape = 'u32[144,128]{1,0:T(1,128)}', space=vmem, size = 0x12000, scoped, tag = 'internal scratch']
  %s0 = inlined_call_operand.vmem [shape: f32[2,32], index: 0, kind: input, shape index: {}]
  %s1 = inlined_call_operand.vmem [shape: f32[2,32], index: 1, kind: input, shape index: {}]
  %s2 = inlined_call_operand.vmem [shape: bf16[32,2048], index: 2, kind: input, shape index: {}]
  %s3 = inlined_call_operand.vmem [shape: f32[1,128], index: 3, kind: input, shape index: {}]
  %s4 = inlined_call_operand.vmem [shape: f32[1,128], index: 4, kind: input, shape index: {}]
  %s5 = inlined_call_operand.vmem [shape: bf16[2,2048], index: 5, kind: output, shape index: {}]
  %s6 = sld [smem:[#allocation0]]
  $region30: #{_forward_impl.4} parent=0
    _
  %s8 = ssub.s32 1, %s6
  %s9 = scalar_select 0, %s8, %s6
  // Predicated region
  $region2: #{_forward_impl.4} parent=0 // pred_check
    _
  $region3: #{_forward_impl.4} parent=0 // pred_check_branch
    %11 = sbr.rel (0) target = $region5
  $region4: #{_forward_impl.4} parent=0 // pred_region
    _
  $region5: #{_forward_impl.4} parent=0 // pred_fallthru
    _
  // Predicated region
  $region6: #{_forward_impl.4} parent=0 // pred_check
    _
  $region7: #{_forward_impl.4} parent=0 // pred_check_branch
    %13 = sbr.rel (0) target = $region9
  $region8: #{_forward_impl.4} parent=0 // pred_region
    _
  $region9: #{_forward_impl.4} parent=0 // pred_fallthru
    _
  // Predicated region
  $region10: #{_forward_impl.4} parent=0 // pred_check
    _
  $region11: #{_forward_impl.4} parent=0 // pred_check_branch
    %15 = sbr.rel (0) target = $region13
  $region12: #{_forward_impl.4} parent=0 // pred_region
    _
  $region13: #{_forward_impl.4} parent=0 // pred_fallthru
    _
  // Predicated region
  $region14: #{_forward_impl.4} parent=0 // pred_check
    _
  $region15: #{_forward_impl.4} parent=0 // pred_check_branch
    %17 = sbr.rel (0) target = $region17
  $region16: #{_forward_impl.4} parent=0 // pred_region
    _
  $region17: #{_forward_impl.4} parent=0 // pred_fallthru
    _
  // Predicated region
  $region18: #{_forward_impl.4} parent=0 // pred_check
    _
  $region19: #{_forward_impl.4} parent=0 // pred_check_branch
    %19 = sbr.rel (0) target = $region21
  $region20: #{_forward_impl.4} parent=0 // pred_region
    _
  $region21: #{_forward_impl.4} parent=0 // pred_fallthru
    _
  %v21 = vld [vmem:[%s0] sm:$0x3]
  %v22 = vld [vmem:[%s1] sm:$0x3]
  %v23 = vmul.f32 %v21, %v22
  %v24 = vpack.c.bf16 %v23, %v23
  %v25 = vld [vmem:[%s2] sm:$0xff]
  %v26 = vld [vmem:[%s2 + $0x8] sm:$0xff]
  %v27 = vld [vmem:[%s2 + $0x10] sm:$0xff]
  %v28 = vld [vmem:[%s2 + $0x18] sm:$0xff]
  %v29 = vld [vmem:[%s2 + $0x20] sm:$0xff]
  %v30 = vld [vmem:[%s2 + $0x28] sm:$0xff]
  %v31 = vld [vmem:[%s2 + $0x30] sm:$0xff]
  %v32 = vld [vmem:[%s2 + $0x38] sm:$0xff]
  %v33 = vld [vmem:[%s2 + $0x40] sm:$0xff]
  %v34 = vld [vmem:[%s2 + $0x48] sm:$0xff]
  %v35 = vld [vmem:[%s2 + $0x50] sm:$0xff]
  %v36 = vld [vmem:[%s2 + $0x58] sm:$0xff]
  %v37 = vld [vmem:[%s2 + $0x60] sm:$0xff]
  %v38 = vld [vmem:[%s2 + $0x68] sm:$0xff]
  %v39 = vld [vmem:[%s2 + $0x70] sm:$0xff]
  %v40 = vld [vmem:[%s2 + $0x78] sm:$0xff]
  %v41 = vld [vmem:[%s2 + $0x80] sm:$0xff]
  %v42 = vld [vmem:[%s2 + $0x88] sm:$0xff]
  %v43 = vld [vmem:[%s2 + $0x90] sm:$0xff]
  %v44 = vld [vmem:[%s2 + $0x98] sm:$0xff]
  %v45 = vld [vmem:[%s2 + $0xa0] sm:$0xff]
  %v46 = vld [vmem:[%s2 + $0xa8] sm:$0xff]
  %v47 = vld [vmem:[%s2 + $0xb0] sm:$0xff]
  %v48 = vld [vmem:[%s2 + $0xb8] sm:$0xff]
  %v49 = vld [vmem:[%s2 + $0xc0] sm:$0xff]
  %v50 = vld [vmem:[%s2 + $0xc8] sm:$0xff]
  %v51 = vld [vmem:[%s2 + $0xd0] sm:$0xff]
  %v52 = vld [vmem:[%s2 + $0xd8] sm:$0xff]
  %v53 = vld [vmem:[%s2 + $0xe0] sm:$0xff]
  %v54 = vld [vmem:[%s2 + $0xe8] sm:$0xff]
  %v55 = vld [vmem:[%s2 + $0xf0] sm:$0xff]
  %v56 = vld [vmem:[%s2 + $0xf8] sm:$0xff]
  %v89 = vunpack.c.l.b16 %v25
  %v90 = vunpack.c.h.b16 %v25
  %v91 = vunpack.c.l.b16 %v26
  %v92 = vunpack.c.h.b16 %v26
  %v93 = vunpack.c.l.b16 %v27
  %v94 = vunpack.c.h.b16 %v27
  %v95 = vunpack.c.l.b16 %v28
  %v96 = vunpack.c.h.b16 %v28
  %v97 = vunpack.c.l.b16 %v29
  %v98 = vunpack.c.h.b16 %v29
  %v99 = vunpack.c.l.b16 %v30
  %v100 = vunpack.c.h.b16 %v30
  %v101 = vunpack.c.l.b16 %v31
  %v102 = vunpack.c.h.b16 %v31
  %v103 = vunpack.c.l.b16 %v32
  %v104 = vunpack.c.h.b16 %v32
  %v105 = vunpack.c.l.b16 %v33
  %v106 = vunpack.c.h.b16 %v33
  %v107 = vunpack.c.l.b16 %v34
  %v108 = vunpack.c.h.b16 %v34
  %v109 = vunpack.c.l.b16 %v35
  %v110 = vunpack.c.h.b16 %v35
  %v111 = vunpack.c.l.b16 %v36
  %v112 = vunpack.c.h.b16 %v36
  %v113 = vunpack.c.l.b16 %v37
  %v114 = vunpack.c.h.b16 %v37
  %v115 = vunpack.c.l.b16 %v38
  %v116 = vunpack.c.h.b16 %v38
  %v117 = vunpack.c.l.b16 %v39
  %v118 = vunpack.c.h.b16 %v39
  %v119 = vunpack.c.l.b16 %v40
  %v120 = vunpack.c.h.b16 %v40
  %v121 = vunpack.c.l.b16 %v41
  %v122 = vunpack.c.h.b16 %v41
  %v123 = vunpack.c.l.b16 %v42
  %v124 = vunpack.c.h.b16 %v42
  %v125 = vunpack.c.l.b16 %v43
  %v126 = vunpack.c.h.b16 %v43
  %v127 = vunpack.c.l.b16 %v44
  %v128 = vunpack.c.h.b16 %v44
  %v129 = vunpack.c.l.b16 %v45
  %v130 = vunpack.c.h.b16 %v45
  %v131 = vunpack.c.l.b16 %v46
  %v132 = vunpack.c.h.b16 %v46
  %v133 = vunpack.c.l.b16 %v47
  %v134 = vunpack.c.h.b16 %v47
  %v135 = vunpack.c.l.b16 %v48
  %v136 = vunpack.c.h.b16 %v48
  %v137 = vunpack.c.l.b16 %v49
  %v138 = vunpack.c.h.b16 %v49
  %v139 = vunpack.c.l.b16 %v50
  %v140 = vunpack.c.h.b16 %v50
  %v141 = vunpack.c.l.b16 %v51
  %v142 = vunpack.c.h.b16 %v51
  %v143 = vunpack.c.l.b16 %v52
  %v144 = vunpack.c.h.b16 %v52
  %v145 = vunpack.c.l.b16 %v53
  %v146 = vunpack.c.h.b16 %v53
  %v147 = vunpack.c.l.b16 %v54
  %v148 = vunpack.c.h.b16 %v54
  %v149 = vunpack.c.l.b16 %v55
  %v150 = vunpack.c.h.b16 %v55
  %v151 = vunpack.c.l.b16 %v56
  %v152 = vunpack.c.h.b16 %v56
  %v153 = vpack.c.b16 %v105, %v89
  %v154 = vpack.c.b16 %v106, %v90
  %v155 = vpack.c.b16 %v107, %v91
  %v156 = vpack.c.b16 %v108, %v92
  %v157 = vpack.c.b16 %v109, %v93
  %v158 = vpack.c.b16 %v110, %v94
  %v159 = vpack.c.b16 %v111, %v95
  %v160 = vpack.c.b16 %v112, %v96
  %v161 = vpack.c.b16 %v113, %v97
  %v162 = vpack.c.b16 %v114, %v98
  %v163 = vpack.c.b16 %v115, %v99
  %v164 = vpack.c.b16 %v116, %v100
  %v165 = vpack.c.b16 %v117, %v101
  %v166 = vpack.c.b16 %v118, %v102
  %v167 = vpack.c.b16 %v119, %v103
  %v168 = vpack.c.b16 %v120, %v104
  %v169 = vpack.c.b16 %v137, %v121
  %v170 = vpack.c.b16 %v138, %v122
  %v171 = vpack.c.b16 %v139, %v123
  %v172 = vpack.c.b16 %v140, %v124
  %v173 = vpack.c.b16 %v141, %v125
  %v174 = vpack.c.b16 %v142, %v126
  %v175 = vpack.c.b16 %v143, %v127
  %v176 = vpack.c.b16 %v144, %v128
  %v177 = vpack.c.b16 %v145, %v129
  %v178 = vpack.c.b16 %v146, %v130
  %v179 = vpack.c.b16 %v147, %v131
  %v180 = vpack.c.b16 %v148, %v132
  %v181 = vpack.c.b16 %v149, %v133
  %v182 = vpack.c.b16 %v150, %v134
  %v183 = vpack.c.b16 %v151, %v135
  %v184 = vpack.c.b16 %v152, %v136
  %vm217 = vcmask 261120
  %v219 = vsel %vm217, %v24, 0
  %221 = vmatprep.subr.bf16.mxu0 %v154
  %222 = vmatpush1.bf16.msra.mxu0 %v153
  %223 = vmatprep.subr.bf16.mxu0 %v170
  %224 = vmatpush1.bf16.msra.mxu0 %v169
  %225 = vmatprep.subr.bf16.mxu0 0
  %226 = vmatpush1.bf16.msra.mxu0 0
  %227 = vmatprep.subr.bf16.mxu0 0
  %228 = vmatpush1.bf16.msra.mxu0 0
  %229 = vmatprep.subr.bf16.mxu0 0
  %230 = vmatpush1.bf16.msra.mxu0 0
  %231 = vmatprep.subr.bf16.mxu0 0
  %232 = vmatpush1.bf16.msra.mxu0 0
  %233 = vmatprep.subr.bf16.mxu0 0
  %234 = vmatpush1.bf16.msra.mxu0 0
  %235 = vmatprep.subr.bf16.mxu0 0
  %236 = vmatpush1.bf16.msra.mxu0 0
  %237 = vmatprep.subr.bf16.mxu0 0
  %238 = vmatpush1.bf16.msra.mxu0 0
  %239 = vmatprep.subr.bf16.mxu0 0
  %240 = vmatpush1.bf16.msra.mxu0 0
  %241 = vmatprep.subr.bf16.mxu0 0
  %242 = vmatpush1.bf16.msra.mxu0 0
  %243 = vmatprep.subr.bf16.mxu0 0
  %244 = vmatpush1.bf16.msra.mxu0 0
  %245 = vmatprep.subr.bf16.mxu0 0
  %246 = vmatpush1.bf16.msra.mxu0 0
  %247 = vmatprep.subr.bf16.mxu0 0
  %248 = vmatpush1.bf16.msra.mxu0 0
  %249 = vmatprep.subr.bf16.mxu0 0
  %250 = vmatpush1.bf16.msra.mxu0 0
  %251 = vmatprep.subr.bf16.mxu0 0
  %252 = vmatpush1.bf16.msra.mxu0 0
  %253 = vmatprep.mubr.bf16.mxu0 0
  %254 = vmatmul.mubr.bf16.gmra.mrb[0].mxu0 %v219
  %v255 = vpop.f32.mrb[0].mxu0
  %v256 = vadd.f32 0.0, %v255
  %v257 = vpop.f32.mrb[0].mxu0
  %v258 = vadd.f32 0.0, %v257
  %v259 = vpop.f32.mrb[0].mxu0
  %v260 = vpop.f32.mrb[0].mxu0
  %261 = vdwg.mxu0
  %262 = vmatprep.subr.bf16.mxu0 %v156
  %263 = vmatpush1.bf16.msra.mxu0 %v155
  %264 = vmatprep.subr.bf16.mxu0 %v172
  %265 = vmatpush1.bf16.msra.mxu0 %v171
  %266 = vmatprep.subr.bf16.mxu0 0
  %267 = vmatpush1.bf16.msra.mxu0 0
  %268 = vmatprep.subr.bf16.mxu0 0
  %269 = vmatpush1.bf16.msra.mxu0 0
  %270 = vmatprep.subr.bf16.mxu0 0
  %271 = vmatpush1.bf16.msra.mxu0 0
  %272 = vmatprep.subr.bf16.mxu0 0
  %273 = vmatpush1.bf16.msra.mxu0 0
  %274 = vmatprep.subr.bf16.mxu0 0
  %275 = vmatpush1.bf16.msra.mxu0 0
  %276 = vmatprep.subr.bf16.mxu0 0
  %277 = vmatpush1.bf16.msra.mxu0 0
  %278 = vmatprep.subr.bf16.mxu0 0
  %279 = vmatpush1.bf16.msra.mxu0 0
  %280 = vmatprep.subr.bf16.mxu0 0
  %281 = vmatpush1.bf16.msra.mxu0 0
  %282 = vmatprep.subr.bf16.mxu0 0
  %283 = vmatpush1.bf16.msra.mxu0 0
  %284 = vmatprep.subr.bf16.mxu0 0
  %285 = vmatpush1.bf16.msra.mxu0 0
  %286 = vmatprep.subr.bf16.mxu0 0
  %287 = vmatpush1.bf16.msra.mxu0 0
  %288 = vmatprep.subr.bf16.mxu0 0
  %289 = vmatpush1.bf16.msra.mxu0 0
  %290 = vmatprep.subr.bf16.mxu0 0
  %291 = vmatpush1.bf16.msra.mxu0 0
  %292 = vmatprep.subr.bf16.mxu0 0
  %293 = vmatpush1.bf16.msra.mxu0 0
  %294 = vmatprep.mubr.bf16.mxu0 0
  %295 = vmatmul.mubr.bf16.gmra.mrb[0].mxu0 %v219
  %v296 = vpop.f32.mrb[0].mxu0
  %v297 = vadd.f32 0.0, %v296
  %v298 = vpop.f32.mrb[0].mxu0
  %v299 = vadd.f32 0.0, %v298
  %v300 = vpop.f32.mrb[0].mxu0
  %v301 = vpop.f32.mrb[0].mxu0
  %302 = vdwg.mxu0
  %303 = vmatprep.subr.bf16.mxu0 %v158
  %304 = vmatpush1.bf16.msra.mxu0 %v157
  %305 = vmatprep.subr.bf16.mxu0 %v174
  %306 = vmatpush1.bf16.msra.mxu0 %v173
  %307 = vmatprep.subr.bf16.mxu0 0
  %308 = vmatpush1.bf16.msra.mxu0 0
  %309 = vmatprep.subr.bf16.mxu0 0
  %310 = vmatpush1.bf16.msra.mxu0 0
  %311 = vmatprep.subr.bf16.mxu0 0
  %312 = vmatpush1.bf16.msra.mxu0 0
  %313 = vmatprep.subr.bf16.mxu0 0
  %314 = vmatpush1.bf16.msra.mxu0 0
  %315 = vmatprep.subr.bf16.mxu0 0
  %316 = vmatpush1.bf16.msra.mxu0 0
  %317 = vmatprep.subr.bf16.mxu0 0
  %318 = vmatpush1.bf16.msra.mxu0 0
  %319 = vmatprep.subr.bf16.mxu0 0
  %320 = vmatpush1.bf16.msra.mxu0 0
  %321 = vmatprep.subr.bf16.mxu0 0
  %322 = vmatpush1.bf16.msra.mxu0 0
  %323 = vmatprep.subr.bf16.mxu0 0
  %324 = vmatpush1.bf16.msra.mxu0 0
  %325 = vmatprep.subr.bf16.mxu0 0
  %326 = vmatpush1.bf16.msra.mxu0 0
  %327 = vmatprep.subr.bf16.mxu0 0
  %328 = vmatpush1.bf16.msra.mxu0 0
  %329 = vmatprep.subr.bf16.mxu0 0
  %330 = vmatpush1.bf16.msra.mxu0 0
  %331 = vmatprep.subr.bf16.mxu0 0
  %332 = vmatpush1.bf16.msra.mxu0 0
  %333 = vmatprep.subr.bf16.mxu0 0
  %334 = vmatpush1.bf16.msra.mxu0 0
  %335 = vmatprep.mubr.bf16.mxu0 0
  %336 = vmatmul.mubr.bf16.gmra.mrb[0].mxu0 %v219
  %v337 = vpop.f32.mrb[0].mxu0
  %v338 = vadd.f32 0.0, %v337
  %v339 = vpop.f32.mrb[0].mxu0
  %v340 = vadd.f32 0.0, %v339
  %v341 = vpop.f32.mrb[0].mxu0
  %v342 = vpop.f32.mrb[0].mxu0
  %343 = vdwg.mxu0
  %344 = vmatprep.subr.bf16.mxu0 %v160
  %345 = vmatpush1.bf16.msra.mxu0 %v159
  %346 = vmatprep.subr.bf16.mxu0 %v176
  %347 = vmatpush1.bf16.msra.mxu0 %v175
  %348 = vmatprep.subr.bf16.mxu0 0
  %349 = vmatpush1.bf16.msra.mxu0 0
  %350 = vmatprep.subr.bf16.mxu0 0
  %351 = vmatpush1.bf16.msra.mxu0 0
  %352 = vmatprep.subr.bf16.mxu0 0
  %353 = vmatpush1.bf16.msra.mxu0 0
  %354 = vmatprep.subr.bf16.mxu0 0
  %355 = vmatpush1.bf16.msra.mxu0 0
  %356 = vmatprep.subr.bf16.mxu0 0
  %357 = vmatpush1.bf16.msra.mxu0 0
  %358 = vmatprep.subr.bf16.mxu0 0
  %359 = vmatpush1.bf16.msra.mxu0 0
  %360 = vmatprep.subr.bf16.mxu0 0
  %361 = vmatpush1.bf16.msra.mxu0 0
  %362 = vmatprep.subr.bf16.mxu0 0
  %363 = vmatpush1.bf16.msra.mxu0 0
  %364 = vmatprep.subr.bf16.mxu0 0
  %365 = vmatpush1.bf16.msra.mxu0 0
  %366 = vmatprep.subr.bf16.mxu0 0
  %367 = vmatpush1.bf16.msra.mxu0 0
  %368 = vmatprep.subr.bf16.mxu0 0
  %369 = vmatpush1.bf16.msra.mxu0 0
  %370 = vmatprep.subr.bf16.mxu0 0
  %371 = vmatpush1.bf16.msra.mxu0 0
  %372 = vmatprep.subr.bf16.mxu0 0
  %373 = vmatpush1.bf16.msra.mxu0 0
  %374 = vmatprep.subr.bf16.mxu0 0
  %375 = vmatpush1.bf16.msra.mxu0 0
  %376 = vmatprep.mubr.bf16.mxu0 0
  %377 = vmatmul.mubr.bf16.gmra.mrb[0].mxu0 %v219
  %v378 = vpop.f32.mrb[0].mxu0
  %v379 = vadd.f32 0.0, %v378
  %v380 = vpop.f32.mrb[0].mxu0
  %v381 = vadd.f32 0.0, %v380
  %v382 = vpop.f32.mrb[0].mxu0
  %v383 = vpop.f32.mrb[0].mxu0
  %384 = vdwg.mxu0
  %385 = vmatprep.subr.bf16.mxu0 %v162
  %386 = vmatpush1.bf16.msra.mxu0 %v161
  %387 = vmatprep.subr.bf16.mxu0 %v178
  %388 = vmatpush1.bf16.msra.mxu0 %v177
  %389 = vmatprep.subr.bf16.mxu0 0
  %390 = vmatpush1.bf16.msra.mxu0 0
  %391 = vmatprep.subr.bf16.mxu0 0
  %392 = vmatpush1.bf16.msra.mxu0 0
  %393 = vmatprep.subr.bf16.mxu0 0
  %394 = vmatpush1.bf16.msra.mxu0 0
  %395 = vmatprep.subr.bf16.mxu0 0
  %396 = vmatpush1.bf16.msra.mxu0 0
  %397 = vmatprep.subr.bf16.mxu0 0
  %398 = vmatpush1.bf16.msra.mxu0 0
  %399 = vmatprep.subr.bf16.mxu0 0
  %400 = vmatpush1.bf16.msra.mxu0 0
  %401 = vmatprep.subr.bf16.mxu0 0
  %402 = vmatpush1.bf16.msra.mxu0 0
  %403 = vmatprep.subr.bf16.mxu0 0
  %404 = vmatpush1.bf16.msra.mxu0 0
  %405 = vmatprep.subr.bf16.mxu0 0
  %406 = vmatpush1.bf16.msra.mxu0 0
  %407 = vmatprep.subr.bf16.mxu0 0
  %408 = vmatpush1.bf16.msra.mxu0 0
  %409 = vmatprep.subr.bf16.mxu0 0
  %410 = vmatpush1.bf16.msra.mxu0 0
  %411 = vmatprep.subr.bf16.mxu0 0
  %412 = vmatpush1.bf16.msra.mxu0 0
  %413 = vmatprep.subr.bf16.mxu0 0
  %414 = vmatpush1.bf16.msra.mxu0 0
  %415 = vmatprep.subr.bf16.mxu0 0
  %416 = vmatpush1.bf16.msra.mxu0 0
  %417 = vmatprep.mubr.bf16.mxu0 0
  %418 = vmatmul.mubr.bf16.gmra.mrb[0].mxu0 %v219
  %v419 = vpop.f32.mrb[0].mxu0
  %v420 = vadd.f32 0.0, %v419
  %v421 = vpop.f32.mrb[0].mxu0
  %v422 = vadd.f32 0.0, %v421
  %v423 = vpop.f32.mrb[0].mxu0
  %v424 = vpop.f32.mrb[0].mxu0
  %425 = vdwg.mxu0
  %426 = vmatprep.subr.bf16.mxu0 %v164
  %427 = vmatpush1.bf16.msra.mxu0 %v163
  %428 = vmatprep.subr.bf16.mxu0 %v180
  %429 = vmatpush1.bf16.msra.mxu0 %v179
  %430 = vmatprep.subr.bf16.mxu0 0
  %431 = vmatpush1.bf16.msra.mxu0 0
  %432 = vmatprep.subr.bf16.mxu0 0
  %433 = vmatpush1.bf16.msra.mxu0 0
  %434 = vmatprep.subr.bf16.mxu0 0
  %435 = vmatpush1.bf16.msra.mxu0 0
  %436 = vmatprep.subr.bf16.mxu0 0
  %437 = vmatpush1.bf16.msra.mxu0 0
  %438 = vmatprep.subr.bf16.mxu0 0
  %439 = vmatpush1.bf16.msra.mxu0 0
  %440 = vmatprep.subr.bf16.mxu0 0
  %441 = vmatpush1.bf16.msra.mxu0 0
  %442 = vmatprep.subr.bf16.mxu0 0
  %443 = vmatpush1.bf16.msra.mxu0 0
  %444 = vmatprep.subr.bf16.mxu0 0
  %445 = vmatpush1.bf16.msra.mxu0 0
  %446 = vmatprep.subr.bf16.mxu0 0
  %447 = vmatpush1.bf16.msra.mxu0 0
  %448 = vmatprep.subr.bf16.mxu0 0
  %449 = vmatpush1.bf16.msra.mxu0 0
  %450 = vmatprep.subr.bf16.mxu0 0
  %451 = vmatpush1.bf16.msra.mxu0 0
  %452 = vmatprep.subr.bf16.mxu0 0
  %453 = vmatpush1.bf16.msra.mxu0 0
  %454 = vmatprep.subr.bf16.mxu0 0
  %455 = vmatpush1.bf16.msra.mxu0 0
  %456 = vmatprep.subr.bf16.mxu0 0
  %457 = vmatpush1.bf16.msra.mxu0 0
  %458 = vmatprep.mubr.bf16.mxu0 0
  %459 = vmatmul.mubr.bf16.gmra.mrb[0].mxu0 %v219
  %v460 = vpop.f32.mrb[0].mxu0
  %v461 = vadd.f32 0.0, %v460
  %v462 = vpop.f32.mrb[0].mxu0
  %v463 = vadd.f32 0.0, %v462
  %v464 = vpop.f32.mrb[0].mxu0
  %v465 = vpop.f32.mrb[0].mxu0
  %466 = vdwg.mxu0
  %467 = vmatprep.subr.bf16.mxu0 %v166
  %468 = vmatpush1.bf16.msra.mxu0 %v165
  %469 = vmatprep.subr.bf16.mxu0 %v182
  %470 = vmatpush1.bf16.msra.mxu0 %v181
  %471 = vmatprep.subr.bf16.mxu0 0
  %472 = vmatpush1.bf16.msra.mxu0 0
  %473 = vmatprep.subr.bf16.mxu0 0
  %474 = vmatpush1.bf16.msra.mxu0 0
  %475 = vmatprep.subr.bf16.mxu0 0
  %476 = vmatpush1.bf16.msra.mxu0 0
  %477 = vmatprep.subr.bf16.mxu0 0
  %478 = vmatpush1.bf16.msra.mxu0 0
  %479 = vmatprep.subr.bf16.mxu0 0
  %480 = vmatpush1.bf16.msra.mxu0 0
  %481 = vmatprep.subr.bf16.mxu0 0
  %482 = vmatpush1.bf16.msra.mxu0 0
  %483 = vmatprep.subr.bf16.mxu0 0
  %484 = vmatpush1.bf16.msra.mxu0 0
  %485 = vmatprep.subr.bf16.mxu0 0
  %486 = vmatpush1.bf16.msra.mxu0 0
  %487 = vmatprep.subr.bf16.mxu0 0
  %488 = vmatpush1.bf16.msra.mxu0 0
  %489 = vmatprep.subr.bf16.mxu0 0
  %490 = vmatpush1.bf16.msra.mxu0 0
  %491 = vmatprep.subr.bf16.mxu0 0
  %492 = vmatpush1.bf16.msra.mxu0 0
  %493 = vmatprep.subr.bf16.mxu0 0
  %494 = vmatpush1.bf16.msra.mxu0 0
  %495 = vmatprep.subr.bf16.mxu0 0
  %496 = vmatpush1.bf16.msra.mxu0 0
  %497 = vmatprep.subr.bf16.mxu0 0
  %498 = vmatpush1.bf16.msra.mxu0 0
  %499 = vmatprep.mubr.bf16.mxu0 0
  %500 = vmatmul.mubr.bf16.gmra.mrb[0].mxu0 %v219
  %v501 = vpop.f32.mrb[0].mxu0
  %v502 = vadd.f32 0.0, %v501
  %v503 = vpop.f32.mrb[0].mxu0
  %v504 = vadd.f32 0.0, %v503
  %v505 = vpop.f32.mrb[0].mxu0
  %v506 = vpop.f32.mrb[0].mxu0
  %507 = vdwg.mxu0
  %508 = vmatprep.subr.bf16.mxu0 %v168
  %509 = vmatpush1.bf16.msra.mxu0 %v167
  %510 = vmatprep.subr.bf16.mxu0 %v184
  %511 = vmatpush1.bf16.msra.mxu0 %v183
  %512 = vmatprep.subr.bf16.mxu0 0
  %513 = vmatpush1.bf16.msra.mxu0 0
  %514 = vmatprep.subr.bf16.mxu0 0
  %515 = vmatpush1.bf16.msra.mxu0 0
  %516 = vmatprep.subr.bf16.mxu0 0
  %517 = vmatpush1.bf16.msra.mxu0 0
  %518 = vmatprep.subr.bf16.mxu0 0
  %519 = vmatpush1.bf16.msra.mxu0 0
  %520 = vmatprep.subr.bf16.mxu0 0
  %521 = vmatpush1.bf16.msra.mxu0 0
  %522 = vmatprep.subr.bf16.mxu0 0
  %523 = vmatpush1.bf16.msra.mxu0 0
  %524 = vmatprep.subr.bf16.mxu0 0
  %525 = vmatpush1.bf16.msra.mxu0 0
  %526 = vmatprep.subr.bf16.mxu0 0
  %527 = vmatpush1.bf16.msra.mxu0 0
  %528 = vmatprep.subr.bf16.mxu0 0
  %529 = vmatpush1.bf16.msra.mxu0 0
  %530 = vmatprep.subr.bf16.mxu0 0
  %531 = vmatpush1.bf16.msra.mxu0 0
  %532 = vmatprep.subr.bf16.mxu0 0
  %533 = vmatpush1.bf16.msra.mxu0 0
  %534 = vmatprep.subr.bf16.mxu0 0
  %535 = vmatpush1.bf16.msra.mxu0 0
  %536 = vmatprep.subr.bf16.mxu0 0
  %537 = vmatpush1.bf16.msra.mxu0 0
  %538 = vmatprep.subr.bf16.mxu0 0
  %539 = vmatpush1.bf16.msra.mxu0 0
  %540 = vmatprep.mubr.bf16.mxu0 0
  %541 = vmatmul.mubr.bf16.gmra.mrb[0].mxu0 %v219
  %v542 = vpop.f32.mrb[0].mxu0
  %v543 = vadd.f32 0.0, %v542
  %v544 = vpop.f32.mrb[0].mxu0
  %v545 = vadd.f32 0.0, %v544
  %v546 = vpop.f32.mrb[0].mxu0
  %v547 = vpop.f32.mrb[0].mxu0
  %548 = vdwg.mxu0
  %vm549 = vcmask 1041408
  %v550 = vsel %vm549, %v256, 0.0
  %v551 = vrot.slane %v550, 4
  %v552 = vadd.f32 %v550, %v551
  %v553 = vrot.slane %v552, 2
  %v554 = vadd.f32 %v552, %v553
  %v555 = vrot.slane %v554, 1
  %v556 = vadd.f32 %v554, %v555
  %v557 = vsel %vm549, %v258, 0.0
  %v558 = vrot.slane %v557, 4
  %v559 = vadd.f32 %v557, %v558
  %v560 = vrot.slane %v559, 2
  %v561 = vadd.f32 %v559, %v560
  %v562 = vrot.slane %v561, 1
  %v563 = vadd.f32 %v561, %v562
  %v564 = vsel %vm549, %v297, 0.0
  %v565 = vrot.slane %v564, 4
  %v566 = vadd.f32 %v564, %v565
  %v567 = vrot.slane %v566, 2
  %v568 = vadd.f32 %v566, %v567
  %v569 = vrot.slane %v568, 1
  %v570 = vadd.f32 %v568, %v569
  %v571 = vsel %vm549, %v299, 0.0
  %v572 = vrot.slane %v571, 4
  %v573 = vadd.f32 %v571, %v572
  %v574 = vrot.slane %v573, 2
  %v575 = vadd.f32 %v573, %v574
  %v576 = vrot.slane %v575, 1
  %v577 = vadd.f32 %v575, %v576
  %v578 = vsel %vm549, %v338, 0.0
  %v579 = vrot.slane %v578, 4
  %v580 = vadd.f32 %v578, %v579
  %v581 = vrot.slane %v580, 2
  %v582 = vadd.f32 %v580, %v581
  %v583 = vrot.slane %v582, 1
  %v584 = vadd.f32 %v582, %v583
  %v585 = vsel %vm549, %v340, 0.0
  %v586 = vrot.slane %v585, 4
  %v587 = vadd.f32 %v585, %v586
  %v588 = vrot.slane %v587, 2
  %v589 = vadd.f32 %v587, %v588
  %v590 = vrot.slane %v589, 1
  %v591 = vadd.f32 %v589, %v590
  %v592 = vsel %vm549, %v379, 0.0
  %v593 = vrot.slane %v592, 4
  %v594 = vadd.f32 %v592, %v593
  %v595 = vrot.slane %v594, 2
  %v596 = vadd.f32 %v594, %v595
  %v597 = vrot.slane %v596, 1
  %v598 = vadd.f32 %v596, %v597
  %v599 = vsel %vm549, %v381, 0.0
  %v600 = vrot.slane %v599, 4
  %v601 = vadd.f32 %v599, %v600
  %v602 = vrot.slane %v601, 2
  %v603 = vadd.f32 %v601, %v602
  %v604 = vrot.slane %v603, 1
  %v605 = vadd.f32 %v603, %v604
  %v606 = vsel %vm549, %v420, 0.0
  %v607 = vrot.slane %v606, 4
  %v608 = vadd.f32 %v606, %v607
  %v609 = vrot.slane %v608, 2
  %v610 = vadd.f32 %v608, %v609
  %v611 = vrot.slane %v610, 1
  %v612 = vadd.f32 %v610, %v611
  %v613 = vsel %vm549, %v422, 0.0
  %v614 = vrot.slane %v613, 4
  %v615 = vadd.f32 %v613, %v614
  %v616 = vrot.slane %v615, 2
  %v617 = vadd.f32 %v615, %v616
  %v618 = vrot.slane %v617, 1
  %v619 = vadd.f32 %v617, %v618
  %v620 = vsel %vm549, %v461, 0.0
  %v621 = vrot.slane %v620, 4
  %v622 = vadd.f32 %v620, %v621
  %v623 = vrot.slane %v622, 2
  %v624 = vadd.f32 %v622, %v623
  %v625 = vrot.slane %v624, 1
  %v626 = vadd.f32 %v624, %v625
  %v627 = vsel %vm549, %v463, 0.0
  %v628 = vrot.slane %v627, 4
  %v629 = vadd.f32 %v627, %v628
  %v630 = vrot.slane %v629, 2
  %v631 = vadd.f32 %v629, %v630
  %v632 = vrot.slane %v631, 1
  %v633 = vadd.f32 %v631, %v632
  %v634 = vsel %vm549, %v502, 0.0
  %v635 = vrot.slane %v634, 4
  %v636 = vadd.f32 %v634, %v635
  %v637 = vrot.slane %v636, 2
  %v638 = vadd.f32 %v636, %v637
  %v639 = vrot.slane %v638, 1
  %v640 = vadd.f32 %v638, %v639
  %v641 = vsel %vm549, %v504, 0.0
  %v642 = vrot.slane %v641, 4
  %v643 = vadd.f32 %v641, %v642
  %v644 = vrot.slane %v643, 2
  %v645 = vadd.f32 %v643, %v644
  %v646 = vrot.slane %v645, 1
  %v647 = vadd.f32 %v645, %v646
  %v648 = vsel %vm549, %v543, 0.0
  %v649 = vrot.slane %v648, 4
  %v650 = vadd.f32 %v648, %v649
  %v651 = vrot.slane %v650, 2
  %v652 = vadd.f32 %v650, %v651
  %v653 = vrot.slane %v652, 1
  %v654 = vadd.f32 %v652, %v653
  %v655 = vsel %vm549, %v545, 0.0
  %v656 = vrot.slane %v655, 4
  %v657 = vadd.f32 %v655, %v656
  %v658 = vrot.slane %v657, 2
  %v659 = vadd.f32 %v657, %v658
  %v660 = vrot.slane %v659, 1
  %v661 = vadd.f32 %v659, %v660
  %v662 = vmul.f32 %v256, %v256
  %v663 = vmul.f32 %v258, %v258
  %v664 = vmul.f32 %v297, %v297
  %v665 = vmul.f32 %v299, %v299
  %v666 = vmul.f32 %v338, %v338
  %v667 = vmul.f32 %v340, %v340
  %v668 = vmul.f32 %v379, %v379
  %v669 = vmul.f32 %v381, %v381
  %v670 = vmul.f32 %v420, %v420
  %v671 = vmul.f32 %v422, %v422
  %v672 = vmul.f32 %v461, %v461
  %v673 = vmul.f32 %v463, %v463
  %v674 = vmul.f32 %v502, %v502
  %v675 = vmul.f32 %v504, %v504
  %v676 = vmul.f32 %v543, %v543
  %v677 = vmul.f32 %v545, %v545
  %v678 = vsel %vm549, %v662, 0.0
  %v679 = vrot.slane %v678, 4
  %v680 = vadd.f32 %v678, %v679
  %v681 = vrot.slane %v680, 2
  %v682 = vadd.f32 %v680, %v681
  %v683 = vrot.slane %v682, 1
  %v684 = vadd.f32 %v682, %v683
  %v685 = vsel %vm549, %v663, 0.0
  %v686 = vrot.slane %v685, 4
  %v687 = vadd.f32 %v685, %v686
  %v688 = vrot.slane %v687, 2
  %v689 = vadd.f32 %v687, %v688
  %v690 = vrot.slane %v689, 1
  %v691 = vadd.f32 %v689, %v690
  %v692 = vsel %vm549, %v664, 0.0
  %v693 = vrot.slane %v692, 4
  %v694 = vadd.f32 %v692, %v693
  %v695 = vrot.slane %v694, 2
  %v696 = vadd.f32 %v694, %v695
  %v697 = vrot.slane %v696, 1
  %v698 = vadd.f32 %v696, %v697
  %v699 = vsel %vm549, %v665, 0.0
  %v700 = vrot.slane %v699, 4
  %v701 = vadd.f32 %v699, %v700
  %v702 = vrot.slane %v701, 2
  %v703 = vadd.f32 %v701, %v702
  %v704 = vrot.slane %v703, 1
  %v705 = vadd.f32 %v703, %v704
  %v706 = vsel %vm549, %v666, 0.0
  %v707 = vrot.slane %v706, 4
  %v708 = vadd.f32 %v706, %v707
  %v709 = vrot.slane %v708, 2
  %v710 = vadd.f32 %v708, %v709
  %v711 = vrot.slane %v710, 1
  %v712 = vadd.f32 %v710, %v711
  %v713 = vsel %vm549, %v667, 0.0
  %v714 = vrot.slane %v713, 4
  %v715 = vadd.f32 %v713, %v714
  %v716 = vrot.slane %v715, 2
  %v717 = vadd.f32 %v715, %v716
  %v718 = vrot.slane %v717, 1
  %v719 = vadd.f32 %v717, %v718
  %v720 = vsel %vm549, %v668, 0.0
  %v721 = vrot.slane %v720, 4
  %v722 = vadd.f32 %v720, %v721
  %v723 = vrot.slane %v722, 2
  %v724 = vadd.f32 %v722, %v723
  %v725 = vrot.slane %v724, 1
  %v726 = vadd.f32 %v724, %v725
  %v727 = vsel %vm549, %v669, 0.0
  %v728 = vrot.slane %v727, 4
  %v729 = vadd.f32 %v727, %v728
  %v730 = vrot.slane %v729, 2
  %v731 = vadd.f32 %v729, %v730
  %v732 = vrot.slane %v731, 1
  %v733 = vadd.f32 %v731, %v732
  %v734 = vsel %vm549, %v670, 0.0
  %v735 = vrot.slane %v734, 4
  %v736 = vadd.f32 %v734, %v735
  %v737 = vrot.slane %v736, 2
  %v738 = vadd.f32 %v736, %v737
  %v739 = vrot.slane %v738, 1
  %v740 = vadd.f32 %v738, %v739
  %v741 = vsel %vm549, %v671, 0.0
  %v742 = vrot.slane %v741, 4
  %v743 = vadd.f32 %v741, %v742
  %v744 = vrot.slane %v743, 2
  %v745 = vadd.f32 %v743, %v744
  %v746 = vrot.slane %v745, 1
  %v747 = vadd.f32 %v745, %v746
  %v748 = vsel %vm549, %v672, 0.0
  %v749 = vrot.slane %v748, 4
  %v750 = vadd.f32 %v748, %v749
  %v751 = vrot.slane %v750, 2
  %v752 = vadd.f32 %v750, %v751
  %v753 = vrot.slane %v752, 1
  %v754 = vadd.f32 %v752, %v753
  %v755 = vsel %vm549, %v673, 0.0
  %v756 = vrot.slane %v755, 4
  %v757 = vadd.f32 %v755, %v756
  %v758 = vrot.slane %v757, 2
  %v759 = vadd.f32 %v757, %v758
  %v760 = vrot.slane %v759, 1
  %v761 = vadd.f32 %v759, %v760
  %v762 = vsel %vm549, %v674, 0.0
  %v763 = vrot.slane %v762, 4
  %v764 = vadd.f32 %v762, %v763
  %v765 = vrot.slane %v764, 2
  %v766 = vadd.f32 %v764, %v765
  %v767 = vrot.slane %v766, 1
  %v768 = vadd.f32 %v766, %v767
  %v769 = vsel %vm549, %v675, 0.0
  %v770 = vrot.slane %v769, 4
  %v771 = vadd.f32 %v769, %v770
  %v772 = vrot.slane %v771, 2
  %v773 = vadd.f32 %v771, %v772
  %v774 = vrot.slane %v773, 1
  %v775 = vadd.f32 %v773, %v774
  %v776 = vsel %vm549, %v676, 0.0
  %v777 = vrot.slane %v776, 4
  %v778 = vadd.f32 %v776, %v777
  %v779 = vrot.slane %v778, 2
  %v780 = vadd.f32 %v778, %v779
  %v781 = vrot.slane %v780, 1
  %v782 = vadd.f32 %v780, %v781
  %v783 = vsel %vm549, %v677, 0.0
  %v784 = vrot.slane %v783, 4
  %v785 = vadd.f32 %v783, %v784
  %v786 = vrot.slane %v785, 2
  %v787 = vadd.f32 %v785, %v786
  %v788 = vrot.slane %v787, 1
  %v789 = vadd.f32 %v787, %v788
  %v790 = vadd.f32 %v556, %v563
  %v791 = vadd.f32 %v790, %v570
  %v792 = vadd.f32 %v791, %v577
  %v793 = vadd.f32 %v792, %v584
  %v794 = vadd.f32 %v793, %v591
  %v795 = vadd.f32 %v794, %v598
  %v796 = vadd.f32 %v795, %v605
  %v797 = vadd.f32 %v796, %v612
  %v798 = vadd.f32 %v797, %v619
  %v799 = vadd.f32 %v798, %v626
  %v800 = vadd.f32 %v799, %v633
  %v801 = vadd.f32 %v800, %v640
  %v802 = vadd.f32 %v801, %v647
  %v803 = vadd.f32 %v802, %v654
  %v804 = vadd.f32 %v803, %v661
  %v805 = vmul.f32 %v804, 0.03125
  %v806 = vadd.f32 %v684, %v691
  %v807 = vadd.f32 %v806, %v698
  %v808 = vadd.f32 %v807, %v705
  %v809 = vadd.f32 %v808, %v712
  %v810 = vadd.f32 %v809, %v719
  %v811 = vadd.f32 %v810, %v726
  %v812 = vadd.f32 %v811, %v733
  %v813 = vadd.f32 %v812, %v740
  %v814 = vadd.f32 %v813, %v747
  %v815 = vadd.f32 %v814, %v754
  %v816 = vadd.f32 %v815, %v761
  %v817 = vadd.f32 %v816, %v768
  %v818 = vadd.f32 %v817, %v775
  %v819 = vadd.f32 %v818, %v782
  %v820 = vadd.f32 %v819, %v789
  %v821 = vmul.f32 %v820, 0.03125
  %v822 = vmul.f32 %v805, %v805
  %v823 = vsub.f32 %v821, %v822
  %v824 = vmax.f32 %v823, 0.0
  %v825 = vld [vmem:[%s3] sm:$0x1]
  %v826 = vadd.f32 %v824, 1e-05
  %v827 = vrsqrt.pop %v826
  %v828 = vmul.f32 %v825, %v827
  %v829 = vld [vmem:[%s4] sm:$0x1]
  %v830 = vmul.f32 %v805, %v828
  %v831 = vsub.f32 %v829, %v830
  %v832 = vlaneseq
  %v833 = vshrl.u32 %v832, 7
  %v834 = vsub.s32 0, %v833
  %v835 = vrot.slane %v828, %v834
  %v836 = vmul.f32 %v256, %v835
  %v837 = vmul.f32 %v258, %v835
  %v838 = vmul.f32 %v297, %v835
  %v839 = vmul.f32 %v299, %v835
  %v840 = vmul.f32 %v338, %v835
  %v841 = vmul.f32 %v340, %v835
  %v842 = vmul.f32 %v379, %v835
  %v843 = vmul.f32 %v381, %v835
  %v844 = vmul.f32 %v420, %v835
  %v845 = vmul.f32 %v422, %v835
  %v846 = vmul.f32 %v461, %v835
  %v847 = vmul.f32 %v463, %v835
  %v848 = vmul.f32 %v502, %v835
  %v849 = vmul.f32 %v504, %v835
  %v850 = vmul.f32 %v543, %v835
  %v851 = vmul.f32 %v545, %v835
  %v852 = vlaneseq
  %v853 = vshrl.u32 %v852, 7
  %v854 = vsub.s32 0, %v853
  %v855 = vrot.slane %v831, %v854
  %v856 = vadd.f32 %v836, %v855
  %v857 = vadd.f32 %v837, %v855
  %v858 = vadd.f32 %v838, %v855
  %v859 = vadd.f32 %v839, %v855
  %v860 = vadd.f32 %v840, %v855
  %v861 = vadd.f32 %v841, %v855
  %v862 = vadd.f32 %v842, %v855
  %v863 = vadd.f32 %v843, %v855
  %v864 = vadd.f32 %v844, %v855
  %v865 = vadd.f32 %v845, %v855
  %v866 = vadd.f32 %v846, %v855
  %v867 = vadd.f32 %v847, %v855
  %v868 = vadd.f32 %v848, %v855
  %v869 = vadd.f32 %v849, %v855
  %v870 = vadd.f32 %v850, %v855
  %v871 = vadd.f32 %v851, %v855
  %v872 = vmax.f32 %v856, 0.0
  %v873 = vmax.f32 %v857, 0.0
  %v874 = vmax.f32 %v858, 0.0
  %v875 = vmax.f32 %v859, 0.0
  %v876 = vmax.f32 %v860, 0.0
  %v877 = vmax.f32 %v861, 0.0
  %v878 = vmax.f32 %v862, 0.0
  %v879 = vmax.f32 %v863, 0.0
  %v880 = vmax.f32 %v864, 0.0
  %v881 = vmax.f32 %v865, 0.0
  %v882 = vmax.f32 %v866, 0.0
  %v883 = vmax.f32 %v867, 0.0
  %v884 = vmax.f32 %v868, 0.0
  %v885 = vmax.f32 %v869, 0.0
  %v886 = vmax.f32 %v870, 0.0
  %v887 = vmax.f32 %v871, 0.0
  %v888 = vpack.c.bf16 %v872, %v872
  %v889 = vpack.c.bf16 %v873, %v873
  %v890 = vpack.c.bf16 %v874, %v874
  %v891 = vpack.c.bf16 %v875, %v875
  %v892 = vpack.c.bf16 %v876, %v876
  %v893 = vpack.c.bf16 %v877, %v877
  %v894 = vpack.c.bf16 %v878, %v878
  %v895 = vpack.c.bf16 %v879, %v879
  %v896 = vpack.c.bf16 %v880, %v880
  %v897 = vpack.c.bf16 %v881, %v881
  %v898 = vpack.c.bf16 %v882, %v882
  %v899 = vpack.c.bf16 %v883, %v883
  %v900 = vpack.c.bf16 %v884, %v884
  %v901 = vpack.c.bf16 %v885, %v885
  %v902 = vpack.c.bf16 %v886, %v886
  %v903 = vpack.c.bf16 %v887, %v887
  %v920 = vcombine.low %v888, %v889
  %v921 = vcombine.low %v890, %v891
  %v922 = vcombine.low %v892, %v893
  %v923 = vcombine.low %v894, %v895
  %v925 = vunpack.c.l.s4 1966171168
  %v926 = vunpack.c.0.s8 %v925
  %v927 = vlaneseq
  %v928 = vshrl.u32 %v927, 7
  %v929 = vsub.s32 %v926, %v928
  %v930 = vrot.slane %v920, %v929
  %v932 = vunpack.c.l.s4 1966171168
  %v933 = vunpack.c.0.s8 %v932
  %v934 = vlaneseq
  %v935 = vshrl.u32 %v934, 7
  %v936 = vsub.s32 %v933, %v935
  %v937 = vrot.slane %v921, %v936
  %v939 = vunpack.c.l.s4 1966171168
  %v940 = vunpack.c.0.s8 %v939
  %v941 = vlaneseq
  %v942 = vshrl.u32 %v941, 7
  %v943 = vsub.s32 %v940, %v942
  %v944 = vrot.slane %v922, %v943
  %v946 = vunpack.c.l.s4 1966171168
  %v947 = vunpack.c.0.s8 %v946
  %v948 = vlaneseq
  %v949 = vshrl.u32 %v948, 7
  %v950 = vsub.s32 %v947, %v949
  %v951 = vrot.slane %v923, %v950
  %v952 = vcombine.low %v930, %v937
  %v953 = vcombine.low %v944, %v951
  %v955 = vunpack.c.l.s4 1966171168
  %v956 = vunpack.c.0.s8 %v955
  %v957 = vlaneseq
  %v958 = vshrl.u32 %v957, 7
  %v959 = vsub.s32 %v956, %v958
  %v960 = vrot.slane %v952, %v959
  %v962 = vunpack.c.l.s4 1966171168
  %v963 = vunpack.c.0.s8 %v962
  %v964 = vlaneseq
  %v965 = vshrl.u32 %v964, 7
  %v966 = vsub.s32 %v963, %v965
  %v967 = vrot.slane %v953, %v966
  %v968 = vcombine.low %v960, %v967
  %v969 = vcombine.low %v896, %v897
  %v970 = vcombine.low %v898, %v899
  %v971 = vcombine.low %v900, %v901
  %v972 = vcombine.low %v902, %v903
  %v974 = vunpack.c.l.s4 1966171168
  %v975 = vunpack.c.0.s8 %v974
  %v976 = vlaneseq
  %v977 = vshrl.u32 %v976, 7
  %v978 = vsub.s32 %v975, %v977
  %v979 = vrot.slane %v969, %v978
  %v981 = vunpack.c.l.s4 1966171168
  %v982 = vunpack.c.0.s8 %v981
  %v983 = vlaneseq
  %v984 = vshrl.u32 %v983, 7
  %v985 = vsub.s32 %v982, %v984
  %v986 = vrot.slane %v970, %v985
  %v988 = vunpack.c.l.s4 1966171168
  %v989 = vunpack.c.0.s8 %v988
  %v990 = vlaneseq
  %v991 = vshrl.u32 %v990, 7
  %v992 = vsub.s32 %v989, %v991
  %v993 = vrot.slane %v971, %v992
  %v995 = vunpack.c.l.s4 1966171168
  %v996 = vunpack.c.0.s8 %v995
  %v997 = vlaneseq
  %v998 = vshrl.u32 %v997, 7
  %v999 = vsub.s32 %v996, %v998
  %v1000 = vrot.slane %v972, %v999
  %v1001 = vcombine.low %v979, %v986
  %v1002 = vcombine.low %v993, %v1000
  %v1004 = vunpack.c.l.s4 1966171168
  %v1005 = vunpack.c.0.s8 %v1004
  %v1006 = vlaneseq
  %v1007 = vshrl.u32 %v1006, 7
  %v1008 = vsub.s32 %v1005, %v1007
  %v1009 = vrot.slane %v1001, %v1008
  %v1011 = vunpack.c.l.s4 1966171168
  %v1012 = vunpack.c.0.s8 %v1011
  %v1013 = vlaneseq
  %v1014 = vshrl.u32 %v1013, 7
  %v1015 = vsub.s32 %v1012, %v1014
  %v1016 = vrot.slane %v1002, %v1015
  %v1017 = vcombine.low %v1009, %v1016
  %1020 = vst [vmem:[%s5] sm:$0xff] %v968
  %1021 = vst [vmem:[%s5 + $0x8] sm:$0xff] %v1017
  // Predicated region
  $region22: #{_forward_impl.4} parent=0 // pred_check
    _
  $region23: #{_forward_impl.4} parent=0 // pred_check_branch
    %1023 = sbr.rel (0) target = $region25
  $region24: #{_forward_impl.4} parent=0 // pred_region
    _
  $region25: #{_forward_impl.4} parent=0 // pred_fallthru
    _
  // Predicated region
  $region26: #{_forward_impl.4} parent=0 // pred_check
    _
  $region27: #{_forward_impl.4} parent=0 // pred_check_branch
    %1025 = sbr.rel (0) target = $region29
  $region28: #{_forward_impl.4} parent=0 // pred_region
    _
  $region29: #{_forward_impl.4} parent=0 // pred_fallthru
    _

// kernel: _forward_impl.5
$region0: #{_forward_impl.5}
  #allocation0 [shape = 'u32[]', space=smem, size = 0x4, offset = 0x4, fixed_abs, tag = 'smem constant byte address 0x4 - core index']
  #allocation1 [shape = 'u32[144,128]{1,0:T(1,128)}', space=vmem, size = 0x12000, scoped, tag = 'internal scratch']
  %s0 = inlined_call_operand.vmem [shape: bf16[50,512], index: 0, kind: input, shape index: {}]
  %s1 = inlined_call_operand.vmem [shape: bf16[512,256], index: 1, kind: input, shape index: {}]
  %s2 = inlined_call_operand.vmem [shape: f32[1,64], index: 2, kind: input, shape index: {}]
  %s3 = inlined_call_operand.vmem [shape: f32[1,64], index: 3, kind: input, shape index: {}]
  %s4 = inlined_call_operand.vmem [shape: bf16[50,256], index: 4, kind: output, shape index: {}]
  %s5 = sld [smem:[#allocation0]]
  $region26: #{_forward_impl.5} parent=0
    _
  %s7 = ssub.s32 1, %s5
  %s8 = scalar_select 0, %s7, %s5
  // Predicated region
  $region2: #{_forward_impl.5} parent=0 // pred_check
    _
  $region3: #{_forward_impl.5} parent=0 // pred_check_branch
    %10 = sbr.rel (0) target = $region5
  $region4: #{_forward_impl.5} parent=0 // pred_region
    _
  $region5: #{_forward_impl.5} parent=0 // pred_fallthru
    _
  // Predicated region
  $region6: #{_forward_impl.5} parent=0 // pred_check
    _
  $region7: #{_forward_impl.5} parent=0 // pred_check_branch
    %12 = sbr.rel (0) target = $region9
  $region8: #{_forward_impl.5} parent=0 // pred_region
    _
  $region9: #{_forward_impl.5} parent=0 // pred_fallthru
    _
  // Predicated region
  $region10: #{_forward_impl.5} parent=0 // pred_check
    _
  $region11: #{_forward_impl.5} parent=0 // pred_check_branch
    %14 = sbr.rel (0) target = $region13
  $region12: #{_forward_impl.5} parent=0 // pred_region
    _
  $region13: #{_forward_impl.5} parent=0 // pred_fallthru
    _
  // Predicated region
  $region14: #{_forward_impl.5} parent=0 // pred_check
    _
  $region15: #{_forward_impl.5} parent=0 // pred_check_branch
    %16 = sbr.rel (0) target = $region17
  $region16: #{_forward_impl.5} parent=0 // pred_region
    _
  $region17: #{_forward_impl.5} parent=0 // pred_fallthru
    _
  %v17 = vld [vmem:[%s0] sm:$0xff]
  %v18 = vld [vmem:[%s0 + $0x8] sm:$0xff]
  %v19 = vld [vmem:[%s0 + $0x10] sm:$0xff]
  %v20 = vld [vmem:[%s0 + $0x18] sm:$0xff]
  %v21 = vld [vmem:[%s0 + $0x20] sm:$0xff]
  %v22 = vld [vmem:[%s0 + $0x28] sm:$0xff]
  %v23 = vld [vmem:[%s0 + $0x30] sm:$0xff]
  %v24 = vld [vmem:[%s0 + $0x38] sm:$0xff]
  %v25 = vld [vmem:[%s0 + $0x40] sm:$0xff]
  %v26 = vld [vmem:[%s0 + $0x48] sm:$0xff]
  %v27 = vld [vmem:[%s0 + $0x50] sm:$0xff]
  %v28 = vld [vmem:[%s0 + $0x58] sm:$0xff]
  %v29 = vld [vmem:[%s0 + $0x60] sm:$0x11]
  %v30 = vld [vmem:[%s0 + $0x68] sm:$0x11]
  %v31 = vld [vmem:[%s1] sm:$0xff]
  %v32 = vld [vmem:[%s1 + $0x8] sm:$0xff]
  %v33 = vld [vmem:[%s1 + $0x10] sm:$0xff]
  %v34 = vld [vmem:[%s1 + $0x18] sm:$0xff]
  %v35 = vld [vmem:[%s1 + $0x20] sm:$0xff]
  %v36 = vld [vmem:[%s1 + $0x28] sm:$0xff]
  %v37 = vld [vmem:[%s1 + $0x30] sm:$0xff]
  %v38 = vld [vmem:[%s1 + $0x38] sm:$0xff]
  %v39 = vld [vmem:[%s1 + $0x40] sm:$0xff]
  %v40 = vld [vmem:[%s1 + $0x48] sm:$0xff]
  %v41 = vld [vmem:[%s1 + $0x50] sm:$0xff]
  %v42 = vld [vmem:[%s1 + $0x58] sm:$0xff]
  %v43 = vld [vmem:[%s1 + $0x60] sm:$0xff]
  %v44 = vld [vmem:[%s1 + $0x68] sm:$0xff]
  %v45 = vld [vmem:[%s1 + $0x70] sm:$0xff]
  %v46 = vld [vmem:[%s1 + $0x78] sm:$0xff]
  %v47 = vld [vmem:[%s1 + $0x80] sm:$0xff]
  %v48 = vld [vmem:[%s1 + $0x88] sm:$0xff]
  %v49 = vld [vmem:[%s1 + $0x90] sm:$0xff]
  %v50 = vld [vmem:[%s1 + $0x98] sm:$0xff]
  %v51 = vld [vmem:[%s1 + $0xa0] sm:$0xff]
  %v52 = vld [vmem:[%s1 + $0xa8] sm:$0xff]
  %v53 = vld [vmem:[%s1 + $0xb0] sm:$0xff]
  %v54 = vld [vmem:[%s1 + $0xb8] sm:$0xff]
  %v55 = vld [vmem:[%s1 + $0xc0] sm:$0xff]
  %v56 = vld [vmem:[%s1 + $0xc8] sm:$0xff]
  %v57 = vld [vmem:[%s1 + $0xd0] sm:$0xff]
  %v58 = vld [vmem:[%s1 + $0xd8] sm:$0xff]
  %v59 = vld [vmem:[%s1 + $0xe0] sm:$0xff]
  %v60 = vld [vmem:[%s1 + $0xe8] sm:$0xff]
  %v61 = vld [vmem:[%s1 + $0xf0] sm:$0xff]
  %v62 = vld [vmem:[%s1 + $0xf8] sm:$0xff]
  %v63 = vld [vmem:[%s1 + $0x100] sm:$0xff]
  %v64 = vld [vmem:[%s1 + $0x108] sm:$0xff]
  %v65 = vld [vmem:[%s1 + $0x110] sm:$0xff]
  %v66 = vld [vmem:[%s1 + $0x118] sm:$0xff]
  %v67 = vld [vmem:[%s1 + $0x120] sm:$0xff]
  %v68 = vld [vmem:[%s1 + $0x128] sm:$0xff]
  %v69 = vld [vmem:[%s1 + $0x130] sm:$0xff]
  %v70 = vld [vmem:[%s1 + $0x138] sm:$0xff]
  %v71 = vld [vmem:[%s1 + $0x140] sm:$0xff]
  %v72 = vld [vmem:[%s1 + $0x148] sm:$0xff]
  %v73 = vld [vmem:[%s1 + $0x150] sm:$0xff]
  %v74 = vld [vmem:[%s1 + $0x158] sm:$0xff]
  %v75 = vld [vmem:[%s1 + $0x160] sm:$0xff]
  %v76 = vld [vmem:[%s1 + $0x168] sm:$0xff]
  %v77 = vld [vmem:[%s1 + $0x170] sm:$0xff]
  %v78 = vld [vmem:[%s1 + $0x178] sm:$0xff]
  %v79 = vld [vmem:[%s1 + $0x180] sm:$0xff]
  %v80 = vld [vmem:[%s1 + $0x188] sm:$0xff]
  %v81 = vld [vmem:[%s1 + $0x190] sm:$0xff]
  %v82 = vld [vmem:[%s1 + $0x198] sm:$0xff]
  %v83 = vld [vmem:[%s1 + $0x1a0] sm:$0xff]
  %v84 = vld [vmem:[%s1 + $0x1a8] sm:$0xff]
  %v85 = vld [vmem:[%s1 + $0x1b0] sm:$0xff]
  %v86 = vld [vmem:[%s1 + $0x1b8] sm:$0xff]
  %v87 = vld [vmem:[%s1 + $0x1c0] sm:$0xff]
  %v88 = vld [vmem:[%s1 + $0x1c8] sm:$0xff]
  %v89 = vld [vmem:[%s1 + $0x1d0] sm:$0xff]
  %v90 = vld [vmem:[%s1 + $0x1d8] sm:$0xff]
  %v91 = vld [vmem:[%s1 + $0x1e0] sm:$0xff]
  %v92 = vld [vmem:[%s1 + $0x1e8] sm:$0xff]
  %v93 = vld [vmem:[%s1 + $0x1f0] sm:$0xff]
  %v94 = vld [vmem:[%s1 + $0x1f8] sm:$0xff]
  %v109 = vunpack.c.l.b16 %v17
  %v110 = vunpack.c.h.b16 %v17
  %v111 = vunpack.c.l.b16 %v18
  %v112 = vunpack.c.h.b16 %v18
  %v113 = vunpack.c.l.b16 %v19
  %v114 = vunpack.c.h.b16 %v19
  %v115 = vunpack.c.l.b16 %v20
  %v116 = vunpack.c.h.b16 %v20
  %v117 = vunpack.c.l.b16 %v21
  %v118 = vunpack.c.h.b16 %v21
  %v119 = vunpack.c.l.b16 %v22
  %v120 = vunpack.c.h.b16 %v22
  %v121 = vunpack.c.l.b16 %v23
  %v122 = vunpack.c.h.b16 %v23
  %v123 = vunpack.c.l.b16 %v24
  %v124 = vunpack.c.h.b16 %v24
  %v125 = vunpack.c.l.b16 %v25
  %v126 = vunpack.c.h.b16 %v25
  %v127 = vunpack.c.l.b16 %v26
  %v128 = vunpack.c.h.b16 %v26
  %v129 = vunpack.c.l.b16 %v27
  %v130 = vunpack.c.h.b16 %v27
  %v131 = vunpack.c.l.b16 %v28
  %v132 = vunpack.c.h.b16 %v28
  %v133 = vunpack.c.l.b16 %v29
  %v134 = vunpack.c.h.b16 %v29
  %v135 = vunpack.c.l.b16 %v30
  %v136 = vunpack.c.h.b16 %v30
  %v137 = vpack.c.b16 %v113, %v109
  %v138 = vpack.c.b16 %v114, %v110
  %v139 = vpack.c.b16 %v115, %v111
  %v140 = vpack.c.b16 %v116, %v112
  %v141 = vpack.c.b16 %v121, %v117
  %v142 = vpack.c.b16 %v122, %v118
  %v143 = vpack.c.b16 %v123, %v119
  %v144 = vpack.c.b16 %v124, %v120
  %v145 = vpack.c.b16 %v129, %v125
  %v146 = vpack.c.b16 %v130, %v126
  %v147 = vpack.c.b16 %v131, %v127
  %v148 = vpack.c.b16 %v132, %v128
  %v149 = vpack.c.b16 %v133, %v133
  %v150 = vpack.c.b16 %v134, %v134
  %v151 = vpack.c.b16 %v135, %v135
  %v152 = vpack.c.b16 %v136, %v136
  %v233 = vunpack.c.l.b16 %v31
  %v234 = vunpack.c.h.b16 %v31
  %v235 = vunpack.c.l.b16 %v32
  %v236 = vunpack.c.h.b16 %v32
  %v237 = vunpack.c.l.b16 %v33
  %v238 = vunpack.c.h.b16 %v33
  %v239 = vunpack.c.l.b16 %v34
  %v240 = vunpack.c.h.b16 %v34
  %v241 = vunpack.c.l.b16 %v35
  %v242 = vunpack.c.h.b16 %v35
  %v243 = vunpack.c.l.b16 %v36
  %v244 = vunpack.c.h.b16 %v36
  %v245 = vunpack.c.l.b16 %v37
  %v246 = vunpack.c.h.b16 %v37
  %v247 = vunpack.c.l.b16 %v38
  %v248 = vunpack.c.h.b16 %v38
  %v249 = vunpack.c.l.b16 %v39
  %v250 = vunpack.c.h.b16 %v39
  %v251 = vunpack.c.l.b16 %v40
  %v252 = vunpack.c.h.b16 %v40
  %v253 = vunpack.c.l.b16 %v41
  %v254 = vunpack.c.h.b16 %v41
  %v255 = vunpack.c.l.b16 %v42
  %v256 = vunpack.c.h.b16 %v42
  %v257 = vunpack.c.l.b16 %v43
  %v258 = vunpack.c.h.b16 %v43
  %v259 = vunpack.c.l.b16 %v44
  %v260 = vunpack.c.h.b16 %v44
  %v261 = vunpack.c.l.b16 %v45
  %v262 = vunpack.c.h.b16 %v45
  %v263 = vunpack.c.l.b16 %v46
  %v264 = vunpack.c.h.b16 %v46
  %v265 = vunpack.c.l.b16 %v47
  %v266 = vunpack.c.h.b16 %v47
  %v267 = vunpack.c.l.b16 %v48
  %v268 = vunpack.c.h.b16 %v48
  %v269 = vunpack.c.l.b16 %v49
  %v270 = vunpack.c.h.b16 %v49
  %v271 = vunpack.c.l.b16 %v50
  %v272 = vunpack.c.h.b16 %v50
  %v273 = vunpack.c.l.b16 %v51
  %v274 = vunpack.c.h.b16 %v51
  %v275 = vunpack.c.l.b16 %v52
  %v276 = vunpack.c.h.b16 %v52
  %v277 = vunpack.c.l.b16 %v53
  %v278 = vunpack.c.h.b16 %v53
  %v279 = vunpack.c.l.b16 %v54
  %v280 = vunpack.c.h.b16 %v54
  %v281 = vunpack.c.l.b16 %v55
  %v282 = vunpack.c.h.b16 %v55
  %v283 = vunpack.c.l.b16 %v56
  %v284 = vunpack.c.h.b16 %v56
  %v285 = vunpack.c.l.b16 %v57
  %v286 = vunpack.c.h.b16 %v57
  %v287 = vunpack.c.l.b16 %v58
  %v288 = vunpack.c.h.b16 %v58
  %v289 = vunpack.c.l.b16 %v59
  %v290 = vunpack.c.h.b16 %v59
  %v291 = vunpack.c.l.b16 %v60
  %v292 = vunpack.c.h.b16 %v60
  %v293 = vunpack.c.l.b16 %v61
  %v294 = vunpack.c.h.b16 %v61
  %v295 = vunpack.c.l.b16 %v62
  %v296 = vunpack.c.h.b16 %v62
  %v297 = vunpack.c.l.b16 %v63
  %v298 = vunpack.c.h.b16 %v63
  %v299 = vunpack.c.l.b16 %v64
  %v300 = vunpack.c.h.b16 %v64
  %v301 = vunpack.c.l.b16 %v65
  %v302 = vunpack.c.h.b16 %v65
  %v303 = vunpack.c.l.b16 %v66
  %v304 = vunpack.c.h.b16 %v66
  %v305 = vunpack.c.l.b16 %v67
  %v306 = vunpack.c.h.b16 %v67
  %v307 = vunpack.c.l.b16 %v68
  %v308 = vunpack.c.h.b16 %v68
  %v309 = vunpack.c.l.b16 %v69
  %v310 = vunpack.c.h.b16 %v69
  %v311 = vunpack.c.l.b16 %v70
  %v312 = vunpack.c.h.b16 %v70
  %v313 = vunpack.c.l.b16 %v71
  %v314 = vunpack.c.h.b16 %v71
  %v315 = vunpack.c.l.b16 %v72
  %v316 = vunpack.c.h.b16 %v72
  %v317 = vunpack.c.l.b16 %v73
  %v318 = vunpack.c.h.b16 %v73
  %v319 = vunpack.c.l.b16 %v74
  %v320 = vunpack.c.h.b16 %v74
  %v321 = vunpack.c.l.b16 %v75
  %v322 = vunpack.c.h.b16 %v75
  %v323 = vunpack.c.l.b16 %v76
  %v324 = vunpack.c.h.b16 %v76
  %v325 = vunpack.c.l.b16 %v77
  %v326 = vunpack.c.h.b16 %v77
  %v327 = vunpack.c.l.b16 %v78
  %v328 = vunpack.c.h.b16 %v78
  %v329 = vunpack.c.l.b16 %v79
  %v330 = vunpack.c.h.b16 %v79
  %v331 = vunpack.c.l.b16 %v80
  %v332 = vunpack.c.h.b16 %v80
  %v333 = vunpack.c.l.b16 %v81
  %v334 = vunpack.c.h.b16 %v81
  %v335 = vunpack.c.l.b16 %v82
  %v336 = vunpack.c.h.b16 %v82
  %v337 = vunpack.c.l.b16 %v83
  %v338 = vunpack.c.h.b16 %v83
  %v339 = vunpack.c.l.b16 %v84
  %v340 = vunpack.c.h.b16 %v84
  %v341 = vunpack.c.l.b16 %v85
  %v342 = vunpack.c.h.b16 %v85
  %v343 = vunpack.c.l.b16 %v86
  %v344 = vunpack.c.h.b16 %v86
  %v345 = vunpack.c.l.b16 %v87
  %v346 = vunpack.c.h.b16 %v87
  %v347 = vunpack.c.l.b16 %v88
  %v348 = vunpack.c.h.b16 %v88
  %v349 = vunpack.c.l.b16 %v89
  %v350 = vunpack.c.h.b16 %v89
  %v351 = vunpack.c.l.b16 %v90
  %v352 = vunpack.c.h.b16 %v90
  %v353 = vunpack.c.l.b16 %v91
  %v354 = vunpack.c.h.b16 %v91
  %v355 = vunpack.c.l.b16 %v92
  %v356 = vunpack.c.h.b16 %v92
  %v357 = vunpack.c.l.b16 %v93
  %v358 = vunpack.c.h.b16 %v93
  %v359 = vunpack.c.l.b16 %v94
  %v360 = vunpack.c.h.b16 %v94
  %v361 = vpack.c.b16 %v235, %v233
  %v362 = vpack.c.b16 %v236, %v234
  %v363 = vpack.c.b16 %v239, %v237
  %v364 = vpack.c.b16 %v240, %v238
  %v365 = vpack.c.b16 %v243, %v241
  %v366 = vpack.c.b16 %v244, %v242
  %v367 = vpack.c.b16 %v247, %v245
  %v368 = vpack.c.b16 %v248, %v246
  %v369 = vpack.c.b16 %v251, %v249
  %v370 = vpack.c.b16 %v252, %v250
  %v371 = vpack.c.b16 %v255, %v253
  %v372 = vpack.c.b16 %v256, %v254
  %v373 = vpack.c.b16 %v259, %v257
  %v374 = vpack.c.b16 %v260, %v258
  %v375 = vpack.c.b16 %v263, %v261
  %v376 = vpack.c.b16 %v264, %v262
  %v377 = vpack.c.b16 %v267, %v265
  %v378 = vpack.c.b16 %v268, %v266
  %v379 = vpack.c.b16 %v271, %v269
  %v380 = vpack.c.b16 %v272, %v270
  %v381 = vpack.c.b16 %v275, %v273
  %v382 = vpack.c.b16 %v276, %v274
  %v383 = vpack.c.b16 %v279, %v277
  %v384 = vpack.c.b16 %v280, %v278
  %v385 = vpack.c.b16 %v283, %v281
  %v386 = vpack.c.b16 %v284, %v282
  %v387 = vpack.c.b16 %v287, %v285
  %v388 = vpack.c.b16 %v288, %v286
  %v389 = vpack.c.b16 %v291, %v289
  %v390 = vpack.c.b16 %v292, %v290
  %v391 = vpack.c.b16 %v295, %v293
  %v392 = vpack.c.b16 %v296, %v294
  %v393 = vpack.c.b16 %v299, %v297
  %v394 = vpack.c.b16 %v300, %v298
  %v395 = vpack.c.b16 %v303, %v301
  %v396 = vpack.c.b16 %v304, %v302
  %v397 = vpack.c.b16 %v307, %v305
  %v398 = vpack.c.b16 %v308, %v306
  %v399 = vpack.c.b16 %v311, %v309
  %v400 = vpack.c.b16 %v312, %v310
  %v401 = vpack.c.b16 %v315, %v313
  %v402 = vpack.c.b16 %v316, %v314
  %v403 = vpack.c.b16 %v319, %v317
  %v404 = vpack.c.b16 %v320, %v318
  %v405 = vpack.c.b16 %v323, %v321
  %v406 = vpack.c.b16 %v324, %v322
  %v407 = vpack.c.b16 %v327, %v325
  %v408 = vpack.c.b16 %v328, %v326
  %v409 = vpack.c.b16 %v331, %v329
  %v410 = vpack.c.b16 %v332, %v330
  %v411 = vpack.c.b16 %v335, %v333
  %v412 = vpack.c.b16 %v336, %v334
  %v413 = vpack.c.b16 %v339, %v337
  %v414 = vpack.c.b16 %v340, %v338
  %v415 = vpack.c.b16 %v343, %v341
  %v416 = vpack.c.b16 %v344, %v342
  %v417 = vpack.c.b16 %v347, %v345
  %v418 = vpack.c.b16 %v348, %v346
  %v419 = vpack.c.b16 %v351, %v349
  %v420 = vpack.c.b16 %v352, %v350
  %v421 = vpack.c.b16 %v355, %v353
  %v422 = vpack.c.b16 %v356, %v354
  %v423 = vpack.c.b16 %v359, %v357
  %v424 = vpack.c.b16 %v360, %v358
  %489 = vmatprep.subr.bf16.mxu0 %v362
  %490 = vmatpush1.bf16.msra.mxu0 %v361
  %491 = vmatprep.subr.bf16.mxu0 %v364
  %492 = vmatpush1.bf16.msra.mxu0 %v363
  %493 = vmatprep.subr.bf16.mxu0 %v366
  %494 = vmatpush1.bf16.msra.mxu0 %v365
  %495 = vmatprep.subr.bf16.mxu0 %v368
  %496 = vmatpush1.bf16.msra.mxu0 %v367
  %497 = vmatprep.subr.bf16.mxu0 %v370
  %498 = vmatpush1.bf16.msra.mxu0 %v369
  %499 = vmatprep.subr.bf16.mxu0 %v372
  %500 = vmatpush1.bf16.msra.mxu0 %v371
  %501 = vmatprep.subr.bf16.mxu0 %v374
  %502 = vmatpush1.bf16.msra.mxu0 %v373
  %503 = vmatprep.subr.bf16.mxu0 %v376
  %504 = vmatpush1.bf16.msra.mxu0 %v375
  %505 = vmatprep.subr.bf16.mxu0 %v378
  %506 = vmatpush1.bf16.msra.mxu0 %v377
  %507 = vmatprep.subr.bf16.mxu0 %v380
  %508 = vmatpush1.bf16.msra.mxu0 %v379
  %509 = vmatprep.subr.bf16.mxu0 %v382
  %510 = vmatpush1.bf16.msra.mxu0 %v381
  %511 = vmatprep.subr.bf16.mxu0 %v384
  %512 = vmatpush1.bf16.msra.mxu0 %v383
  %513 = vmatprep.subr.bf16.mxu0 %v386
  %514 = vmatpush1.bf16.msra.mxu0 %v385
  %515 = vmatprep.subr.bf16.mxu0 %v388
  %516 = vmatpush1.bf16.msra.mxu0 %v387
  %517 = vmatprep.subr.bf16.mxu0 %v390
  %518 = vmatpush1.bf16.msra.mxu0 %v389
  %519 = vmatprep.subr.bf16.mxu0 %v392
  %520 = vmatpush1.bf16.msra.mxu0 %v391
  %521 = vmatprep.mubr.bf16.mxu0 %v138
  %522 = vmatmul.mubr.bf16.gmra.mrb[0].mxu0 %v137
  %v523 = vpop.f32.mrb[0].mxu0
  %v524 = vadd.f32 0.0, %v523
  %v525 = vpop.f32.mrb[0].mxu0
  %v526 = vadd.f32 0.0, %v525
  %v527 = vpop.f32.mrb[0].mxu0
  %v528 = vadd.f32 0.0, %v527
  %v529 = vpop.f32.mrb[0].mxu0
  %v530 = vadd.f32 0.0, %v529
  %531 = vmatprep.mubr.bf16.mxu0 %v142
  %532 = vmatmul.mubr.bf16.gmra.mrb[0].mxu0 %v141
  %v533 = vpop.f32.mrb[0].mxu0
  %v534 = vadd.f32 0.0, %v533
  %v535 = vpop.f32.mrb[0].mxu0
  %v536 = vadd.f32 0.0, %v535
  %v537 = vpop.f32.mrb[0].mxu0
  %v538 = vadd.f32 0.0, %v537
  %v539 = vpop.f32.mrb[0].mxu0
  %v540 = vadd.f32 0.0, %v539
  %541 = vmatprep.mubr.bf16.mxu0 %v146
  %542 = vmatmul.mubr.bf16.gmra.mrb[0].mxu0 %v145
  %v543 = vpop.f32.mrb[0].mxu0
  %v544 = vadd.f32 0.0, %v543
  %v545 = vpop.f32.mrb[0].mxu0
  %v546 = vadd.f32 0.0, %v545
  %v547 = vpop.f32.mrb[0].mxu0
  %v548 = vadd.f32 0.0, %v547
  %v549 = vpop.f32.mrb[0].mxu0
  %v550 = vadd.f32 0.0, %v549
  %551 = vmatprep.mubr.bf16.mxu0 %v150
  %552 = vmatmul.mubr.bf16.gmra.mrb[0].mxu0 %v149
  %v553 = vpop.f32.mrb[0].mxu0
  %v554 = vadd.f32 0.0, %v553
  %v555 = vpop.f32.mrb[0].mxu0
  %v556 = vadd.f32 0.0, %v555
  %v557 = vpop.f32.mrb[0].mxu0
  %v558 = vpop.f32.mrb[0].mxu0
  %559 = vdwg.mxu0
  %560 = vmatprep.subr.bf16.mxu0 %v394
  %561 = vmatpush1.bf16.msra.mxu0 %v393
  %562 = vmatprep.subr.bf16.mxu0 %v396
  %563 = vmatpush1.bf16.msra.mxu0 %v395
  %564 = vmatprep.subr.bf16.mxu0 %v398
  %565 = vmatpush1.bf16.msra.mxu0 %v397
  %566 = vmatprep.subr.bf16.mxu0 %v400
  %567 = vmatpush1.bf16.msra.mxu0 %v399
  %568 = vmatprep.subr.bf16.mxu0 %v402
  %569 = vmatpush1.bf16.msra.mxu0 %v401
  %570 = vmatprep.subr.bf16.mxu0 %v404
  %571 = vmatpush1.bf16.msra.mxu0 %v403
  %572 = vmatprep.subr.bf16.mxu0 %v406
  %573 = vmatpush1.bf16.msra.mxu0 %v405
  %574 = vmatprep.subr.bf16.mxu0 %v408
  %575 = vmatpush1.bf16.msra.mxu0 %v407
  %576 = vmatprep.subr.bf16.mxu0 %v410
  %577 = vmatpush1.bf16.msra.mxu0 %v409
  %578 = vmatprep.subr.bf16.mxu0 %v412
  %579 = vmatpush1.bf16.msra.mxu0 %v411
  %580 = vmatprep.subr.bf16.mxu0 %v414
  %581 = vmatpush1.bf16.msra.mxu0 %v413
  %582 = vmatprep.subr.bf16.mxu0 %v416
  %583 = vmatpush1.bf16.msra.mxu0 %v415
  %584 = vmatprep.subr.bf16.mxu0 %v418
  %585 = vmatpush1.bf16.msra.mxu0 %v417
  %586 = vmatprep.subr.bf16.mxu0 %v420
  %587 = vmatpush1.bf16.msra.mxu0 %v419
  %588 = vmatprep.subr.bf16.mxu0 %v422
  %589 = vmatpush1.bf16.msra.mxu0 %v421
  %590 = vmatprep.subr.bf16.mxu0 %v424
  %591 = vmatpush1.bf16.msra.mxu0 %v423
  %592 = vmatprep.mubr.bf16.mxu0 %v140
  %593 = vmatmul.mubr.bf16.gmra.mrb[0].mxu0 %v139
  %v594 = vpop.f32.mrb[0].mxu0
  %v595 = vadd.f32 %v524, %v594
  %v596 = vpop.f32.mrb[0].mxu0
  %v597 = vadd.f32 %v526, %v596
  %v598 = vpop.f32.mrb[0].mxu0
  %v599 = vadd.f32 %v528, %v598
  %v600 = vpop.f32.mrb[0].mxu0
  %v601 = vadd.f32 %v530, %v600
  %602 = vmatprep.mubr.bf16.mxu0 %v144
  %603 = vmatmul.mubr.bf16.gmra.mrb[0].mxu0 %v143
  %v604 = vpop.f32.mrb[0].mxu0
  %v605 = vadd.f32 %v534, %v604
  %v606 = vpop.f32.mrb[0].mxu0
  %v607 = vadd.f32 %v536, %v606
  %v608 = vpop.f32.mrb[0].mxu0
  %v609 = vadd.f32 %v538, %v608
  %v610 = vpop.f32.mrb[0].mxu0
  %v611 = vadd.f32 %v540, %v610
  %612 = vmatprep.mubr.bf16.mxu0 %v148
  %613 = vmatmul.mubr.bf16.gmra.mrb[0].mxu0 %v147
  %v614 = vpop.f32.mrb[0].mxu0
  %v615 = vadd.f32 %v544, %v614
  %v616 = vpop.f32.mrb[0].mxu0
  %v617 = vadd.f32 %v546, %v616
  %v618 = vpop.f32.mrb[0].mxu0
  %v619 = vadd.f32 %v548, %v618
  %v620 = vpop.f32.mrb[0].mxu0
  %v621 = vadd.f32 %v550, %v620
  %622 = vmatprep.mubr.bf16.mxu0 %v152
  %623 = vmatmul.mubr.bf16.gmra.mrb[0].mxu0 %v151
  %v624 = vpop.f32.mrb[0].mxu0
  %v625 = vadd.f32 %v554, %v624
  %v626 = vpop.f32.mrb[0].mxu0
  %v627 = vadd.f32 %v556, %v626
  %v628 = vpop.f32.mrb[0].mxu0
  %v629 = vpop.f32.mrb[0].mxu0
  %630 = vdwg.mxu0
  %v631 = vlaneseq
  %v632 = vshrl.u32 %v631, 7
  %v633 = vadd.s32 %v632, 8
  %v634 = vadd.s32 %v632, 16
  %v635 = vadd.s32 %v632, 24
  %v636 = vadd.s32 %v632, 32
  %v637 = vadd.s32 %v632, 40
  %v638 = vadd.s32 %v632, 48
  %v639 = vcvt.s32.f32 %v632
  %v640 = vcvt.s32.f32 %v633
  %v641 = vcvt.s32.f32 %v634
  %v642 = vcvt.s32.f32 %v635
  %v643 = vcvt.s32.f32 %v636
  %v644 = vcvt.s32.f32 %v637
  %v645 = vcvt.s32.f32 %v638
  %v646 = vadd.f32 %v639, 0.5
  %v647 = vadd.f32 %v640, 0.5
  %v648 = vadd.f32 %v641, 0.5
  %v649 = vadd.f32 %v642, 0.5
  %v650 = vadd.f32 %v643, 0.5
  %v651 = vadd.f32 %v644, 0.5
  %v652 = vadd.f32 %v645, 0.5
  %v653 = vmul.f32 %v646, 0.2
  %v654 = vmul.f32 %v647, 0.2
  %v655 = vmul.f32 %v648, 0.2
  %v656 = vmul.f32 %v649, 0.2
  %v657 = vmul.f32 %v650, 0.2
  %v658 = vmul.f32 %v651, 0.2
  %v659 = vmul.f32 %v652, 0.2
  %v660 = vcvt.f32.s32.to.zero.pseudo %v653
  %v661 = vcvt.f32.s32.to.zero.pseudo %v654
  %v662 = vcvt.f32.s32.to.zero.pseudo %v655
  %v663 = vcvt.f32.s32.to.zero.pseudo %v656
  %v664 = vcvt.f32.s32.to.zero.pseudo %v657
  %v665 = vcvt.f32.s32.to.zero.pseudo %v658
  %v666 = vcvt.f32.s32.to.zero.pseudo %v659
  %v667 = vcvt.s32.f32 %v660
  %v668 = vcvt.s32.f32 %v661
  %v669 = vcvt.s32.f32 %v662
  %v670 = vcvt.s32.f32 %v663
  %v671 = vcvt.s32.f32 %v664
  %v672 = vcvt.s32.f32 %v665
  %v673 = vcvt.s32.f32 %v666
  %v674 = vmul.f32 %v667, 5.0
  %v675 = vmul.f32 %v668, 5.0
  %v676 = vmul.f32 %v669, 5.0
  %v677 = vmul.f32 %v670, 5.0
  %v678 = vmul.f32 %v671, 5.0
  %v679 = vmul.f32 %v672, 5.0
  %v680 = vmul.f32 %v673, 5.0
  %v681 = vsub.f32 %v639, %v674
  %v682 = vsub.f32 %v640, %v675
  %v683 = vsub.f32 %v641, %v676
  %v684 = vsub.f32 %v642, %v677
  %v685 = vsub.f32 %v643, %v678
  %v686 = vsub.f32 %v644, %v679
  %v687 = vsub.f32 %v645, %v680
  %v688 = vadd.f32 %v667, 0.5
  %v689 = vadd.f32 %v668, 0.5
  %v690 = vadd.f32 %v669, 0.5
  %v691 = vadd.f32 %v670, 0.5
  %v692 = vadd.f32 %v671, 0.5
  %v693 = vadd.f32 %v672, 0.5
  %v694 = vadd.f32 %v673, 0.5
  %v695 = vmul.f32 %v688, 0.2
  %v696 = vmul.f32 %v689, 0.2
  %v697 = vmul.f32 %v690, 0.2
  %v698 = vmul.f32 %v691, 0.2
  %v699 = vmul.f32 %v692, 0.2
  %v700 = vmul.f32 %v693, 0.2
  %v701 = vmul.f32 %v694, 0.2
  %v702 = vcvt.f32.s32.to.zero.pseudo %v695
  %v703 = vcvt.f32.s32.to.zero.pseudo %v696
  %v704 = vcvt.f32.s32.to.zero.pseudo %v697
  %v705 = vcvt.f32.s32.to.zero.pseudo %v698
  %v706 = vcvt.f32.s32.to.zero.pseudo %v699
  %v707 = vcvt.f32.s32.to.zero.pseudo %v700
  %v708 = vcvt.f32.s32.to.zero.pseudo %v701
  %v709 = vcvt.s32.f32 %v702
  %v710 = vcvt.s32.f32 %v703
  %v711 = vcvt.s32.f32 %v704
  %v712 = vcvt.s32.f32 %v705
  %v713 = vcvt.s32.f32 %v706
  %v714 = vcvt.s32.f32 %v707
  %v715 = vcvt.s32.f32 %v708
  %v716 = vmul.f32 %v709, 5.0
  %v717 = vmul.f32 %v710, 5.0
  %v718 = vmul.f32 %v711, 5.0
  %v719 = vmul.f32 %v712, 5.0
  %v720 = vmul.f32 %v713, 5.0
  %v721 = vmul.f32 %v714, 5.0
  %v722 = vmul.f32 %v715, 5.0
  %v723 = vsub.f32 %v667, %v716
  %v724 = vsub.f32 %v668, %v717
  %v725 = vsub.f32 %v669, %v718
  %v726 = vsub.f32 %v670, %v719
  %v727 = vsub.f32 %v671, %v720
  %v728 = vsub.f32 %v672, %v721
  %v729 = vsub.f32 %v673, %v722
  %vm730 = vcmp.lt.f32.partialorder %v723, 0.5
  %vm731 = vcmp.lt.f32.partialorder %v724, 0.5
  %vm732 = vcmp.lt.f32.partialorder %v725, 0.5
  %vm733 = vcmp.lt.f32.partialorder %v726, 0.5
  %vm734 = vcmp.lt.f32.partialorder %v727, 0.5
  %vm735 = vcmp.lt.f32.partialorder %v728, 0.5
  %vm736 = vcmp.lt.f32.partialorder %v729, 0.5
  %v737 = vsel %vm730, 1, 0
  %v738 = vsel %vm731, 1, 0
  %v739 = vsel %vm732, 1, 0
  %v740 = vsel %vm733, 1, 0
  %v741 = vsel %vm734, 1, 0
  %v742 = vsel %vm735, 1, 0
  %v743 = vsel %vm736, 1, 0
  %v744 = vcvt.s32.f32 %v737
  %v745 = vcvt.s32.f32 %v738
  %v746 = vcvt.s32.f32 %v739
  %v747 = vcvt.s32.f32 %v740
  %v748 = vcvt.s32.f32 %v741
  %v749 = vcvt.s32.f32 %v742
  %v750 = vcvt.s32.f32 %v743
  %vm751 = vcmp.gt.f32.partialorder %v723, 3.5
  %vm752 = vcmp.gt.f32.partialorder %v724, 3.5
  %vm753 = vcmp.gt.f32.partialorder %v725, 3.5
  %vm754 = vcmp.gt.f32.partialorder %v726, 3.5
  %vm755 = vcmp.gt.f32.partialorder %v727, 3.5
  %vm756 = vcmp.gt.f32.partialorder %v728, 3.5
  %vm757 = vcmp.gt.f32.partialorder %v729, 3.5
  %v758 = vsel %vm751, 1, 0
  %v759 = vsel %vm752, 1, 0
  %v760 = vsel %vm753, 1, 0
  %v761 = vsel %vm754, 1, 0
  %v762 = vsel %vm755, 1, 0
  %v763 = vsel %vm756, 1, 0
  %v764 = vsel %vm757, 1, 0
  %v765 = vcvt.s32.f32 %v758
  %v766 = vcvt.s32.f32 %v759
  %v767 = vcvt.s32.f32 %v760
  %v768 = vcvt.s32.f32 %v761
  %v769 = vcvt.s32.f32 %v762
  %v770 = vcvt.s32.f32 %v763
  %v771 = vcvt.s32.f32 %v764
  %vm772 = vcmp.lt.f32.partialorder %v681, 0.5
  %vm773 = vcmp.lt.f32.partialorder %v682, 0.5
  %vm774 = vcmp.lt.f32.partialorder %v683, 0.5
  %vm775 = vcmp.lt.f32.partialorder %v684, 0.5
  %vm776 = vcmp.lt.f32.partialorder %v685, 0.5
  %vm777 = vcmp.lt.f32.partialorder %v686, 0.5
  %vm778 = vcmp.lt.f32.partialorder %v687, 0.5
  %v779 = vsel %vm772, 1, 0
  %v780 = vsel %vm773, 1, 0
  %v781 = vsel %vm774, 1, 0
  %v782 = vsel %vm775, 1, 0
  %v783 = vsel %vm776, 1, 0
  %v784 = vsel %vm777, 1, 0
  %v785 = vsel %vm778, 1, 0
  %v786 = vcvt.s32.f32 %v779
  %v787 = vcvt.s32.f32 %v780
  %v788 = vcvt.s32.f32 %v781
  %v789 = vcvt.s32.f32 %v782
  %v790 = vcvt.s32.f32 %v783
  %v791 = vcvt.s32.f32 %v784
  %v792 = vcvt.s32.f32 %v785
  %vm793 = vcmp.gt.f32.partialorder %v681, 3.5
  %vm794 = vcmp.gt.f32.partialorder %v682, 3.5
  %vm795 = vcmp.gt.f32.partialorder %v683, 3.5
  %vm796 = vcmp.gt.f32.partialorder %v684, 3.5
  %vm797 = vcmp.gt.f32.partialorder %v685, 3.5
  %vm798 = vcmp.gt.f32.partialorder %v686, 3.5
  %vm799 = vcmp.gt.f32.partialorder %v687, 3.5
  %v800 = vsel %vm793, 1, 0
  %v801 = vsel %vm794, 1, 0
  %v802 = vsel %vm795, 1, 0
  %v803 = vsel %vm796, 1, 0
  %v804 = vsel %vm797, 1, 0
  %v805 = vsel %vm798, 1, 0
  %v806 = vsel %vm799, 1, 0
  %v807 = vcvt.s32.f32 %v800
  %v808 = vcvt.s32.f32 %v801
  %v809 = vcvt.s32.f32 %v802
  %v810 = vcvt.s32.f32 %v803
  %v811 = vcvt.s32.f32 %v804
  %v812 = vcvt.s32.f32 %v805
  %v813 = vcvt.s32.f32 %v806
  %v814 = vlaneseq
  %v815 = vand.u32 %v814, 127
  %v816 = vadd.s32 %v815, 128
  %vm817 = vcmp.ge.s32.totalorder %v815, 128
  %vm818 = vcmp.ge.s32.totalorder %v816, 128
  %v819 = vsel %vm817, 1, 0
  %v820 = vsel %vm818, 1, 0
  %v821 = vcvt.s32.f32 %v819
  %v822 = vcvt.s32.f32 %v820
  %v823 = vand.u32 %v815, 64
  %v824 = vand.u32 %v816, 64
  %vm825 = vcmp.gt.s32.totalorder %v823, 0
  %vm826 = vcmp.gt.s32.totalorder %v824, 0
  %v827 = vsel %vm825, 1, 0
  %v828 = vsel %vm826, 1, 0
  %v829 = vcvt.s32.f32 %v827
  %v830 = vcvt.s32.f32 %v828
  %v831 = vsub.f32 1.0, %v821
  %v832 = vsub.f32 1.0, %v822
  %v833 = vsub.f32 1.0, %v829
  %v834 = vsub.f32 1.0, %v830
  %v835 = vmul.f32 %v744, %v831
  %v836 = vmul.f32 %v744, %v832
  %v837 = vmul.f32 %v745, %v831
  %v838 = vmul.f32 %v745, %v832
  %v839 = vmul.f32 %v746, %v831
  %v840 = vmul.f32 %v746, %v832
  %v841 = vmul.f32 %v747, %v831
  %v842 = vmul.f32 %v747, %v832
  %v843 = vmul.f32 %v748, %v831
  %v844 = vmul.f32 %v748, %v832
  %v845 = vmul.f32 %v749, %v831
  %v846 = vmul.f32 %v749, %v832
  %v847 = vmul.f32 %v750, %v831
  %v848 = vmul.f32 %v750, %v832
  %v849 = vmul.f32 %v765, %v821
  %v850 = vmul.f32 %v765, %v822
  %v851 = vmul.f32 %v766, %v821
  %v852 = vmul.f32 %v766, %v822
  %v853 = vmul.f32 %v767, %v821
  %v854 = vmul.f32 %v767, %v822
  %v855 = vmul.f32 %v768, %v821
  %v856 = vmul.f32 %v768, %v822
  %v857 = vmul.f32 %v769, %v821
  %v858 = vmul.f32 %v769, %v822
  %v859 = vmul.f32 %v770, %v821
  %v860 = vmul.f32 %v770, %v822
  %v861 = vmul.f32 %v771, %v821
  %v862 = vmul.f32 %v771, %v822
  %v863 = vadd.f32 %v835, %v849
  %v864 = vadd.f32 %v836, %v850
  %v865 = vadd.f32 %v837, %v851
  %v866 = vadd.f32 %v838, %v852
  %v867 = vadd.f32 %v839, %v853
  %v868 = vadd.f32 %v840, %v854
  %v869 = vadd.f32 %v841, %v855
  %v870 = vadd.f32 %v842, %v856
  %v871 = vadd.f32 %v843, %v857
  %v872 = vadd.f32 %v844, %v858
  %v873 = vadd.f32 %v845, %v859
  %v874 = vadd.f32 %v846, %v860
  %v875 = vadd.f32 %v847, %v861
  %v876 = vadd.f32 %v848, %v862
  %v877 = vmul.f32 %v786, %v833
  %v878 = vmul.f32 %v786, %v834
  %v879 = vmul.f32 %v787, %v833
  %v880 = vmul.f32 %v787, %v834
  %v881 = vmul.f32 %v788, %v833
  %v882 = vmul.f32 %v788, %v834
  %v883 = vmul.f32 %v789, %v833
  %v884 = vmul.f32 %v789, %v834
  %v885 = vmul.f32 %v790, %v833
  %v886 = vmul.f32 %v790, %v834
  %v887 = vmul.f32 %v791, %v833
  %v888 = vmul.f32 %v791, %v834
  %v889 = vmul.f32 %v792, %v833
  %v890 = vmul.f32 %v792, %v834
  %v891 = vadd.f32 %v863, %v877
  %v892 = vadd.f32 %v864, %v878
  %v893 = vadd.f32 %v865, %v879
  %v894 = vadd.f32 %v866, %v880
  %v895 = vadd.f32 %v867, %v881
  %v896 = vadd.f32 %v868, %v882
  %v897 = vadd.f32 %v869, %v883
  %v898 = vadd.f32 %v870, %v884
  %v899 = vadd.f32 %v871, %v885
  %v900 = vadd.f32 %v872, %v886
  %v901 = vadd.f32 %v873, %v887
  %v902 = vadd.f32 %v874, %v888
  %v903 = vadd.f32 %v875, %v889
  %v904 = vadd.f32 %v876, %v890
  %v905 = vmul.f32 %v807, %v829
  %v906 = vmul.f32 %v807, %v830
  %v907 = vmul.f32 %v808, %v829
  %v908 = vmul.f32 %v808, %v830
  %v909 = vmul.f32 %v809, %v829
  %v910 = vmul.f32 %v809, %v830
  %v911 = vmul.f32 %v810, %v829
  %v912 = vmul.f32 %v810, %v830
  %v913 = vmul.f32 %v811, %v829
  %v914 = vmul.f32 %v811, %v830
  %v915 = vmul.f32 %v812, %v829
  %v916 = vmul.f32 %v812, %v830
  %v917 = vmul.f32 %v813, %v829
  %v918 = vmul.f32 %v813, %v830
  %v919 = vadd.f32 %v891, %v905
  %v920 = vadd.f32 %v892, %v906
  %v921 = vadd.f32 %v893, %v907
  %v922 = vadd.f32 %v894, %v908
  %v923 = vadd.f32 %v895, %v909
  %v924 = vadd.f32 %v896, %v910
  %v925 = vadd.f32 %v897, %v911
  %v926 = vadd.f32 %v898, %v912
  %v927 = vadd.f32 %v899, %v913
  %v928 = vadd.f32 %v900, %v914
  %v929 = vadd.f32 %v901, %v915
  %v930 = vadd.f32 %v902, %v916
  %v931 = vadd.f32 %v903, %v917
  %v932 = vadd.f32 %v904, %v918
  %vm933 = vcmp.lt.f32.partialorder %v919, 0.5
  %vm934 = vcmp.lt.f32.partialorder %v920, 0.5
  %vm935 = vcmp.lt.f32.partialorder %v921, 0.5
  %vm936 = vcmp.lt.f32.partialorder %v922, 0.5
  %vm937 = vcmp.lt.f32.partialorder %v923, 0.5
  %vm938 = vcmp.lt.f32.partialorder %v924, 0.5
  %vm939 = vcmp.lt.f32.partialorder %v925, 0.5
  %vm940 = vcmp.lt.f32.partialorder %v926, 0.5
  %vm941 = vcmp.lt.f32.partialorder %v927, 0.5
  %vm942 = vcmp.lt.f32.partialorder %v928, 0.5
  %vm943 = vcmp.lt.f32.partialorder %v929, 0.5
  %vm944 = vcmp.lt.f32.partialorder %v930, 0.5
  %vm945 = vcmp.lt.f32.partialorder %v931, 0.5
  %vm946 = vcmp.lt.f32.partialorder %v932, 0.5
  %v947 = vsel %vm933, 1, 0
  %v948 = vsel %vm934, 1, 0
  %v949 = vsel %vm935, 1, 0
  %v950 = vsel %vm936, 1, 0
  %v951 = vsel %vm937, 1, 0
  %v952 = vsel %vm938, 1, 0
  %v953 = vsel %vm939, 1, 0
  %v954 = vsel %vm940, 1, 0
  %v955 = vsel %vm941, 1, 0
  %v956 = vsel %vm942, 1, 0
  %v957 = vsel %vm943, 1, 0
  %v958 = vsel %vm944, 1, 0
  %v959 = vsel %vm945, 1, 0
  %v960 = vsel %vm946, 1, 0
  %v961 = vcvt.s32.f32 %v947
  %v962 = vcvt.s32.f32 %v948
  %v963 = vcvt.s32.f32 %v949
  %v964 = vcvt.s32.f32 %v950
  %v965 = vcvt.s32.f32 %v951
  %v966 = vcvt.s32.f32 %v952
  %v967 = vcvt.s32.f32 %v953
  %v968 = vcvt.s32.f32 %v954
  %v969 = vcvt.s32.f32 %v955
  %v970 = vcvt.s32.f32 %v956
  %v971 = vcvt.s32.f32 %v957
  %v972 = vcvt.s32.f32 %v958
  %v973 = vcvt.s32.f32 %v959
  %v974 = vcvt.s32.f32 %v960
  %v975 = vmul.f32 %v595, %v961
  %v976 = vmul.f32 %v597, %v962
  %v977 = vmul.f32 %v599, %v963
  %v978 = vmul.f32 %v601, %v964
  %v979 = vmul.f32 %v605, %v965
  %v980 = vmul.f32 %v607, %v966
  %v981 = vmul.f32 %v609, %v967
  %v982 = vmul.f32 %v611, %v968
  %v983 = vmul.f32 %v615, %v969
  %v984 = vmul.f32 %v617, %v970
  %v985 = vmul.f32 %v619, %v971
  %v986 = vmul.f32 %v621, %v972
  %v987 = vmul.f32 %v625, %v973
  %v988 = vmul.f32 %v627, %v974
  %v989 = vadd.f32 %v975, %v977
  %v990 = vadd.f32 %v989, %v979
  %v991 = vadd.f32 %v990, %v981
  %v992 = vadd.f32 %v991, %v983
  %v993 = vadd.f32 %v992, %v985
  %vm994 = vcmask 1041408
  %v995 = vsel %vm994, %v987, 0.0
  %v996 = vadd.f32 %v993, %v995
  %v997 = vrot.slane %v996, 4
  %v998 = vadd.f32 %v996, %v997
  %v999 = vrot.slane %v998, 2
  %v1000 = vadd.f32 %v998, %v999
  %v1001 = vrot.slane %v1000, 1
  %v1002 = vadd.f32 %v1000, %v1001
  %v1003 = vadd.f32 %v976, %v978
  %v1004 = vadd.f32 %v1003, %v980
  %v1005 = vadd.f32 %v1004, %v982
  %v1006 = vadd.f32 %v1005, %v984
  %v1007 = vadd.f32 %v1006, %v986
  %v1008 = vsel %vm994, %v988, 0.0
  %v1009 = vadd.f32 %v1007, %v1008
  %v1010 = vrot.slane %v1009, 4
  %v1011 = vadd.f32 %v1009, %v1010
  %v1012 = vrot.slane %v1011, 2
  %v1013 = vadd.f32 %v1011, %v1012
  %v1014 = vrot.slane %v1013, 1
  %v1015 = vadd.f32 %v1013, %v1014
  %v1016 = vmul.f32 %v975, %v595
  %v1017 = vmul.f32 %v976, %v597
  %v1018 = vmul.f32 %v977, %v599
  %v1019 = vmul.f32 %v978, %v601
  %v1020 = vmul.f32 %v979, %v605
  %v1021 = vmul.f32 %v980, %v607
  %v1022 = vmul.f32 %v981, %v609
  %v1023 = vmul.f32 %v982, %v611
  %v1024 = vmul.f32 %v983, %v615
  %v1025 = vmul.f32 %v984, %v617
  %v1026 = vmul.f32 %v985, %v619
  %v1027 = vmul.f32 %v986, %v621
  %v1028 = vmul.f32 %v987, %v625
  %v1029 = vmul.f32 %v988, %v627
  %v1030 = vadd.f32 %v1016, %v1018
  %v1031 = vadd.f32 %v1030, %v1020
  %v1032 = vadd.f32 %v1031, %v1022
  %v1033 = vadd.f32 %v1032, %v1024
  %v1034 = vadd.f32 %v1033, %v1026
  %v1035 = vsel %vm994, %v1028, 0.0
  %v1036 = vadd.f32 %v1034, %v1035
  %v1037 = vrot.slane %v1036, 4
  %v1038 = vadd.f32 %v1036, %v1037
  %v1039 = vrot.slane %v1038, 2
  %v1040 = vadd.f32 %v1038, %v1039
  %v1041 = vrot.slane %v1040, 1
  %v1042 = vadd.f32 %v1040, %v1041
  %v1043 = vadd.f32 %v1017, %v1019
  %v1044 = vadd.f32 %v1043, %v1021
  %v1045 = vadd.f32 %v1044, %v1023
  %v1046 = vadd.f32 %v1045, %v1025
  %v1047 = vadd.f32 %v1046, %v1027
  %v1048 = vsel %vm994, %v1029, 0.0
  %v1049 = vadd.f32 %v1047, %v1048
  %v1050 = vrot.slane %v1049, 4
  %v1051 = vadd.f32 %v1049, %v1050
  %v1052 = vrot.slane %v1051, 2
  %v1053 = vadd.f32 %v1051, %v1052
  %v1054 = vrot.slane %v1053, 1
  %v1055 = vadd.f32 %v1053, %v1054
  %1057 = vrot.lane.b32.xlu0 %v1002, 64
  %v1058 = vpop.permute.xlu0 %1057
  %v1060 = vadd.f32 %v1002, %v1058
  %v1061 = vadd.f32 %v1060, %v1015
  %1063 = vrot.lane.b32.xlu0 %v1015, 64
  %v1064 = vpop.permute.xlu0 %1063
  %v1066 = vadd.f32 %v1061, %v1064
  %v1067 = vmul.f32 %v1066, 0.0078125
  %1069 = vrot.lane.b32.xlu0 %v1042, 64
  %v1070 = vpop.permute.xlu0 %1069
  %v1072 = vadd.f32 %v1042, %v1070
  %v1073 = vadd.f32 %v1072, %v1055
  %1075 = vrot.lane.b32.xlu0 %v1055, 64
  %v1076 = vpop.permute.xlu0 %1075
  %v1078 = vadd.f32 %v1073, %v1076
  %v1079 = vmul.f32 %v1078, 0.0078125
  %v1080 = vmul.f32 %v1067, %v1067
  %v1081 = vsub.f32 %v1079, %v1080
  %v1082 = vmax.f32 %v1081, 0.0
  %v1083 = vld [vmem:[%s2] sm:$0x1]
  %v1084 = vadd.f32 %v1082, 1e-05
  %v1085 = vrsqrt.pop %v1084
  %v1086 = vmul.f32 %v1083, %v1085
  %v1087 = vld [vmem:[%s3] sm:$0x1]
  %v1088 = vmul.f32 %v1067, %v1086
  %v1089 = vsub.f32 %v1087, %v1088
  %v1091 = vlaneseq
  %v1092 = vshrl.u32 %v1091, 7
  %v1093 = vsub.s32 0, %v1092
  %v1094 = vrot.slane %v1086, %v1093
  %1095 = vrot.lane.b32.xlu0 %v1094, 64
  %v1096 = vpop.permute.xlu0 %1095
  %vm1098 = vcmask 523264
  %v1099 = vsel %vm1098, %v1086, %v1096
  %v1100 = vlaneseq
  %v1101 = vshrl.u32 %v1100, 7
  %v1102 = vsub.s32 0, %v1101
  %v1103 = vrot.slane %v1099, %v1102
  %v1104 = vmul.f32 %v595, %v1103
  %v1105 = vmul.f32 %v597, %v1103
  %v1106 = vmul.f32 %v599, %v1103
  %v1107 = vmul.f32 %v601, %v1103
  %v1108 = vmul.f32 %v605, %v1103
  %v1109 = vmul.f32 %v607, %v1103
  %v1110 = vmul.f32 %v609, %v1103
  %v1111 = vmul.f32 %v611, %v1103
  %v1112 = vmul.f32 %v615, %v1103
  %v1113 = vmul.f32 %v617, %v1103
  %v1114 = vmul.f32 %v619, %v1103
  %v1115 = vmul.f32 %v621, %v1103
  %v1116 = vmul.f32 %v625, %v1103
  %v1117 = vmul.f32 %v627, %v1103
  %v1119 = vlaneseq
  %v1120 = vshrl.u32 %v1119, 7
  %v1121 = vsub.s32 0, %v1120
  %v1122 = vrot.slane %v1089, %v1121
  %1123 = vrot.lane.b32.xlu0 %v1122, 64
  %v1124 = vpop.permute.xlu0 %1123
  %v1126 = vsel %vm1098, %v1089, %v1124
  %v1127 = vlaneseq
  %v1128 = vshrl.u32 %v1127, 7
  %v1129 = vsub.s32 0, %v1128
  %v1130 = vrot.slane %v1126, %v1129
  %v1131 = vadd.f32 %v1104, %v1130
  %v1132 = vadd.f32 %v1105, %v1130
  %v1133 = vadd.f32 %v1106, %v1130
  %v1134 = vadd.f32 %v1107, %v1130
  %v1135 = vadd.f32 %v1108, %v1130
  %v1136 = vadd.f32 %v1109, %v1130
  %v1137 = vadd.f32 %v1110, %v1130
  %v1138 = vadd.f32 %v1111, %v1130
  %v1139 = vadd.f32 %v1112, %v1130
  %v1140 = vadd.f32 %v1113, %v1130
  %v1141 = vadd.f32 %v1114, %v1130
  %v1142 = vadd.f32 %v1115, %v1130
  %v1143 = vadd.f32 %v1116, %v1130
  %v1144 = vadd.f32 %v1117, %v1130
  %v1145 = vmax.f32 %v1131, 0.0
  %v1146 = vmax.f32 %v1132, 0.0
  %v1147 = vmax.f32 %v1133, 0.0
  %v1148 = vmax.f32 %v1134, 0.0
  %v1149 = vmax.f32 %v1135, 0.0
  %v1150 = vmax.f32 %v1136, 0.0
  %v1151 = vmax.f32 %v1137, 0.0
  %v1152 = vmax.f32 %v1138, 0.0
  %v1153 = vmax.f32 %v1139, 0.0
  %v1154 = vmax.f32 %v1140, 0.0
  %v1155 = vmax.f32 %v1141, 0.0
  %v1156 = vmax.f32 %v1142, 0.0
  %v1157 = vmax.f32 %v1143, 0.0
  %v1158 = vmax.f32 %v1144, 0.0
  %v1159 = vpack.c.bf16 %v1147, %v1145
  %v1160 = vpack.c.bf16 %v1148, %v1146
  %v1161 = vpack.c.bf16 %v1151, %v1149
  %v1162 = vpack.c.bf16 %v1152, %v1150
  %v1163 = vpack.c.bf16 %v1155, %v1153
  %v1164 = vpack.c.bf16 %v1156, %v1154
  %v1165 = vpack.c.bf16 %v1157, %v1157
  %v1166 = vpack.c.bf16 %v1158, %v1158
  %v1175 = vunpack.c.l.b16 %v1159
  %v1176 = vunpack.c.l.b16 %v1160
  %v1177 = vunpack.c.h.b16 %v1159
  %v1178 = vunpack.c.h.b16 %v1160
  %v1179 = vunpack.c.l.b16 %v1161
  %v1180 = vunpack.c.l.b16 %v1162
  %v1181 = vunpack.c.h.b16 %v1161
  %v1182 = vunpack.c.h.b16 %v1162
  %v1183 = vunpack.c.l.b16 %v1163
  %v1184 = vunpack.c.l.b16 %v1164
  %v1185 = vunpack.c.h.b16 %v1163
  %v1186 = vunpack.c.h.b16 %v1164
  %v1187 = vunpack.c.l.b16 %v1165
  %v1188 = vunpack.c.l.b16 %v1166
  %v1189 = vpack.c.b16 %v1176, %v1175
  %v1190 = vpack.c.b16 %v1178, %v1177
  %v1191 = vpack.c.b16 %v1180, %v1179
  %v1192 = vpack.c.b16 %v1182, %v1181
  %v1193 = vpack.c.b16 %v1184, %v1183
  %v1194 = vpack.c.b16 %v1186, %v1185
  %v1195 = vpack.c.b16 %v1188, %v1187
  %1203 = vst [vmem:[%s4] sm:$0xff] %v1189
  %1204 = vst [vmem:[%s4 + $0x8] sm:$0xff] %v1190
  %1205 = vst [vmem:[%s4 + $0x10] sm:$0xff] %v1191
  %1206 = vst [vmem:[%s4 + $0x18] sm:$0xff] %v1192
  %1207 = vst [vmem:[%s4 + $0x20] sm:$0xff] %v1193
  %1208 = vst [vmem:[%s4 + $0x28] sm:$0xff] %v1194
  %1209 = vst [vmem:[%s4 + $0x30] sm:$0x11] %v1195
  // Predicated region
  $region18: #{_forward_impl.5} parent=0 // pred_check
    _
  $region19: #{_forward_impl.5} parent=0 // pred_check_branch
    %1211 = sbr.rel (0) target = $region21
  $region20: #{_forward_impl.5} parent=0 // pred_region
    _
  $region21: #{_forward_impl.5} parent=0 // pred_fallthru
    _
  // Predicated region
  $region22: #{_forward_impl.5} parent=0 // pred_check
    _
  $region23: #{_forward_impl.5} parent=0 // pred_check_branch
    %1213 = sbr.rel (0) target = $region25
  $region24: #{_forward_impl.5} parent=0 // pred_region
    _
  $region25: #{_forward_impl.5} parent=0 // pred_fallthru
    _

// kernel: _forward_impl.6
$region0: #{_forward_impl.6}
  #allocation0 [shape = 'u32[]', space=smem, size = 0x4, offset = 0x4, fixed_abs, tag = 'smem constant byte address 0x4 - core index']
  #allocation1 [shape = 'u32[144,128]{1,0:T(1,128)}', space=vmem, size = 0x12000, scoped, tag = 'internal scratch']
  %s0 = inlined_call_operand.vmem [shape: bf16[162,256], index: 0, kind: input, shape index: {}]
  %s1 = inlined_call_operand.vmem [shape: bf16[256,128], index: 1, kind: input, shape index: {}]
  %s2 = inlined_call_operand.vmem [shape: f32[1,32], index: 2, kind: input, shape index: {}]
  %s3 = inlined_call_operand.vmem [shape: f32[1,32], index: 3, kind: input, shape index: {}]
  %s4 = inlined_call_operand.vmem [shape: bf16[162,128], index: 4, kind: output, shape index: {}]
  %s5 = sld [smem:[#allocation0]]
  $region26: #{_forward_impl.6} parent=0
    _
  %s7 = ssub.s32 1, %s5
  %s8 = scalar_select 0, %s7, %s5
  // Predicated region
  $region2: #{_forward_impl.6} parent=0 // pred_check
    _
  $region3: #{_forward_impl.6} parent=0 // pred_check_branch
    %10 = sbr.rel (0) target = $region5
  $region4: #{_forward_impl.6} parent=0 // pred_region
    _
  $region5: #{_forward_impl.6} parent=0 // pred_fallthru
    _
  // Predicated region
  $region6: #{_forward_impl.6} parent=0 // pred_check
    _
  $region7: #{_forward_impl.6} parent=0 // pred_check_branch
    %12 = sbr.rel (0) target = $region9
  $region8: #{_forward_impl.6} parent=0 // pred_region
    _
  $region9: #{_forward_impl.6} parent=0 // pred_fallthru
    _
  // Predicated region
  $region10: #{_forward_impl.6} parent=0 // pred_check
    _
  $region11: #{_forward_impl.6} parent=0 // pred_check_branch
    %14 = sbr.rel (0) target = $region13
  $region12: #{_forward_impl.6} parent=0 // pred_region
    _
  $region13: #{_forward_impl.6} parent=0 // pred_fallthru
    _
  // Predicated region
  $region14: #{_forward_impl.6} parent=0 // pred_check
    _
  $region15: #{_forward_impl.6} parent=0 // pred_check_branch
    %16 = sbr.rel (0) target = $region17
  $region16: #{_forward_impl.6} parent=0 // pred_region
    _
  $region17: #{_forward_impl.6} parent=0 // pred_fallthru
    _
  %v18 = vld [vmem:[%s0] sm:$0xff]
  %v19 = vld [vmem:[%s0 + $0x8] sm:$0xff]
  %v20 = vld [vmem:[%s0 + $0x10] sm:$0xff]
  %v21 = vld [vmem:[%s0 + $0x18] sm:$0xff]
  %v22 = vld [vmem:[%s0 + $0x20] sm:$0xff]
  %v23 = vld [vmem:[%s0 + $0x28] sm:$0xff]
  %v24 = vld [vmem:[%s0 + $0x30] sm:$0xff]
  %v25 = vld [vmem:[%s0 + $0x38] sm:$0xff]
  %v26 = vld [vmem:[%s0 + $0x40] sm:$0xff]
  %v27 = vld [vmem:[%s0 + $0x48] sm:$0xff]
  %v28 = vld [vmem:[%s0 + $0x50] sm:$0xff]
  %v29 = vld [vmem:[%s0 + $0x58] sm:$0xff]
  %v30 = vld [vmem:[%s0 + $0x60] sm:$0xff]
  %v31 = vld [vmem:[%s0 + $0x68] sm:$0xff]
  %v32 = vld [vmem:[%s0 + $0x70] sm:$0xff]
  %v33 = vld [vmem:[%s0 + $0x78] sm:$0xff]
  %v34 = vld [vmem:[%s0 + $0x80] sm:$0xff]
  %v35 = vld [vmem:[%s0 + $0x88] sm:$0xff]
  %v36 = vld [vmem:[%s0 + $0x90] sm:$0xff]
  %v37 = vld [vmem:[%s0 + $0x98] sm:$0xff]
  %v38 = vld [vmem:[%s0 + $0xa0] sm:$0x11]
  %v39 = vld [vmem:[%s1] sm:$0xf]
  %v40 = vld [vmem:[%s1 + $0x4] sm:$0xf]
  %v41 = vld [vmem:[%s1 + $0x8] sm:$0xf]
  %v42 = vld [vmem:[%s1 + $0xc] sm:$0xf]
  %v43 = vld [vmem:[%s1 + $0x10] sm:$0xf]
  %v44 = vld [vmem:[%s1 + $0x14] sm:$0xf]
  %v45 = vld [vmem:[%s1 + $0x18] sm:$0xf]
  %v46 = vld [vmem:[%s1 + $0x1c] sm:$0xf]
  %v47 = vld [vmem:[%s1 + $0x20] sm:$0xf]
  %v48 = vld [vmem:[%s1 + $0x24] sm:$0xf]
  %v49 = vld [vmem:[%s1 + $0x28] sm:$0xf]
  %v50 = vld [vmem:[%s1 + $0x2c] sm:$0xf]
  %v51 = vld [vmem:[%s1 + $0x30] sm:$0xf]
  %v52 = vld [vmem:[%s1 + $0x34] sm:$0xf]
  %v53 = vld [vmem:[%s1 + $0x38] sm:$0xf]
  %v54 = vld [vmem:[%s1 + $0x3c] sm:$0xf]
  %v55 = vld [vmem:[%s1 + $0x40] sm:$0xf]
  %v56 = vld [vmem:[%s1 + $0x44] sm:$0xf]
  %v57 = vld [vmem:[%s1 + $0x48] sm:$0xf]
  %v58 = vld [vmem:[%s1 + $0x4c] sm:$0xf]
  %v59 = vld [vmem:[%s1 + $0x50] sm:$0xf]
  %v60 = vld [vmem:[%s1 + $0x54] sm:$0xf]
  %v61 = vld [vmem:[%s1 + $0x58] sm:$0xf]
  %v62 = vld [vmem:[%s1 + $0x5c] sm:$0xf]
  %v63 = vld [vmem:[%s1 + $0x60] sm:$0xf]
  %v64 = vld [vmem:[%s1 + $0x64] sm:$0xf]
  %v65 = vld [vmem:[%s1 + $0x68] sm:$0xf]
  %v66 = vld [vmem:[%s1 + $0x6c] sm:$0xf]
  %v67 = vld [vmem:[%s1 + $0x70] sm:$0xf]
  %v68 = vld [vmem:[%s1 + $0x74] sm:$0xf]
  %v69 = vld [vmem:[%s1 + $0x78] sm:$0xf]
  %v70 = vld [vmem:[%s1 + $0x7c] sm:$0xf]
  %v92 = vunpack.c.l.b16 %v18
  %v93 = vunpack.c.h.b16 %v18
  %v94 = vunpack.c.l.b16 %v19
  %v95 = vunpack.c.h.b16 %v19
  %v96 = vunpack.c.l.b16 %v20
  %v97 = vunpack.c.h.b16 %v20
  %v98 = vunpack.c.l.b16 %v21
  %v99 = vunpack.c.h.b16 %v21
  %v100 = vunpack.c.l.b16 %v22
  %v101 = vunpack.c.h.b16 %v22
  %v102 = vunpack.c.l.b16 %v23
  %v103 = vunpack.c.h.b16 %v23
  %v104 = vunpack.c.l.b16 %v24
  %v105 = vunpack.c.h.b16 %v24
  %v106 = vunpack.c.l.b16 %v25
  %v107 = vunpack.c.h.b16 %v25
  %v108 = vunpack.c.l.b16 %v26
  %v109 = vunpack.c.h.b16 %v26
  %v110 = vunpack.c.l.b16 %v27
  %v111 = vunpack.c.h.b16 %v27
  %v112 = vunpack.c.l.b16 %v28
  %v113 = vunpack.c.h.b16 %v28
  %v114 = vunpack.c.l.b16 %v29
  %v115 = vunpack.c.h.b16 %v29
  %v116 = vunpack.c.l.b16 %v30
  %v117 = vunpack.c.h.b16 %v30
  %v118 = vunpack.c.l.b16 %v31
  %v119 = vunpack.c.h.b16 %v31
  %v120 = vunpack.c.l.b16 %v32
  %v121 = vunpack.c.h.b16 %v32
  %v122 = vunpack.c.l.b16 %v33
  %v123 = vunpack.c.h.b16 %v33
  %v124 = vunpack.c.l.b16 %v34
  %v125 = vunpack.c.h.b16 %v34
  %v126 = vunpack.c.l.b16 %v35
  %v127 = vunpack.c.h.b16 %v35
  %v128 = vunpack.c.l.b16 %v36
  %v129 = vunpack.c.h.b16 %v36
  %v130 = vunpack.c.l.b16 %v37
  %v131 = vunpack.c.h.b16 %v37
  %v132 = vunpack.c.l.b16 %v38
  %v133 = vunpack.c.h.b16 %v38
  %v134 = vpack.c.b16 %v94, %v92
  %v135 = vpack.c.b16 %v95, %v93
  %v136 = vpack.c.b16 %v98, %v96
  %v137 = vpack.c.b16 %v99, %v97
  %v138 = vpack.c.b16 %v102, %v100
  %v139 = vpack.c.b16 %v103, %v101
  %v140 = vpack.c.b16 %v106, %v104
  %v141 = vpack.c.b16 %v107, %v105
  %v142 = vpack.c.b16 %v110, %v108
  %v143 = vpack.c.b16 %v111, %v109
  %v144 = vpack.c.b16 %v114, %v112
  %v145 = vpack.c.b16 %v115, %v113
  %v146 = vpack.c.b16 %v118, %v116
  %v147 = vpack.c.b16 %v119, %v117
  %v148 = vpack.c.b16 %v122, %v120
  %v149 = vpack.c.b16 %v123, %v121
  %v150 = vpack.c.b16 %v126, %v124
  %v151 = vpack.c.b16 %v127, %v125
  %v152 = vpack.c.b16 %v130, %v128
  %v153 = vpack.c.b16 %v131, %v129
  %v154 = vpack.c.b16 %v132, %v132
  %v155 = vpack.c.b16 %v133, %v133
  %v210 = vunpack.c.l.b16 %v39
  %v211 = vunpack.c.l.b16 %v40
  %v212 = vunpack.c.l.b16 %v41
  %v213 = vunpack.c.l.b16 %v42
  %v214 = vunpack.c.l.b16 %v43
  %v215 = vunpack.c.l.b16 %v44
  %v216 = vunpack.c.l.b16 %v45
  %v217 = vunpack.c.l.b16 %v46
  %v218 = vunpack.c.l.b16 %v47
  %v219 = vunpack.c.l.b16 %v48
  %v220 = vunpack.c.l.b16 %v49
  %v221 = vunpack.c.l.b16 %v50
  %v222 = vunpack.c.l.b16 %v51
  %v223 = vunpack.c.l.b16 %v52
  %v224 = vunpack.c.l.b16 %v53
  %v225 = vunpack.c.l.b16 %v54
  %v226 = vunpack.c.l.b16 %v55
  %v227 = vunpack.c.l.b16 %v56
  %v228 = vunpack.c.l.b16 %v57
  %v229 = vunpack.c.l.b16 %v58
  %v230 = vunpack.c.l.b16 %v59
  %v231 = vunpack.c.l.b16 %v60
  %v232 = vunpack.c.l.b16 %v61
  %v233 = vunpack.c.l.b16 %v62
  %v234 = vunpack.c.l.b16 %v63
  %v235 = vunpack.c.l.b16 %v64
  %v236 = vunpack.c.l.b16 %v65
  %v237 = vunpack.c.l.b16 %v66
  %v238 = vunpack.c.l.b16 %v67
  %v239 = vunpack.c.l.b16 %v68
  %v240 = vunpack.c.l.b16 %v69
  %v241 = vunpack.c.l.b16 %v70
  %v242 = vpack.c.b16 %v211, %v210
  %v243 = vpack.c.b16 %v213, %v212
  %v244 = vpack.c.b16 %v215, %v214
  %v245 = vpack.c.b16 %v217, %v216
  %v246 = vpack.c.b16 %v219, %v218
  %v247 = vpack.c.b16 %v221, %v220
  %v248 = vpack.c.b16 %v223, %v222
  %v249 = vpack.c.b16 %v225, %v224
  %v250 = vpack.c.b16 %v227, %v226
  %v251 = vpack.c.b16 %v229, %v228
  %v252 = vpack.c.b16 %v231, %v230
  %v253 = vpack.c.b16 %v233, %v232
  %v254 = vpack.c.b16 %v235, %v234
  %v255 = vpack.c.b16 %v237, %v236
  %v256 = vpack.c.b16 %v239, %v238
  %v257 = vpack.c.b16 %v241, %v240
  %274 = vmatprep.subr.bf16.mxu0 0
  %275 = vmatpush1.bf16.msra.mxu0 %v242
  %276 = vmatprep.subr.bf16.mxu0 0
  %277 = vmatpush1.bf16.msra.mxu0 %v243
  %278 = vmatprep.subr.bf16.mxu0 0
  %279 = vmatpush1.bf16.msra.mxu0 %v244
  %280 = vmatprep.subr.bf16.mxu0 0
  %281 = vmatpush1.bf16.msra.mxu0 %v245
  %282 = vmatprep.subr.bf16.mxu0 0
  %283 = vmatpush1.bf16.msra.mxu0 %v246
  %284 = vmatprep.subr.bf16.mxu0 0
  %285 = vmatpush1.bf16.msra.mxu0 %v247
  %286 = vmatprep.subr.bf16.mxu0 0
  %287 = vmatpush1.bf16.msra.mxu0 %v248
  %288 = vmatprep.subr.bf16.mxu0 0
  %289 = vmatpush1.bf16.msra.mxu0 %v249
  %290 = vmatprep.subr.bf16.mxu0 0
  %291 = vmatpush1.bf16.msra.mxu0 %v250
  %292 = vmatprep.subr.bf16.mxu0 0
  %293 = vmatpush1.bf16.msra.mxu0 %v251
  %294 = vmatprep.subr.bf16.mxu0 0
  %295 = vmatpush1.bf16.msra.mxu0 %v252
  %296 = vmatprep.subr.bf16.mxu0 0
  %297 = vmatpush1.bf16.msra.mxu0 %v253
  %298 = vmatprep.subr.bf16.mxu0 0
  %299 = vmatpush1.bf16.msra.mxu0 %v254
  %300 = vmatprep.subr.bf16.mxu0 0
  %301 = vmatpush1.bf16.msra.mxu0 %v255
  %302 = vmatprep.subr.bf16.mxu0 0
  %303 = vmatpush1.bf16.msra.mxu0 %v256
  %304 = vmatprep.subr.bf16.mxu0 0
  %305 = vmatpush1.bf16.msra.mxu0 %v257
  %306 = vmatprep.mubr.bf16.mxu0 %v135
  %307 = vmatmul.mubr.bf16.gmra.mrb[0].mxu0 %v134
  %v308 = vpop.f32.mrb[0].mxu0
  %v309 = vadd.f32 0.0, %v308
  %v310 = vpop.f32.mrb[0].mxu0
  %v311 = vpop.f32.mrb[0].mxu0
  %v312 = vadd.f32 0.0, %v311
  %v313 = vpop.f32.mrb[0].mxu0
  %314 = vmatprep.mubr.bf16.mxu0 %v137
  %315 = vmatmul.mubr.bf16.gmra.mrb[0].mxu0 %v136
  %v316 = vpop.f32.mrb[0].mxu0
  %v317 = vadd.f32 0.0, %v316
  %v318 = vpop.f32.mrb[0].mxu0
  %v319 = vpop.f32.mrb[0].mxu0
  %v320 = vadd.f32 0.0, %v319
  %v321 = vpop.f32.mrb[0].mxu0
  %322 = vmatprep.mubr.bf16.mxu0 %v139
  %323 = vmatmul.mubr.bf16.gmra.mrb[0].mxu0 %v138
  %v324 = vpop.f32.mrb[0].mxu0
  %v325 = vadd.f32 0.0, %v324
  %v326 = vpop.f32.mrb[0].mxu0
  %v327 = vpop.f32.mrb[0].mxu0
  %v328 = vadd.f32 0.0, %v327
  %v329 = vpop.f32.mrb[0].mxu0
  %330 = vmatprep.mubr.bf16.mxu0 %v141
  %331 = vmatmul.mubr.bf16.gmra.mrb[0].mxu0 %v140
  %v332 = vpop.f32.mrb[0].mxu0
  %v333 = vadd.f32 0.0, %v332
  %v334 = vpop.f32.mrb[0].mxu0
  %v335 = vpop.f32.mrb[0].mxu0
  %v336 = vadd.f32 0.0, %v335
  %v337 = vpop.f32.mrb[0].mxu0
  %338 = vmatprep.mubr.bf16.mxu0 %v143
  %339 = vmatmul.mubr.bf16.gmra.mrb[0].mxu0 %v142
  %v340 = vpop.f32.mrb[0].mxu0
  %v341 = vadd.f32 0.0, %v340
  %v342 = vpop.f32.mrb[0].mxu0
  %v343 = vpop.f32.mrb[0].mxu0
  %v344 = vadd.f32 0.0, %v343
  %v345 = vpop.f32.mrb[0].mxu0
  %346 = vmatprep.mubr.bf16.mxu0 %v145
  %347 = vmatmul.mubr.bf16.gmra.mrb[0].mxu0 %v144
  %v348 = vpop.f32.mrb[0].mxu0
  %v349 = vadd.f32 0.0, %v348
  %v350 = vpop.f32.mrb[0].mxu0
  %v351 = vpop.f32.mrb[0].mxu0
  %v352 = vadd.f32 0.0, %v351
  %v353 = vpop.f32.mrb[0].mxu0
  %354 = vmatprep.mubr.bf16.mxu0 %v147
  %355 = vmatmul.mubr.bf16.gmra.mrb[0].mxu0 %v146
  %v356 = vpop.f32.mrb[0].mxu0
  %v357 = vadd.f32 0.0, %v356
  %v358 = vpop.f32.mrb[0].mxu0
  %v359 = vpop.f32.mrb[0].mxu0
  %v360 = vadd.f32 0.0, %v359
  %v361 = vpop.f32.mrb[0].mxu0
  %362 = vmatprep.mubr.bf16.mxu0 %v149
  %363 = vmatmul.mubr.bf16.gmra.mrb[0].mxu0 %v148
  %v364 = vpop.f32.mrb[0].mxu0
  %v365 = vadd.f32 0.0, %v364
  %v366 = vpop.f32.mrb[0].mxu0
  %v367 = vpop.f32.mrb[0].mxu0
  %v368 = vadd.f32 0.0, %v367
  %v369 = vpop.f32.mrb[0].mxu0
  %370 = vmatprep.mubr.bf16.mxu0 %v151
  %371 = vmatmul.mubr.bf16.gmra.mrb[0].mxu0 %v150
  %v372 = vpop.f32.mrb[0].mxu0
  %v373 = vadd.f32 0.0, %v372
  %v374 = vpop.f32.mrb[0].mxu0
  %v375 = vpop.f32.mrb[0].mxu0
  %v376 = vadd.f32 0.0, %v375
  %v377 = vpop.f32.mrb[0].mxu0
  %378 = vmatprep.mubr.bf16.mxu0 %v153
  %379 = vmatmul.mubr.bf16.gmra.mrb[0].mxu0 %v152
  %v380 = vpop.f32.mrb[0].mxu0
  %v381 = vadd.f32 0.0, %v380
  %v382 = vpop.f32.mrb[0].mxu0
  %v383 = vpop.f32.mrb[0].mxu0
  %v384 = vadd.f32 0.0, %v383
  %v385 = vpop.f32.mrb[0].mxu0
  %386 = vmatprep.mubr.bf16.mxu0 %v155
  %387 = vmatmul.mubr.bf16.gmra.mrb[0].mxu0 %v154
  %v388 = vpop.f32.mrb[0].mxu0
  %v389 = vadd.f32 0.0, %v388
  %v390 = vpop.f32.mrb[0].mxu0
  %v391 = vpop.f32.mrb[0].mxu0
  %v392 = vpop.f32.mrb[0].mxu0
  %393 = vdwg.mxu0
  %v394 = vlaneseq
  %v395 = vshrl.u32 %v394, 7
  %v396 = vadd.s32 %v395, 8
  %v397 = vadd.s32 %v395, 16
  %v398 = vadd.s32 %v395, 24
  %v399 = vadd.s32 %v395, 32
  %v400 = vadd.s32 %v395, 40
  %v401 = vadd.s32 %v395, 48
  %v402 = vadd.s32 %v395, 56
  %v403 = vadd.s32 %v395, 64
  %v404 = vadd.s32 %v395, 72
  %v405 = vadd.s32 %v395, 80
  %v406 = vadd.s32 %v395, 88
  %v407 = vadd.s32 %v395, 96
  %v408 = vadd.s32 %v395, 104
  %v409 = vadd.s32 %v395, 112
  %v410 = vadd.s32 %v395, 120
  %v411 = vadd.s32 %v395, 128
  %v412 = vadd.s32 %v395, 136
  %v413 = vadd.s32 %v395, 144
  %v414 = vadd.s32 %v395, 152
  %v415 = vadd.s32 %v395, 160
  %v416 = vcvt.s32.f32 %v395
  %v417 = vcvt.s32.f32 %v396
  %v418 = vcvt.s32.f32 %v397
  %v419 = vcvt.s32.f32 %v398
  %v420 = vcvt.s32.f32 %v399
  %v421 = vcvt.s32.f32 %v400
  %v422 = vcvt.s32.f32 %v401
  %v423 = vcvt.s32.f32 %v402
  %v424 = vcvt.s32.f32 %v403
  %v425 = vcvt.s32.f32 %v404
  %v426 = vcvt.s32.f32 %v405
  %v427 = vcvt.s32.f32 %v406
  %v428 = vcvt.s32.f32 %v407
  %v429 = vcvt.s32.f32 %v408
  %v430 = vcvt.s32.f32 %v409
  %v431 = vcvt.s32.f32 %v410
  %v432 = vcvt.s32.f32 %v411
  %v433 = vcvt.s32.f32 %v412
  %v434 = vcvt.s32.f32 %v413
  %v435 = vcvt.s32.f32 %v414
  %v436 = vcvt.s32.f32 %v415
  %v437 = vadd.f32 %v416, 0.5
  %v438 = vadd.f32 %v417, 0.5
  %v439 = vadd.f32 %v418, 0.5
  %v440 = vadd.f32 %v419, 0.5
  %v441 = vadd.f32 %v420, 0.5
  %v442 = vadd.f32 %v421, 0.5
  %v443 = vadd.f32 %v422, 0.5
  %v444 = vadd.f32 %v423, 0.5
  %v445 = vadd.f32 %v424, 0.5
  %v446 = vadd.f32 %v425, 0.5
  %v447 = vadd.f32 %v426, 0.5
  %v448 = vadd.f32 %v427, 0.5
  %v449 = vadd.f32 %v428, 0.5
  %v450 = vadd.f32 %v429, 0.5
  %v451 = vadd.f32 %v430, 0.5
  %v452 = vadd.f32 %v431, 0.5
  %v453 = vadd.f32 %v432, 0.5
  %v454 = vadd.f32 %v433, 0.5
  %v455 = vadd.f32 %v434, 0.5
  %v456 = vadd.f32 %v435, 0.5
  %v457 = vadd.f32 %v436, 0.5
  %v458 = vmul.f32 %v437, 0.11111111
  %v459 = vmul.f32 %v438, 0.11111111
  %v460 = vmul.f32 %v439, 0.11111111
  %v461 = vmul.f32 %v440, 0.11111111
  %v462 = vmul.f32 %v441, 0.11111111
  %v463 = vmul.f32 %v442, 0.11111111
  %v464 = vmul.f32 %v443, 0.11111111
  %v465 = vmul.f32 %v444, 0.11111111
  %v466 = vmul.f32 %v445, 0.11111111
  %v467 = vmul.f32 %v446, 0.11111111
  %v468 = vmul.f32 %v447, 0.11111111
  %v469 = vmul.f32 %v448, 0.11111111
  %v470 = vmul.f32 %v449, 0.11111111
  %v471 = vmul.f32 %v450, 0.11111111
  %v472 = vmul.f32 %v451, 0.11111111
  %v473 = vmul.f32 %v452, 0.11111111
  %v474 = vmul.f32 %v453, 0.11111111
  %v475 = vmul.f32 %v454, 0.11111111
  %v476 = vmul.f32 %v455, 0.11111111
  %v477 = vmul.f32 %v456, 0.11111111
  %v478 = vmul.f32 %v457, 0.11111111
  %v479 = vcvt.f32.s32.to.zero.pseudo %v458
  %v480 = vcvt.f32.s32.to.zero.pseudo %v459
  %v481 = vcvt.f32.s32.to.zero.pseudo %v460
  %v482 = vcvt.f32.s32.to.zero.pseudo %v461
  %v483 = vcvt.f32.s32.to.zero.pseudo %v462
  %v484 = vcvt.f32.s32.to.zero.pseudo %v463
  %v485 = vcvt.f32.s32.to.zero.pseudo %v464
  %v486 = vcvt.f32.s32.to.zero.pseudo %v465
  %v487 = vcvt.f32.s32.to.zero.pseudo %v466
  %v488 = vcvt.f32.s32.to.zero.pseudo %v467
  %v489 = vcvt.f32.s32.to.zero.pseudo %v468
  %v490 = vcvt.f32.s32.to.zero.pseudo %v469
  %v491 = vcvt.f32.s32.to.zero.pseudo %v470
  %v492 = vcvt.f32.s32.to.zero.pseudo %v471
  %v493 = vcvt.f32.s32.to.zero.pseudo %v472
  %v494 = vcvt.f32.s32.to.zero.pseudo %v473
  %v495 = vcvt.f32.s32.to.zero.pseudo %v474
  %v496 = vcvt.f32.s32.to.zero.pseudo %v475
  %v497 = vcvt.f32.s32.to.zero.pseudo %v476
  %v498 = vcvt.f32.s32.to.zero.pseudo %v477
  %v499 = vcvt.f32.s32.to.zero.pseudo %v478
  %v500 = vcvt.s32.f32 %v479
  %v501 = vcvt.s32.f32 %v480
  %v502 = vcvt.s32.f32 %v481
  %v503 = vcvt.s32.f32 %v482
  %v504 = vcvt.s32.f32 %v483
  %v505 = vcvt.s32.f32 %v484
  %v506 = vcvt.s32.f32 %v485
  %v507 = vcvt.s32.f32 %v486
  %v508 = vcvt.s32.f32 %v487
  %v509 = vcvt.s32.f32 %v488
  %v510 = vcvt.s32.f32 %v489
  %v511 = vcvt.s32.f32 %v490
  %v512 = vcvt.s32.f32 %v491
  %v513 = vcvt.s32.f32 %v492
  %v514 = vcvt.s32.f32 %v493
  %v515 = vcvt.s32.f32 %v494
  %v516 = vcvt.s32.f32 %v495
  %v517 = vcvt.s32.f32 %v496
  %v518 = vcvt.s32.f32 %v497
  %v519 = vcvt.s32.f32 %v498
  %v520 = vcvt.s32.f32 %v499
  %v521 = vmul.f32 %v500, 9.0
  %v522 = vmul.f32 %v501, 9.0
  %v523 = vmul.f32 %v502, 9.0
  %v524 = vmul.f32 %v503, 9.0
  %v525 = vmul.f32 %v504, 9.0
  %v526 = vmul.f32 %v505, 9.0
  %v527 = vmul.f32 %v506, 9.0
  %v528 = vmul.f32 %v507, 9.0
  %v529 = vmul.f32 %v508, 9.0
  %v530 = vmul.f32 %v509, 9.0
  %v531 = vmul.f32 %v510, 9.0
  %v532 = vmul.f32 %v511, 9.0
  %v533 = vmul.f32 %v512, 9.0
  %v534 = vmul.f32 %v513, 9.0
  %v535 = vmul.f32 %v514, 9.0
  %v536 = vmul.f32 %v515, 9.0
  %v537 = vmul.f32 %v516, 9.0
  %v538 = vmul.f32 %v517, 9.0
  %v539 = vmul.f32 %v518, 9.0
  %v540 = vmul.f32 %v519, 9.0
  %v541 = vmul.f32 %v520, 9.0
  %v542 = vsub.f32 %v416, %v521
  %v543 = vsub.f32 %v417, %v522
  %v544 = vsub.f32 %v418, %v523
  %v545 = vsub.f32 %v419, %v524
  %v546 = vsub.f32 %v420, %v525
  %v547 = vsub.f32 %v421, %v526
  %v548 = vsub.f32 %v422, %v527
  %v549 = vsub.f32 %v423, %v528
  %v550 = vsub.f32 %v424, %v529
  %v551 = vsub.f32 %v425, %v530
  %v552 = vsub.f32 %v426, %v531
  %v553 = vsub.f32 %v427, %v532
  %v554 = vsub.f32 %v428, %v533
  %v555 = vsub.f32 %v429, %v534
  %v556 = vsub.f32 %v430, %v535
  %v557 = vsub.f32 %v431, %v536
  %v558 = vsub.f32 %v432, %v537
  %v559 = vsub.f32 %v433, %v538
  %v560 = vsub.f32 %v434, %v539
  %v561 = vsub.f32 %v435, %v540
  %v562 = vsub.f32 %v436, %v541
  %v563 = vadd.f32 %v500, 0.5
  %v564 = vadd.f32 %v501, 0.5
  %v565 = vadd.f32 %v502, 0.5
  %v566 = vadd.f32 %v503, 0.5
  %v567 = vadd.f32 %v504, 0.5
  %v568 = vadd.f32 %v505, 0.5
  %v569 = vadd.f32 %v506, 0.5
  %v570 = vadd.f32 %v507, 0.5
  %v571 = vadd.f32 %v508, 0.5
  %v572 = vadd.f32 %v509, 0.5
  %v573 = vadd.f32 %v510, 0.5
  %v574 = vadd.f32 %v511, 0.5
  %v575 = vadd.f32 %v512, 0.5
  %v576 = vadd.f32 %v513, 0.5
  %v577 = vadd.f32 %v514, 0.5
  %v578 = vadd.f32 %v515, 0.5
  %v579 = vadd.f32 %v516, 0.5
  %v580 = vadd.f32 %v517, 0.5
  %v581 = vadd.f32 %v518, 0.5
  %v582 = vadd.f32 %v519, 0.5
  %v583 = vadd.f32 %v520, 0.5
  %v584 = vmul.f32 %v563, 0.11111111
  %v585 = vmul.f32 %v564, 0.11111111
  %v586 = vmul.f32 %v565, 0.11111111
  %v587 = vmul.f32 %v566, 0.11111111
  %v588 = vmul.f32 %v567, 0.11111111
  %v589 = vmul.f32 %v568, 0.11111111
  %v590 = vmul.f32 %v569, 0.11111111
  %v591 = vmul.f32 %v570, 0.11111111
  %v592 = vmul.f32 %v571, 0.11111111
  %v593 = vmul.f32 %v572, 0.11111111
  %v594 = vmul.f32 %v573, 0.11111111
  %v595 = vmul.f32 %v574, 0.11111111
  %v596 = vmul.f32 %v575, 0.11111111
  %v597 = vmul.f32 %v576, 0.11111111
  %v598 = vmul.f32 %v577, 0.11111111
  %v599 = vmul.f32 %v578, 0.11111111
  %v600 = vmul.f32 %v579, 0.11111111
  %v601 = vmul.f32 %v580, 0.11111111
  %v602 = vmul.f32 %v581, 0.11111111
  %v603 = vmul.f32 %v582, 0.11111111
  %v604 = vmul.f32 %v583, 0.11111111
  %v605 = vcvt.f32.s32.to.zero.pseudo %v584
  %v606 = vcvt.f32.s32.to.zero.pseudo %v585
  %v607 = vcvt.f32.s32.to.zero.pseudo %v586
  %v608 = vcvt.f32.s32.to.zero.pseudo %v587
  %v609 = vcvt.f32.s32.to.zero.pseudo %v588
  %v610 = vcvt.f32.s32.to.zero.pseudo %v589
  %v611 = vcvt.f32.s32.to.zero.pseudo %v590
  %v612 = vcvt.f32.s32.to.zero.pseudo %v591
  %v613 = vcvt.f32.s32.to.zero.pseudo %v592
  %v614 = vcvt.f32.s32.to.zero.pseudo %v593
  %v615 = vcvt.f32.s32.to.zero.pseudo %v594
  %v616 = vcvt.f32.s32.to.zero.pseudo %v595
  %v617 = vcvt.f32.s32.to.zero.pseudo %v596
  %v618 = vcvt.f32.s32.to.zero.pseudo %v597
  %v619 = vcvt.f32.s32.to.zero.pseudo %v598
  %v620 = vcvt.f32.s32.to.zero.pseudo %v599
  %v621 = vcvt.f32.s32.to.zero.pseudo %v600
  %v622 = vcvt.f32.s32.to.zero.pseudo %v601
  %v623 = vcvt.f32.s32.to.zero.pseudo %v602
  %v624 = vcvt.f32.s32.to.zero.pseudo %v603
  %v625 = vcvt.f32.s32.to.zero.pseudo %v604
  %v626 = vcvt.s32.f32 %v605
  %v627 = vcvt.s32.f32 %v606
  %v628 = vcvt.s32.f32 %v607
  %v629 = vcvt.s32.f32 %v608
  %v630 = vcvt.s32.f32 %v609
  %v631 = vcvt.s32.f32 %v610
  %v632 = vcvt.s32.f32 %v611
  %v633 = vcvt.s32.f32 %v612
  %v634 = vcvt.s32.f32 %v613
  %v635 = vcvt.s32.f32 %v614
  %v636 = vcvt.s32.f32 %v615
  %v637 = vcvt.s32.f32 %v616
  %v638 = vcvt.s32.f32 %v617
  %v639 = vcvt.s32.f32 %v618
  %v640 = vcvt.s32.f32 %v619
  %v641 = vcvt.s32.f32 %v620
  %v642 = vcvt.s32.f32 %v621
  %v643 = vcvt.s32.f32 %v622
  %v644 = vcvt.s32.f32 %v623
  %v645 = vcvt.s32.f32 %v624
  %v646 = vcvt.s32.f32 %v625
  %v647 = vmul.f32 %v626, 9.0
  %v648 = vmul.f32 %v627, 9.0
  %v649 = vmul.f32 %v628, 9.0
  %v650 = vmul.f32 %v629, 9.0
  %v651 = vmul.f32 %v630, 9.0
  %v652 = vmul.f32 %v631, 9.0
  %v653 = vmul.f32 %v632, 9.0
  %v654 = vmul.f32 %v633, 9.0
  %v655 = vmul.f32 %v634, 9.0
  %v656 = vmul.f32 %v635, 9.0
  %v657 = vmul.f32 %v636, 9.0
  %v658 = vmul.f32 %v637, 9.0
  %v659 = vmul.f32 %v638, 9.0
  %v660 = vmul.f32 %v639, 9.0
  %v661 = vmul.f32 %v640, 9.0
  %v662 = vmul.f32 %v641, 9.0
  %v663 = vmul.f32 %v642, 9.0
  %v664 = vmul.f32 %v643, 9.0
  %v665 = vmul.f32 %v644, 9.0
  %v666 = vmul.f32 %v645, 9.0
  %v667 = vmul.f32 %v646, 9.0
  %v668 = vsub.f32 %v500, %v647
  %v669 = vsub.f32 %v501, %v648
  %v670 = vsub.f32 %v502, %v649
  %v671 = vsub.f32 %v503, %v650
  %v672 = vsub.f32 %v504, %v651
  %v673 = vsub.f32 %v505, %v652
  %v674 = vsub.f32 %v506, %v653
  %v675 = vsub.f32 %v507, %v654
  %v676 = vsub.f32 %v508, %v655
  %v677 = vsub.f32 %v509, %v656
  %v678 = vsub.f32 %v510, %v657
  %v679 = vsub.f32 %v511, %v658
  %v680 = vsub.f32 %v512, %v659
  %v681 = vsub.f32 %v513, %v660
  %v682 = vsub.f32 %v514, %v661
  %v683 = vsub.f32 %v515, %v662
  %v684 = vsub.f32 %v516, %v663
  %v685 = vsub.f32 %v517, %v664
  %v686 = vsub.f32 %v518, %v665
  %v687 = vsub.f32 %v519, %v666
  %v688 = vsub.f32 %v520, %v667
  %vm689 = vcmp.lt.f32.partialorder %v668, 0.5
  %vm690 = vcmp.lt.f32.partialorder %v669, 0.5
  %vm691 = vcmp.lt.f32.partialorder %v670, 0.5
  %vm692 = vcmp.lt.f32.partialorder %v671, 0.5
  %vm693 = vcmp.lt.f32.partialorder %v672, 0.5
  %vm694 = vcmp.lt.f32.partialorder %v673, 0.5
  %vm695 = vcmp.lt.f32.partialorder %v674, 0.5
  %vm696 = vcmp.lt.f32.partialorder %v675, 0.5
  %vm697 = vcmp.lt.f32.partialorder %v676, 0.5
  %vm698 = vcmp.lt.f32.partialorder %v677, 0.5
  %vm699 = vcmp.lt.f32.partialorder %v678, 0.5
  %vm700 = vcmp.lt.f32.partialorder %v679, 0.5
  %vm701 = vcmp.lt.f32.partialorder %v680, 0.5
  %vm702 = vcmp.lt.f32.partialorder %v681, 0.5
  %vm703 = vcmp.lt.f32.partialorder %v682, 0.5
  %vm704 = vcmp.lt.f32.partialorder %v683, 0.5
  %vm705 = vcmp.lt.f32.partialorder %v684, 0.5
  %vm706 = vcmp.lt.f32.partialorder %v685, 0.5
  %vm707 = vcmp.lt.f32.partialorder %v686, 0.5
  %vm708 = vcmp.lt.f32.partialorder %v687, 0.5
  %vm709 = vcmp.lt.f32.partialorder %v688, 0.5
  %v710 = vsel %vm689, 1, 0
  %v711 = vsel %vm690, 1, 0
  %v712 = vsel %vm691, 1, 0
  %v713 = vsel %vm692, 1, 0
  %v714 = vsel %vm693, 1, 0
  %v715 = vsel %vm694, 1, 0
  %v716 = vsel %vm695, 1, 0
  %v717 = vsel %vm696, 1, 0
  %v718 = vsel %vm697, 1, 0
  %v719 = vsel %vm698, 1, 0
  %v720 = vsel %vm699, 1, 0
  %v721 = vsel %vm700, 1, 0
  %v722 = vsel %vm701, 1, 0
  %v723 = vsel %vm702, 1, 0
  %v724 = vsel %vm703, 1, 0
  %v725 = vsel %vm704, 1, 0
  %v726 = vsel %vm705, 1, 0
  %v727 = vsel %vm706, 1, 0
  %v728 = vsel %vm707, 1, 0
  %v729 = vsel %vm708, 1, 0
  %v730 = vsel %vm709, 1, 0
  %v731 = vcvt.s32.f32 %v710
  %v732 = vcvt.s32.f32 %v711
  %v733 = vcvt.s32.f32 %v712
  %v734 = vcvt.s32.f32 %v713
  %v735 = vcvt.s32.f32 %v714
  %v736 = vcvt.s32.f32 %v715
  %v737 = vcvt.s32.f32 %v716
  %v738 = vcvt.s32.f32 %v717
  %v739 = vcvt.s32.f32 %v718
  %v740 = vcvt.s32.f32 %v719
  %v741 = vcvt.s32.f32 %v720
  %v742 = vcvt.s32.f32 %v721
  %v743 = vcvt.s32.f32 %v722
  %v744 = vcvt.s32.f32 %v723
  %v745 = vcvt.s32.f32 %v724
  %v746 = vcvt.s32.f32 %v725
  %v747 = vcvt.s32.f32 %v726
  %v748 = vcvt.s32.f32 %v727
  %v749 = vcvt.s32.f32 %v728
  %v750 = vcvt.s32.f32 %v729
  %v751 = vcvt.s32.f32 %v730
  %vm752 = vcmp.gt.f32.partialorder %v668, 7.5
  %vm753 = vcmp.gt.f32.partialorder %v669, 7.5
  %vm754 = vcmp.gt.f32.partialorder %v670, 7.5
  %vm755 = vcmp.gt.f32.partialorder %v671, 7.5
  %vm756 = vcmp.gt.f32.partialorder %v672, 7.5
  %vm757 = vcmp.gt.f32.partialorder %v673, 7.5
  %vm758 = vcmp.gt.f32.partialorder %v674, 7.5
  %vm759 = vcmp.gt.f32.partialorder %v675, 7.5
  %vm760 = vcmp.gt.f32.partialorder %v676, 7.5
  %vm761 = vcmp.gt.f32.partialorder %v677, 7.5
  %vm762 = vcmp.gt.f32.partialorder %v678, 7.5
  %vm763 = vcmp.gt.f32.partialorder %v679, 7.5
  %vm764 = vcmp.gt.f32.partialorder %v680, 7.5
  %vm765 = vcmp.gt.f32.partialorder %v681, 7.5
  %vm766 = vcmp.gt.f32.partialorder %v682, 7.5
  %vm767 = vcmp.gt.f32.partialorder %v683, 7.5
  %vm768 = vcmp.gt.f32.partialorder %v684, 7.5
  %vm769 = vcmp.gt.f32.partialorder %v685, 7.5
  %vm770 = vcmp.gt.f32.partialorder %v686, 7.5
  %vm771 = vcmp.gt.f32.partialorder %v687, 7.5
  %vm772 = vcmp.gt.f32.partialorder %v688, 7.5
  %v773 = vsel %vm752, 1, 0
  %v774 = vsel %vm753, 1, 0
  %v775 = vsel %vm754, 1, 0
  %v776 = vsel %vm755, 1, 0
  %v777 = vsel %vm756, 1, 0
  %v778 = vsel %vm757, 1, 0
  %v779 = vsel %vm758, 1, 0
  %v780 = vsel %vm759, 1, 0
  %v781 = vsel %vm760, 1, 0
  %v782 = vsel %vm761, 1, 0
  %v783 = vsel %vm762, 1, 0
  %v784 = vsel %vm763, 1, 0
  %v785 = vsel %vm764, 1, 0
  %v786 = vsel %vm765, 1, 0
  %v787 = vsel %vm766, 1, 0
  %v788 = vsel %vm767, 1, 0
  %v789 = vsel %vm768, 1, 0
  %v790 = vsel %vm769, 1, 0
  %v791 = vsel %vm770, 1, 0
  %v792 = vsel %vm771, 1, 0
  %v793 = vsel %vm772, 1, 0
  %v794 = vcvt.s32.f32 %v773
  %v795 = vcvt.s32.f32 %v774
  %v796 = vcvt.s32.f32 %v775
  %v797 = vcvt.s32.f32 %v776
  %v798 = vcvt.s32.f32 %v777
  %v799 = vcvt.s32.f32 %v778
  %v800 = vcvt.s32.f32 %v779
  %v801 = vcvt.s32.f32 %v780
  %v802 = vcvt.s32.f32 %v781
  %v803 = vcvt.s32.f32 %v782
  %v804 = vcvt.s32.f32 %v783
  %v805 = vcvt.s32.f32 %v784
  %v806 = vcvt.s32.f32 %v785
  %v807 = vcvt.s32.f32 %v786
  %v808 = vcvt.s32.f32 %v787
  %v809 = vcvt.s32.f32 %v788
  %v810 = vcvt.s32.f32 %v789
  %v811 = vcvt.s32.f32 %v790
  %v812 = vcvt.s32.f32 %v791
  %v813 = vcvt.s32.f32 %v792
  %v814 = vcvt.s32.f32 %v793
  %vm815 = vcmp.lt.f32.partialorder %v542, 0.5
  %vm816 = vcmp.lt.f32.partialorder %v543, 0.5
  %vm817 = vcmp.lt.f32.partialorder %v544, 0.5
  %vm818 = vcmp.lt.f32.partialorder %v545, 0.5
  %vm819 = vcmp.lt.f32.partialorder %v546, 0.5
  %vm820 = vcmp.lt.f32.partialorder %v547, 0.5
  %vm821 = vcmp.lt.f32.partialorder %v548, 0.5
  %vm822 = vcmp.lt.f32.partialorder %v549, 0.5
  %vm823 = vcmp.lt.f32.partialorder %v550, 0.5
  %vm824 = vcmp.lt.f32.partialorder %v551, 0.5
  %vm825 = vcmp.lt.f32.partialorder %v552, 0.5
  %vm826 = vcmp.lt.f32.partialorder %v553, 0.5
  %vm827 = vcmp.lt.f32.partialorder %v554, 0.5
  %vm828 = vcmp.lt.f32.partialorder %v555, 0.5
  %vm829 = vcmp.lt.f32.partialorder %v556, 0.5
  %vm830 = vcmp.lt.f32.partialorder %v557, 0.5
  %vm831 = vcmp.lt.f32.partialorder %v558, 0.5
  %vm832 = vcmp.lt.f32.partialorder %v559, 0.5
  %vm833 = vcmp.lt.f32.partialorder %v560, 0.5
  %vm834 = vcmp.lt.f32.partialorder %v561, 0.5
  %vm835 = vcmp.lt.f32.partialorder %v562, 0.5
  %v836 = vsel %vm815, 1, 0
  %v837 = vsel %vm816, 1, 0
  %v838 = vsel %vm817, 1, 0
  %v839 = vsel %vm818, 1, 0
  %v840 = vsel %vm819, 1, 0
  %v841 = vsel %vm820, 1, 0
  %v842 = vsel %vm821, 1, 0
  %v843 = vsel %vm822, 1, 0
  %v844 = vsel %vm823, 1, 0
  %v845 = vsel %vm824, 1, 0
  %v846 = vsel %vm825, 1, 0
  %v847 = vsel %vm826, 1, 0
  %v848 = vsel %vm827, 1, 0
  %v849 = vsel %vm828, 1, 0
  %v850 = vsel %vm829, 1, 0
  %v851 = vsel %vm830, 1, 0
  %v852 = vsel %vm831, 1, 0
  %v853 = vsel %vm832, 1, 0
  %v854 = vsel %vm833, 1, 0
  %v855 = vsel %vm834, 1, 0
  %v856 = vsel %vm835, 1, 0
  %v857 = vcvt.s32.f32 %v836
  %v858 = vcvt.s32.f32 %v837
  %v859 = vcvt.s32.f32 %v838
  %v860 = vcvt.s32.f32 %v839
  %v861 = vcvt.s32.f32 %v840
  %v862 = vcvt.s32.f32 %v841
  %v863 = vcvt.s32.f32 %v842
  %v864 = vcvt.s32.f32 %v843
  %v865 = vcvt.s32.f32 %v844
  %v866 = vcvt.s32.f32 %v845
  %v867 = vcvt.s32.f32 %v846
  %v868 = vcvt.s32.f32 %v847
  %v869 = vcvt.s32.f32 %v848
  %v870 = vcvt.s32.f32 %v849
  %v871 = vcvt.s32.f32 %v850
  %v872 = vcvt.s32.f32 %v851
  %v873 = vcvt.s32.f32 %v852
  %v874 = vcvt.s32.f32 %v853
  %v875 = vcvt.s32.f32 %v854
  %v876 = vcvt.s32.f32 %v855
  %v877 = vcvt.s32.f32 %v856
  %vm878 = vcmp.gt.f32.partialorder %v542, 7.5
  %vm879 = vcmp.gt.f32.partialorder %v543, 7.5
  %vm880 = vcmp.gt.f32.partialorder %v544, 7.5
  %vm881 = vcmp.gt.f32.partialorder %v545, 7.5
  %vm882 = vcmp.gt.f32.partialorder %v546, 7.5
  %vm883 = vcmp.gt.f32.partialorder %v547, 7.5
  %vm884 = vcmp.gt.f32.partialorder %v548, 7.5
  %vm885 = vcmp.gt.f32.partialorder %v549, 7.5
  %vm886 = vcmp.gt.f32.partialorder %v550, 7.5
  %vm887 = vcmp.gt.f32.partialorder %v551, 7.5
  %vm888 = vcmp.gt.f32.partialorder %v552, 7.5
  %vm889 = vcmp.gt.f32.partialorder %v553, 7.5
  %vm890 = vcmp.gt.f32.partialorder %v554, 7.5
  %vm891 = vcmp.gt.f32.partialorder %v555, 7.5
  %vm892 = vcmp.gt.f32.partialorder %v556, 7.5
  %vm893 = vcmp.gt.f32.partialorder %v557, 7.5
  %vm894 = vcmp.gt.f32.partialorder %v558, 7.5
  %vm895 = vcmp.gt.f32.partialorder %v559, 7.5
  %vm896 = vcmp.gt.f32.partialorder %v560, 7.5
  %vm897 = vcmp.gt.f32.partialorder %v561, 7.5
  %vm898 = vcmp.gt.f32.partialorder %v562, 7.5
  %v899 = vsel %vm878, 1, 0
  %v900 = vsel %vm879, 1, 0
  %v901 = vsel %vm880, 1, 0
  %v902 = vsel %vm881, 1, 0
  %v903 = vsel %vm882, 1, 0
  %v904 = vsel %vm883, 1, 0
  %v905 = vsel %vm884, 1, 0
  %v906 = vsel %vm885, 1, 0
  %v907 = vsel %vm886, 1, 0
  %v908 = vsel %vm887, 1, 0
  %v909 = vsel %vm888, 1, 0
  %v910 = vsel %vm889, 1, 0
  %v911 = vsel %vm890, 1, 0
  %v912 = vsel %vm891, 1, 0
  %v913 = vsel %vm892, 1, 0
  %v914 = vsel %vm893, 1, 0
  %v915 = vsel %vm894, 1, 0
  %v916 = vsel %vm895, 1, 0
  %v917 = vsel %vm896, 1, 0
  %v918 = vsel %vm897, 1, 0
  %v919 = vsel %vm898, 1, 0
  %v920 = vcvt.s32.f32 %v899
  %v921 = vcvt.s32.f32 %v900
  %v922 = vcvt.s32.f32 %v901
  %v923 = vcvt.s32.f32 %v902
  %v924 = vcvt.s32.f32 %v903
  %v925 = vcvt.s32.f32 %v904
  %v926 = vcvt.s32.f32 %v905
  %v927 = vcvt.s32.f32 %v906
  %v928 = vcvt.s32.f32 %v907
  %v929 = vcvt.s32.f32 %v908
  %v930 = vcvt.s32.f32 %v909
  %v931 = vcvt.s32.f32 %v910
  %v932 = vcvt.s32.f32 %v911
  %v933 = vcvt.s32.f32 %v912
  %v934 = vcvt.s32.f32 %v913
  %v935 = vcvt.s32.f32 %v914
  %v936 = vcvt.s32.f32 %v915
  %v937 = vcvt.s32.f32 %v916
  %v938 = vcvt.s32.f32 %v917
  %v939 = vcvt.s32.f32 %v918
  %v940 = vcvt.s32.f32 %v919
  %v941 = vlaneseq
  %v942 = vand.u32 %v941, 127
  %vm943 = vcmp.ge.s32.totalorder %v942, 64
  %v944 = vsel %vm943, 1, 0
  %v945 = vcvt.s32.f32 %v944
  %v946 = vand.u32 %v942, 32
  %vm947 = vcmp.gt.s32.totalorder %v946, 0
  %v948 = vsel %vm947, 1, 0
  %v949 = vcvt.s32.f32 %v948
  %v950 = vsub.f32 1.0, %v945
  %v951 = vsub.f32 1.0, %v949
  %v952 = vmul.f32 %v731, %v950
  %v953 = vmul.f32 %v732, %v950
  %v954 = vmul.f32 %v733, %v950
  %v955 = vmul.f32 %v734, %v950
  %v956 = vmul.f32 %v735, %v950
  %v957 = vmul.f32 %v736, %v950
  %v958 = vmul.f32 %v737, %v950
  %v959 = vmul.f32 %v738, %v950
  %v960 = vmul.f32 %v739, %v950
  %v961 = vmul.f32 %v740, %v950
  %v962 = vmul.f32 %v741, %v950
  %v963 = vmul.f32 %v742, %v950
  %v964 = vmul.f32 %v743, %v950
  %v965 = vmul.f32 %v744, %v950
  %v966 = vmul.f32 %v745, %v950
  %v967 = vmul.f32 %v746, %v950
  %v968 = vmul.f32 %v747, %v950
  %v969 = vmul.f32 %v748, %v950
  %v970 = vmul.f32 %v749, %v950
  %v971 = vmul.f32 %v750, %v950
  %v972 = vmul.f32 %v751, %v950
  %v973 = vmul.f32 %v794, %v945
  %v974 = vmul.f32 %v795, %v945
  %v975 = vmul.f32 %v796, %v945
  %v976 = vmul.f32 %v797, %v945
  %v977 = vmul.f32 %v798, %v945
  %v978 = vmul.f32 %v799, %v945
  %v979 = vmul.f32 %v800, %v945
  %v980 = vmul.f32 %v801, %v945
  %v981 = vmul.f32 %v802, %v945
  %v982 = vmul.f32 %v803, %v945
  %v983 = vmul.f32 %v804, %v945
  %v984 = vmul.f32 %v805, %v945
  %v985 = vmul.f32 %v806, %v945
  %v986 = vmul.f32 %v807, %v945
  %v987 = vmul.f32 %v808, %v945
  %v988 = vmul.f32 %v809, %v945
  %v989 = vmul.f32 %v810, %v945
  %v990 = vmul.f32 %v811, %v945
  %v991 = vmul.f32 %v812, %v945
  %v992 = vmul.f32 %v813, %v945
  %v993 = vmul.f32 %v814, %v945
  %v994 = vadd.f32 %v952, %v973
  %v995 = vadd.f32 %v953, %v974
  %v996 = vadd.f32 %v954, %v975
  %v997 = vadd.f32 %v955, %v976
  %v998 = vadd.f32 %v956, %v977
  %v999 = vadd.f32 %v957, %v978
  %v1000 = vadd.f32 %v958, %v979
  %v1001 = vadd.f32 %v959, %v980
  %v1002 = vadd.f32 %v960, %v981
  %v1003 = vadd.f32 %v961, %v982
  %v1004 = vadd.f32 %v962, %v983
  %v1005 = vadd.f32 %v963, %v984
  %v1006 = vadd.f32 %v964, %v985
  %v1007 = vadd.f32 %v965, %v986
  %v1008 = vadd.f32 %v966, %v987
  %v1009 = vadd.f32 %v967, %v988
  %v1010 = vadd.f32 %v968, %v989
  %v1011 = vadd.f32 %v969, %v990
  %v1012 = vadd.f32 %v970, %v991
  %v1013 = vadd.f32 %v971, %v992
  %v1014 = vadd.f32 %v972, %v993
  %v1015 = vmul.f32 %v857, %v951
  %v1016 = vmul.f32 %v858, %v951
  %v1017 = vmul.f32 %v859, %v951
  %v1018 = vmul.f32 %v860, %v951
  %v1019 = vmul.f32 %v861, %v951
  %v1020 = vmul.f32 %v862, %v951
  %v1021 = vmul.f32 %v863, %v951
  %v1022 = vmul.f32 %v864, %v951
  %v1023 = vmul.f32 %v865, %v951
  %v1024 = vmul.f32 %v866, %v951
  %v1025 = vmul.f32 %v867, %v951
  %v1026 = vmul.f32 %v868, %v951
  %v1027 = vmul.f32 %v869, %v951
  %v1028 = vmul.f32 %v870, %v951
  %v1029 = vmul.f32 %v871, %v951
  %v1030 = vmul.f32 %v872, %v951
  %v1031 = vmul.f32 %v873, %v951
  %v1032 = vmul.f32 %v874, %v951
  %v1033 = vmul.f32 %v875, %v951
  %v1034 = vmul.f32 %v876, %v951
  %v1035 = vmul.f32 %v877, %v951
  %v1036 = vadd.f32 %v994, %v1015
  %v1037 = vadd.f32 %v995, %v1016
  %v1038 = vadd.f32 %v996, %v1017
  %v1039 = vadd.f32 %v997, %v1018
  %v1040 = vadd.f32 %v998, %v1019
  %v1041 = vadd.f32 %v999, %v1020
  %v1042 = vadd.f32 %v1000, %v1021
  %v1043 = vadd.f32 %v1001, %v1022
  %v1044 = vadd.f32 %v1002, %v1023
  %v1045 = vadd.f32 %v1003, %v1024
  %v1046 = vadd.f32 %v1004, %v1025
  %v1047 = vadd.f32 %v1005, %v1026
  %v1048 = vadd.f32 %v1006, %v1027
  %v1049 = vadd.f32 %v1007, %v1028
  %v1050 = vadd.f32 %v1008, %v1029
  %v1051 = vadd.f32 %v1009, %v1030
  %v1052 = vadd.f32 %v1010, %v1031
  %v1053 = vadd.f32 %v1011, %v1032
  %v1054 = vadd.f32 %v1012, %v1033
  %v1055 = vadd.f32 %v1013, %v1034
  %v1056 = vadd.f32 %v1014, %v1035
  %v1057 = vmul.f32 %v920, %v949
  %v1058 = vmul.f32 %v921, %v949
  %v1059 = vmul.f32 %v922, %v949
  %v1060 = vmul.f32 %v923, %v949
  %v1061 = vmul.f32 %v924, %v949
  %v1062 = vmul.f32 %v925, %v949
  %v1063 = vmul.f32 %v926, %v949
  %v1064 = vmul.f32 %v927, %v949
  %v1065 = vmul.f32 %v928, %v949
  %v1066 = vmul.f32 %v929, %v949
  %v1067 = vmul.f32 %v930, %v949
  %v1068 = vmul.f32 %v931, %v949
  %v1069 = vmul.f32 %v932, %v949
  %v1070 = vmul.f32 %v933, %v949
  %v1071 = vmul.f32 %v934, %v949
  %v1072 = vmul.f32 %v935, %v949
  %v1073 = vmul.f32 %v936, %v949
  %v1074 = vmul.f32 %v937, %v949
  %v1075 = vmul.f32 %v938, %v949
  %v1076 = vmul.f32 %v939, %v949
  %v1077 = vmul.f32 %v940, %v949
  %v1078 = vadd.f32 %v1036, %v1057
  %v1079 = vadd.f32 %v1037, %v1058
  %v1080 = vadd.f32 %v1038, %v1059
  %v1081 = vadd.f32 %v1039, %v1060
  %v1082 = vadd.f32 %v1040, %v1061
  %v1083 = vadd.f32 %v1041, %v1062
  %v1084 = vadd.f32 %v1042, %v1063
  %v1085 = vadd.f32 %v1043, %v1064
  %v1086 = vadd.f32 %v1044, %v1065
  %v1087 = vadd.f32 %v1045, %v1066
  %v1088 = vadd.f32 %v1046, %v1067
  %v1089 = vadd.f32 %v1047, %v1068
  %v1090 = vadd.f32 %v1048, %v1069
  %v1091 = vadd.f32 %v1049, %v1070
  %v1092 = vadd.f32 %v1050, %v1071
  %v1093 = vadd.f32 %v1051, %v1072
  %v1094 = vadd.f32 %v1052, %v1073
  %v1095 = vadd.f32 %v1053, %v1074
  %v1096 = vadd.f32 %v1054, %v1075
  %v1097 = vadd.f32 %v1055, %v1076
  %v1098 = vadd.f32 %v1056, %v1077
  %vm1099 = vcmp.lt.f32.partialorder %v1078, 0.5
  %vm1100 = vcmp.lt.f32.partialorder %v1079, 0.5
  %vm1101 = vcmp.lt.f32.partialorder %v1080, 0.5
  %vm1102 = vcmp.lt.f32.partialorder %v1081, 0.5
  %vm1103 = vcmp.lt.f32.partialorder %v1082, 0.5
  %vm1104 = vcmp.lt.f32.partialorder %v1083, 0.5
  %vm1105 = vcmp.lt.f32.partialorder %v1084, 0.5
  %vm1106 = vcmp.lt.f32.partialorder %v1085, 0.5
  %vm1107 = vcmp.lt.f32.partialorder %v1086, 0.5
  %vm1108 = vcmp.lt.f32.partialorder %v1087, 0.5
  %vm1109 = vcmp.lt.f32.partialorder %v1088, 0.5
  %vm1110 = vcmp.lt.f32.partialorder %v1089, 0.5
  %vm1111 = vcmp.lt.f32.partialorder %v1090, 0.5
  %vm1112 = vcmp.lt.f32.partialorder %v1091, 0.5
  %vm1113 = vcmp.lt.f32.partialorder %v1092, 0.5
  %vm1114 = vcmp.lt.f32.partialorder %v1093, 0.5
  %vm1115 = vcmp.lt.f32.partialorder %v1094, 0.5
  %vm1116 = vcmp.lt.f32.partialorder %v1095, 0.5
  %vm1117 = vcmp.lt.f32.partialorder %v1096, 0.5
  %vm1118 = vcmp.lt.f32.partialorder %v1097, 0.5
  %vm1119 = vcmp.lt.f32.partialorder %v1098, 0.5
  %v1120 = vsel %vm1099, 1, 0
  %v1121 = vsel %vm1100, 1, 0
  %v1122 = vsel %vm1101, 1, 0
  %v1123 = vsel %vm1102, 1, 0
  %v1124 = vsel %vm1103, 1, 0
  %v1125 = vsel %vm1104, 1, 0
  %v1126 = vsel %vm1105, 1, 0
  %v1127 = vsel %vm1106, 1, 0
  %v1128 = vsel %vm1107, 1, 0
  %v1129 = vsel %vm1108, 1, 0
  %v1130 = vsel %vm1109, 1, 0
  %v1131 = vsel %vm1110, 1, 0
  %v1132 = vsel %vm1111, 1, 0
  %v1133 = vsel %vm1112, 1, 0
  %v1134 = vsel %vm1113, 1, 0
  %v1135 = vsel %vm1114, 1, 0
  %v1136 = vsel %vm1115, 1, 0
  %v1137 = vsel %vm1116, 1, 0
  %v1138 = vsel %vm1117, 1, 0
  %v1139 = vsel %vm1118, 1, 0
  %v1140 = vsel %vm1119, 1, 0
  %v1141 = vcvt.s32.f32 %v1120
  %v1142 = vcvt.s32.f32 %v1121
  %v1143 = vcvt.s32.f32 %v1122
  %v1144 = vcvt.s32.f32 %v1123
  %v1145 = vcvt.s32.f32 %v1124
  %v1146 = vcvt.s32.f32 %v1125
  %v1147 = vcvt.s32.f32 %v1126
  %v1148 = vcvt.s32.f32 %v1127
  %v1149 = vcvt.s32.f32 %v1128
  %v1150 = vcvt.s32.f32 %v1129
  %v1151 = vcvt.s32.f32 %v1130
  %v1152 = vcvt.s32.f32 %v1131
  %v1153 = vcvt.s32.f32 %v1132
  %v1154 = vcvt.s32.f32 %v1133
  %v1155 = vcvt.s32.f32 %v1134
  %v1156 = vcvt.s32.f32 %v1135
  %v1157 = vcvt.s32.f32 %v1136
  %v1158 = vcvt.s32.f32 %v1137
  %v1159 = vcvt.s32.f32 %v1138
  %v1160 = vcvt.s32.f32 %v1139
  %v1161 = vcvt.s32.f32 %v1140
  %v1162 = vmul.f32 %v309, %v1141
  %v1163 = vmul.f32 %v312, %v1142
  %v1164 = vmul.f32 %v317, %v1143
  %v1165 = vmul.f32 %v320, %v1144
  %v1166 = vmul.f32 %v325, %v1145
  %v1167 = vmul.f32 %v328, %v1146
  %v1168 = vmul.f32 %v333, %v1147
  %v1169 = vmul.f32 %v336, %v1148
  %v1170 = vmul.f32 %v341, %v1149
  %v1171 = vmul.f32 %v344, %v1150
  %v1172 = vmul.f32 %v349, %v1151
  %v1173 = vmul.f32 %v352, %v1152
  %v1174 = vmul.f32 %v357, %v1153
  %v1175 = vmul.f32 %v360, %v1154
  %v1176 = vmul.f32 %v365, %v1155
  %v1177 = vmul.f32 %v368, %v1156
  %v1178 = vmul.f32 %v373, %v1157
  %v1179 = vmul.f32 %v376, %v1158
  %v1180 = vmul.f32 %v381, %v1159
  %v1181 = vmul.f32 %v384, %v1160
  %v1182 = vmul.f32 %v389, %v1161
  %v1183 = vadd.f32 %v1162, %v1163
  %v1184 = vadd.f32 %v1183, %v1164
  %v1185 = vadd.f32 %v1184, %v1165
  %v1186 = vadd.f32 %v1185, %v1166
  %v1187 = vadd.f32 %v1186, %v1167
  %v1188 = vadd.f32 %v1187, %v1168
  %v1189 = vadd.f32 %v1188, %v1169
  %v1190 = vadd.f32 %v1189, %v1170
  %v1191 = vadd.f32 %v1190, %v1171
  %v1192 = vadd.f32 %v1191, %v1172
  %v1193 = vadd.f32 %v1192, %v1173
  %v1194 = vadd.f32 %v1193, %v1174
  %v1195 = vadd.f32 %v1194, %v1175
  %v1196 = vadd.f32 %v1195, %v1176
  %v1197 = vadd.f32 %v1196, %v1177
  %v1198 = vadd.f32 %v1197, %v1178
  %v1199 = vadd.f32 %v1198, %v1179
  %v1200 = vadd.f32 %v1199, %v1180
  %v1201 = vadd.f32 %v1200, %v1181
  %vm1202 = vcmask 1041408
  %v1203 = vsel %vm1202, %v1182, 0.0
  %v1204 = vadd.f32 %v1201, %v1203
  %v1205 = vrot.slane %v1204, 4
  %v1206 = vadd.f32 %v1204, %v1205
  %v1207 = vrot.slane %v1206, 2
  %v1208 = vadd.f32 %v1206, %v1207
  %v1209 = vrot.slane %v1208, 1
  %v1210 = vadd.f32 %v1208, %v1209
  %v1211 = vmul.f32 %v1162, %v309
  %v1212 = vmul.f32 %v1163, %v312
  %v1213 = vmul.f32 %v1164, %v317
  %v1214 = vmul.f32 %v1165, %v320
  %v1215 = vmul.f32 %v1166, %v325
  %v1216 = vmul.f32 %v1167, %v328
  %v1217 = vmul.f32 %v1168, %v333
  %v1218 = vmul.f32 %v1169, %v336
  %v1219 = vmul.f32 %v1170, %v341
  %v1220 = vmul.f32 %v1171, %v344
  %v1221 = vmul.f32 %v1172, %v349
  %v1222 = vmul.f32 %v1173, %v352
  %v1223 = vmul.f32 %v1174, %v357
  %v1224 = vmul.f32 %v1175, %v360
  %v1225 = vmul.f32 %v1176, %v365
  %v1226 = vmul.f32 %v1177, %v368
  %v1227 = vmul.f32 %v1178, %v373
  %v1228 = vmul.f32 %v1179, %v376
  %v1229 = vmul.f32 %v1180, %v381
  %v1230 = vmul.f32 %v1181, %v384
  %v1231 = vmul.f32 %v1182, %v389
  %v1232 = vadd.f32 %v1211, %v1212
  %v1233 = vadd.f32 %v1232, %v1213
  %v1234 = vadd.f32 %v1233, %v1214
  %v1235 = vadd.f32 %v1234, %v1215
  %v1236 = vadd.f32 %v1235, %v1216
  %v1237 = vadd.f32 %v1236, %v1217
  %v1238 = vadd.f32 %v1237, %v1218
  %v1239 = vadd.f32 %v1238, %v1219
  %v1240 = vadd.f32 %v1239, %v1220
  %v1241 = vadd.f32 %v1240, %v1221
  %v1242 = vadd.f32 %v1241, %v1222
  %v1243 = vadd.f32 %v1242, %v1223
  %v1244 = vadd.f32 %v1243, %v1224
  %v1245 = vadd.f32 %v1244, %v1225
  %v1246 = vadd.f32 %v1245, %v1226
  %v1247 = vadd.f32 %v1246, %v1227
  %v1248 = vadd.f32 %v1247, %v1228
  %v1249 = vadd.f32 %v1248, %v1229
  %v1250 = vadd.f32 %v1249, %v1230
  %v1251 = vsel %vm1202, %v1231, 0.0
  %v1252 = vadd.f32 %v1250, %v1251
  %v1253 = vrot.slane %v1252, 4
  %v1254 = vadd.f32 %v1252, %v1253
  %v1255 = vrot.slane %v1254, 2
  %v1256 = vadd.f32 %v1254, %v1255
  %v1257 = vrot.slane %v1256, 1
  %v1258 = vadd.f32 %v1256, %v1257
  %1260 = vrot.lane.b32.xlu0 %v1210, 96
  %v1261 = vpop.permute.xlu0 %1260
  %v1263 = vadd.f32 %v1210, %v1261
  %1264 = vrot.lane.b32.xlu0 %v1210, 64
  %v1265 = vpop.permute.xlu0 %1264
  %v1267 = vadd.f32 %v1263, %v1265
  %1268 = vrot.lane.b32.xlu0 %v1210, 32
  %v1269 = vpop.permute.xlu0 %1268
  %v1271 = vadd.f32 %v1267, %v1269
  %v1272 = vmul.f32 %v1271, 0.001953125
  %1274 = vrot.lane.b32.xlu0 %v1258, 96
  %v1275 = vpop.permute.xlu0 %1274
  %v1277 = vadd.f32 %v1258, %v1275
  %1278 = vrot.lane.b32.xlu0 %v1258, 64
  %v1279 = vpop.permute.xlu0 %1278
  %v1281 = vadd.f32 %v1277, %v1279
  %1282 = vrot.lane.b32.xlu0 %v1258, 32
  %v1283 = vpop.permute.xlu0 %1282
  %v1285 = vadd.f32 %v1281, %v1283
  %v1286 = vmul.f32 %v1285, 0.001953125
  %v1287 = vmul.f32 %v1272, %v1272
  %v1288 = vsub.f32 %v1286, %v1287
  %v1289 = vmax.f32 %v1288, 0.0
  %v1290 = vld [vmem:[%s2] sm:$0x1]
  %v1291 = vadd.f32 %v1289, 1e-05
  %v1292 = vrsqrt.pop %v1291
  %v1293 = vmul.f32 %v1290, %v1292
  %v1294 = vld [vmem:[%s3] sm:$0x1]
  %v1295 = vmul.f32 %v1272, %v1293
  %v1296 = vsub.f32 %v1294, %v1295
  %v1298 = vlaneseq
  %v1299 = vshrl.u32 %v1298, 7
  %v1300 = vsub.s32 0, %v1299
  %v1301 = vrot.slane %v1293, %v1300
  %1302 = vrot.lane.b32.xlu0 %v1301, 32
  %v1303 = vpop.permute.xlu0 %1302
  %1305 = vrot.lane.b32.xlu0 %v1301, 64
  %v1306 = vpop.permute.xlu0 %1305
  %1308 = vrot.lane.b32.xlu0 %v1301, 96
  %v1309 = vpop.permute.xlu0 %1308
  %vm1311 = vcmask 261120
  %v1312 = vsel %vm1311, %v1293, %v1303
  %vm1313 = vcmask 523264
  %v1314 = vsel %vm1313, %v1312, %v1306
  %vm1315 = vcmask 785408
  %v1316 = vsel %vm1315, %v1314, %v1309
  %v1317 = vlaneseq
  %v1318 = vshrl.u32 %v1317, 7
  %v1319 = vsub.s32 0, %v1318
  %v1320 = vrot.slane %v1316, %v1319
  %v1321 = vmul.f32 %v309, %v1320
  %v1322 = vmul.f32 %v312, %v1320
  %v1323 = vmul.f32 %v317, %v1320
  %v1324 = vmul.f32 %v320, %v1320
  %v1325 = vmul.f32 %v325, %v1320
  %v1326 = vmul.f32 %v328, %v1320
  %v1327 = vmul.f32 %v333, %v1320
  %v1328 = vmul.f32 %v336, %v1320
  %v1329 = vmul.f32 %v341, %v1320
  %v1330 = vmul.f32 %v344, %v1320
  %v1331 = vmul.f32 %v349, %v1320
  %v1332 = vmul.f32 %v352, %v1320
  %v1333 = vmul.f32 %v357, %v1320
  %v1334 = vmul.f32 %v360, %v1320
  %v1335 = vmul.f32 %v365, %v1320
  %v1336 = vmul.f32 %v368, %v1320
  %v1337 = vmul.f32 %v373, %v1320
  %v1338 = vmul.f32 %v376, %v1320
  %v1339 = vmul.f32 %v381, %v1320
  %v1340 = vmul.f32 %v384, %v1320
  %v1341 = vmul.f32 %v389, %v1320
  %v1343 = vlaneseq
  %v1344 = vshrl.u32 %v1343, 7
  %v1345 = vsub.s32 0, %v1344
  %v1346 = vrot.slane %v1296, %v1345
  %1347 = vrot.lane.b32.xlu0 %v1346, 32
  %v1348 = vpop.permute.xlu0 %1347
  %1350 = vrot.lane.b32.xlu0 %v1346, 64
  %v1351 = vpop.permute.xlu0 %1350
  %1353 = vrot.lane.b32.xlu0 %v1346, 96
  %v1354 = vpop.permute.xlu0 %1353
  %v1356 = vsel %vm1311, %v1296, %v1348
  %v1357 = vsel %vm1313, %v1356, %v1351
  %v1358 = vsel %vm1315, %v1357, %v1354
  %v1359 = vlaneseq
  %v1360 = vshrl.u32 %v1359, 7
  %v1361 = vsub.s32 0, %v1360
  %v1362 = vrot.slane %v1358, %v1361
  %v1363 = vadd.f32 %v1321, %v1362
  %v1364 = vadd.f32 %v1322, %v1362
  %v1365 = vadd.f32 %v1323, %v1362
  %v1366 = vadd.f32 %v1324, %v1362
  %v1367 = vadd.f32 %v1325, %v1362
  %v1368 = vadd.f32 %v1326, %v1362
  %v1369 = vadd.f32 %v1327, %v1362
  %v1370 = vadd.f32 %v1328, %v1362
  %v1371 = vadd.f32 %v1329, %v1362
  %v1372 = vadd.f32 %v1330, %v1362
  %v1373 = vadd.f32 %v1331, %v1362
  %v1374 = vadd.f32 %v1332, %v1362
  %v1375 = vadd.f32 %v1333, %v1362
  %v1376 = vadd.f32 %v1334, %v1362
  %v1377 = vadd.f32 %v1335, %v1362
  %v1378 = vadd.f32 %v1336, %v1362
  %v1379 = vadd.f32 %v1337, %v1362
  %v1380 = vadd.f32 %v1338, %v1362
  %v1381 = vadd.f32 %v1339, %v1362
  %v1382 = vadd.f32 %v1340, %v1362
  %v1383 = vadd.f32 %v1341, %v1362
  %v1384 = vmax.f32 %v1363, 0.0
  %v1385 = vmax.f32 %v1364, 0.0
  %v1386 = vmax.f32 %v1365, 0.0
  %v1387 = vmax.f32 %v1366, 0.0
  %v1388 = vmax.f32 %v1367, 0.0
  %v1389 = vmax.f32 %v1368, 0.0
  %v1390 = vmax.f32 %v1369, 0.0
  %v1391 = vmax.f32 %v1370, 0.0
  %v1392 = vmax.f32 %v1371, 0.0
  %v1393 = vmax.f32 %v1372, 0.0
  %v1394 = vmax.f32 %v1373, 0.0
  %v1395 = vmax.f32 %v1374, 0.0
  %v1396 = vmax.f32 %v1375, 0.0
  %v1397 = vmax.f32 %v1376, 0.0
  %v1398 = vmax.f32 %v1377, 0.0
  %v1399 = vmax.f32 %v1378, 0.0
  %v1400 = vmax.f32 %v1379, 0.0
  %v1401 = vmax.f32 %v1380, 0.0
  %v1402 = vmax.f32 %v1381, 0.0
  %v1403 = vmax.f32 %v1382, 0.0
  %v1404 = vmax.f32 %v1383, 0.0
  %v1405 = vpack.c.bf16 %v1385, %v1384
  %v1406 = vpack.c.bf16 %v1387, %v1386
  %v1407 = vpack.c.bf16 %v1389, %v1388
  %v1408 = vpack.c.bf16 %v1391, %v1390
  %v1409 = vpack.c.bf16 %v1393, %v1392
  %v1410 = vpack.c.bf16 %v1395, %v1394
  %v1411 = vpack.c.bf16 %v1397, %v1396
  %v1412 = vpack.c.bf16 %v1399, %v1398
  %v1413 = vpack.c.bf16 %v1401, %v1400
  %v1414 = vpack.c.bf16 %v1403, %v1402
  %v1415 = vpack.c.bf16 %v1404, %v1404
  %v1427 = vunpack.c.l.b16 %v1405
  %v1428 = vunpack.c.h.b16 %v1405
  %v1429 = vunpack.c.l.b16 %v1406
  %v1430 = vunpack.c.h.b16 %v1406
  %v1431 = vunpack.c.l.b16 %v1407
  %v1432 = vunpack.c.h.b16 %v1407
  %v1433 = vunpack.c.l.b16 %v1408
  %v1434 = vunpack.c.h.b16 %v1408
  %v1435 = vunpack.c.l.b16 %v1409
  %v1436 = vunpack.c.h.b16 %v1409
  %v1437 = vunpack.c.l.b16 %v1410
  %v1438 = vunpack.c.h.b16 %v1410
  %v1439 = vunpack.c.l.b16 %v1411
  %v1440 = vunpack.c.h.b16 %v1411
  %v1441 = vunpack.c.l.b16 %v1412
  %v1442 = vunpack.c.h.b16 %v1412
  %v1443 = vunpack.c.l.b16 %v1413
  %v1444 = vunpack.c.h.b16 %v1413
  %v1445 = vunpack.c.l.b16 %v1414
  %v1446 = vunpack.c.h.b16 %v1414
  %v1447 = vunpack.c.l.b16 %v1415
  %v1448 = vpack.c.b16 %v1427, %v1427
  %v1449 = vpack.c.b16 %v1428, %v1428
  %v1450 = vpack.c.b16 %v1429, %v1429
  %v1451 = vpack.c.b16 %v1430, %v1430
  %v1452 = vpack.c.b16 %v1431, %v1431
  %v1453 = vpack.c.b16 %v1432, %v1432
  %v1454 = vpack.c.b16 %v1433, %v1433
  %v1455 = vpack.c.b16 %v1434, %v1434
  %v1456 = vpack.c.b16 %v1435, %v1435
  %v1457 = vpack.c.b16 %v1436, %v1436
  %v1458 = vpack.c.b16 %v1437, %v1437
  %v1459 = vpack.c.b16 %v1438, %v1438
  %v1460 = vpack.c.b16 %v1439, %v1439
  %v1461 = vpack.c.b16 %v1440, %v1440
  %v1462 = vpack.c.b16 %v1441, %v1441
  %v1463 = vpack.c.b16 %v1442, %v1442
  %v1464 = vpack.c.b16 %v1443, %v1443
  %v1465 = vpack.c.b16 %v1444, %v1444
  %v1466 = vpack.c.b16 %v1445, %v1445
  %v1467 = vpack.c.b16 %v1446, %v1446
  %v1468 = vpack.c.b16 %v1447, %v1447
  %1490 = vst [vmem:[%s4] sm:$0xf] %v1448
  %1491 = vst [vmem:[%s4 + $0x4] sm:$0xf] %v1449
  %1492 = vst [vmem:[%s4 + $0x8] sm:$0xf] %v1450
  %1493 = vst [vmem:[%s4 + $0xc] sm:$0xf] %v1451
  %1494 = vst [vmem:[%s4 + $0x10] sm:$0xf] %v1452
  %1495 = vst [vmem:[%s4 + $0x14] sm:$0xf] %v1453
  %1496 = vst [vmem:[%s4 + $0x18] sm:$0xf] %v1454
  %1497 = vst [vmem:[%s4 + $0x1c] sm:$0xf] %v1455
  %1498 = vst [vmem:[%s4 + $0x20] sm:$0xf] %v1456
  %1499 = vst [vmem:[%s4 + $0x24] sm:$0xf] %v1457
  %1500 = vst [vmem:[%s4 + $0x28] sm:$0xf] %v1458
  %1501 = vst [vmem:[%s4 + $0x2c] sm:$0xf] %v1459
  %1502 = vst [vmem:[%s4 + $0x30] sm:$0xf] %v1460
  %1503 = vst [vmem:[%s4 + $0x34] sm:$0xf] %v1461
  %1504 = vst [vmem:[%s4 + $0x38] sm:$0xf] %v1462
  %1505 = vst [vmem:[%s4 + $0x3c] sm:$0xf] %v1463
  %1506 = vst [vmem:[%s4 + $0x40] sm:$0xf] %v1464
  %1507 = vst [vmem:[%s4 + $0x44] sm:$0xf] %v1465
  %1508 = vst [vmem:[%s4 + $0x48] sm:$0xf] %v1466
  %1509 = vst [vmem:[%s4 + $0x4c] sm:$0xf] %v1467
  %1510 = vst [vmem:[%s4 + $0x50] sm:$0x1] %v1468
  // Predicated region
  $region18: #{_forward_impl.6} parent=0 // pred_check
    _
  $region19: #{_forward_impl.6} parent=0 // pred_check_branch
    %1512 = sbr.rel (0) target = $region21
  $region20: #{_forward_impl.6} parent=0 // pred_region
    _
  $region21: #{_forward_impl.6} parent=0 // pred_fallthru
    _
  // Predicated region
  $region22: #{_forward_impl.6} parent=0 // pred_check
    _
  $region23: #{_forward_impl.6} parent=0 // pred_check_branch
    %1514 = sbr.rel (0) target = $region25
  $region24: #{_forward_impl.6} parent=0 // pred_region
    _
  $region25: #{_forward_impl.6} parent=0 // pred_fallthru
    _

// kernel: _forward_impl.7
$region0: #{_forward_impl.7}
  #allocation0 [shape = 'u32[]', space=smem, size = 0x4, offset = 0x4, fixed_abs, tag = 'smem constant byte address 0x4 - core index']
  #allocation1 [shape = 'u32[144,128]{1,0:T(1,128)}', space=vmem, size = 0x12000, scoped, tag = 'internal scratch']
  %s0 = inlined_call_operand.vmem [shape: bf16[578,128], index: 0, kind: input, shape index: {}]
  %s1 = inlined_call_operand.vmem [shape: bf16[128,128], index: 1, kind: input, shape index: {}]
  %s2 = inlined_call_operand.vmem [shape: bf16[578,128], index: 2, kind: output, shape index: {}]
  %s3 = sld [smem:[#allocation0]]
  $region18: #{_forward_impl.7} parent=0
    _
  %s5 = ssub.s32 1, %s3
  %s6 = scalar_select 0, %s5, %s3
  // Predicated region
  $region2: #{_forward_impl.7} parent=0 // pred_check
    _
  $region3: #{_forward_impl.7} parent=0 // pred_check_branch
    %8 = sbr.rel (0) target = $region5
  $region4: #{_forward_impl.7} parent=0 // pred_region
    _
  $region5: #{_forward_impl.7} parent=0 // pred_fallthru
    _
  // Predicated region
  $region6: #{_forward_impl.7} parent=0 // pred_check
    _
  $region7: #{_forward_impl.7} parent=0 // pred_check_branch
    %10 = sbr.rel (0) target = $region9
  $region8: #{_forward_impl.7} parent=0 // pred_region
    _
  $region9: #{_forward_impl.7} parent=0 // pred_fallthru
    _
  %v12 = vld [vmem:[%s0] sm:$0xf]
  %v13 = vld [vmem:[%s0 + $0x4] sm:$0xf]
  %v14 = vld [vmem:[%s0 + $0x8] sm:$0xf]
  %v15 = vld [vmem:[%s0 + $0xc] sm:$0xf]
  %v16 = vld [vmem:[%s0 + $0x10] sm:$0xf]
  %v17 = vld [vmem:[%s0 + $0x14] sm:$0xf]
  %v18 = vld [vmem:[%s0 + $0x18] sm:$0xf]
  %v19 = vld [vmem:[%s0 + $0x1c] sm:$0xf]
  %v20 = vld [vmem:[%s0 + $0x20] sm:$0xf]
  %v21 = vld [vmem:[%s0 + $0x24] sm:$0xf]
  %v22 = vld [vmem:[%s0 + $0x28] sm:$0xf]
  %v23 = vld [vmem:[%s0 + $0x2c] sm:$0xf]
  %v24 = vld [vmem:[%s0 + $0x30] sm:$0xf]
  %v25 = vld [vmem:[%s0 + $0x34] sm:$0xf]
  %v26 = vld [vmem:[%s0 + $0x38] sm:$0xf]
  %v27 = vld [vmem:[%s0 + $0x3c] sm:$0xf]
  %v28 = vld [vmem:[%s0 + $0x40] sm:$0xf]
  %v29 = vld [vmem:[%s0 + $0x44] sm:$0xf]
  %v30 = vld [vmem:[%s0 + $0x48] sm:$0xf]
  %v31 = vld [vmem:[%s0 + $0x4c] sm:$0xf]
  %v32 = vld [vmem:[%s0 + $0x50] sm:$0xf]
  %v33 = vld [vmem:[%s0 + $0x54] sm:$0xf]
  %v34 = vld [vmem:[%s0 + $0x58] sm:$0xf]
  %v35 = vld [vmem:[%s0 + $0x5c] sm:$0xf]
  %v36 = vld [vmem:[%s0 + $0x60] sm:$0xf]
  %v37 = vld [vmem:[%s0 + $0x64] sm:$0xf]
  %v38 = vld [vmem:[%s0 + $0x68] sm:$0xf]
  %v39 = vld [vmem:[%s0 + $0x6c] sm:$0xf]
  %v40 = vld [vmem:[%s0 + $0x70] sm:$0xf]
  %v41 = vld [vmem:[%s0 + $0x74] sm:$0xf]
  %v42 = vld [vmem:[%s0 + $0x78] sm:$0xf]
  %v43 = vld [vmem:[%s0 + $0x7c] sm:$0xf]
  %v44 = vld [vmem:[%s0 + $0x80] sm:$0xf]
  %v45 = vld [vmem:[%s0 + $0x84] sm:$0xf]
  %v46 = vld [vmem:[%s0 + $0x88] sm:$0xf]
  %v47 = vld [vmem:[%s0 + $0x8c] sm:$0xf]
  %v48 = vld [vmem:[%s0 + $0x90] sm:$0xf]
  %v49 = vld [vmem:[%s0 + $0x94] sm:$0xf]
  %v50 = vld [vmem:[%s0 + $0x98] sm:$0xf]
  %v51 = vld [vmem:[%s0 + $0x9c] sm:$0xf]
  %v52 = vld [vmem:[%s0 + $0xa0] sm:$0xf]
  %v53 = vld [vmem:[%s0 + $0xa4] sm:$0xf]
  %v54 = vld [vmem:[%s0 + $0xa8] sm:$0xf]
  %v55 = vld [vmem:[%s0 + $0xac] sm:$0xf]
  %v56 = vld [vmem:[%s0 + $0xb0] sm:$0xf]
  %v57 = vld [vmem:[%s0 + $0xb4] sm:$0xf]
  %v58 = vld [vmem:[%s0 + $0xb8] sm:$0xf]
  %v59 = vld [vmem:[%s0 + $0xbc] sm:$0xf]
  %v60 = vld [vmem:[%s0 + $0xc0] sm:$0xf]
  %v61 = vld [vmem:[%s0 + $0xc4] sm:$0xf]
  %v62 = vld [vmem:[%s0 + $0xc8] sm:$0xf]
  %v63 = vld [vmem:[%s0 + $0xcc] sm:$0xf]
  %v64 = vld [vmem:[%s0 + $0xd0] sm:$0xf]
  %v65 = vld [vmem:[%s0 + $0xd4] sm:$0xf]
  %v66 = vld [vmem:[%s0 + $0xd8] sm:$0xf]
  %v67 = vld [vmem:[%s0 + $0xdc] sm:$0xf]
  %v68 = vld [vmem:[%s0 + $0xe0] sm:$0xf]
  %v69 = vld [vmem:[%s0 + $0xe4] sm:$0xf]
  %v70 = vld [vmem:[%s0 + $0xe8] sm:$0xf]
  %v71 = vld [vmem:[%s0 + $0xec] sm:$0xf]
  %v72 = vld [vmem:[%s0 + $0xf0] sm:$0xf]
  %v73 = vld [vmem:[%s0 + $0xf4] sm:$0xf]
  %v74 = vld [vmem:[%s0 + $0xf8] sm:$0xf]
  %v75 = vld [vmem:[%s0 + $0xfc] sm:$0xf]
  %v76 = vld [vmem:[%s0 + $0x100] sm:$0xf]
  %v77 = vld [vmem:[%s0 + $0x104] sm:$0xf]
  %v78 = vld [vmem:[%s0 + $0x108] sm:$0xf]
  %v79 = vld [vmem:[%s0 + $0x10c] sm:$0xf]
  %v80 = vld [vmem:[%s0 + $0x110] sm:$0xf]
  %v81 = vld [vmem:[%s0 + $0x114] sm:$0xf]
  %v82 = vld [vmem:[%s0 + $0x118] sm:$0xf]
  %v83 = vld [vmem:[%s0 + $0x11c] sm:$0xf]
  %v84 = vld [vmem:[%s0 + $0x120] sm:$0x1]
  %v85 = vld [vmem:[%s1] sm:$0xf]
  %v86 = vld [vmem:[%s1 + $0x4] sm:$0xf]
  %v87 = vld [vmem:[%s1 + $0x8] sm:$0xf]
  %v88 = vld [vmem:[%s1 + $0xc] sm:$0xf]
  %v89 = vld [vmem:[%s1 + $0x10] sm:$0xf]
  %v90 = vld [vmem:[%s1 + $0x14] sm:$0xf]
  %v91 = vld [vmem:[%s1 + $0x18] sm:$0xf]
  %v92 = vld [vmem:[%s1 + $0x1c] sm:$0xf]
  %v93 = vld [vmem:[%s1 + $0x20] sm:$0xf]
  %v94 = vld [vmem:[%s1 + $0x24] sm:$0xf]
  %v95 = vld [vmem:[%s1 + $0x28] sm:$0xf]
  %v96 = vld [vmem:[%s1 + $0x2c] sm:$0xf]
  %v97 = vld [vmem:[%s1 + $0x30] sm:$0xf]
  %v98 = vld [vmem:[%s1 + $0x34] sm:$0xf]
  %v99 = vld [vmem:[%s1 + $0x38] sm:$0xf]
  %v100 = vld [vmem:[%s1 + $0x3c] sm:$0xf]
  %v174 = vunpack.c.l.b16 %v12
  %v175 = vunpack.c.l.b16 %v13
  %v176 = vunpack.c.l.b16 %v14
  %v177 = vunpack.c.l.b16 %v15
  %v178 = vunpack.c.l.b16 %v16
  %v179 = vunpack.c.l.b16 %v17
  %v180 = vunpack.c.l.b16 %v18
  %v181 = vunpack.c.l.b16 %v19
  %v182 = vunpack.c.l.b16 %v20
  %v183 = vunpack.c.l.b16 %v21
  %v184 = vunpack.c.l.b16 %v22
  %v185 = vunpack.c.l.b16 %v23
  %v186 = vunpack.c.l.b16 %v24
  %v187 = vunpack.c.l.b16 %v25
  %v188 = vunpack.c.l.b16 %v26
  %v189 = vunpack.c.l.b16 %v27
  %v190 = vunpack.c.l.b16 %v28
  %v191 = vunpack.c.l.b16 %v29
  %v192 = vunpack.c.l.b16 %v30
  %v193 = vunpack.c.l.b16 %v31
  %v194 = vunpack.c.l.b16 %v32
  %v195 = vunpack.c.l.b16 %v33
  %v196 = vunpack.c.l.b16 %v34
  %v197 = vunpack.c.l.b16 %v35
  %v198 = vunpack.c.l.b16 %v36
  %v199 = vunpack.c.l.b16 %v37
  %v200 = vunpack.c.l.b16 %v38
  %v201 = vunpack.c.l.b16 %v39
  %v202 = vunpack.c.l.b16 %v40
  %v203 = vunpack.c.l.b16 %v41
  %v204 = vunpack.c.l.b16 %v42
  %v205 = vunpack.c.l.b16 %v43
  %v206 = vunpack.c.l.b16 %v44
  %v207 = vunpack.c.l.b16 %v45
  %v208 = vunpack.c.l.b16 %v46
  %v209 = vunpack.c.l.b16 %v47
  %v210 = vunpack.c.l.b16 %v48
  %v211 = vunpack.c.l.b16 %v49
  %v212 = vunpack.c.l.b16 %v50
  %v213 = vunpack.c.l.b16 %v51
  %v214 = vunpack.c.l.b16 %v52
  %v215 = vunpack.c.l.b16 %v53
  %v216 = vunpack.c.l.b16 %v54
  %v217 = vunpack.c.l.b16 %v55
  %v218 = vunpack.c.l.b16 %v56
  %v219 = vunpack.c.l.b16 %v57
  %v220 = vunpack.c.l.b16 %v58
  %v221 = vunpack.c.l.b16 %v59
  %v222 = vunpack.c.l.b16 %v60
  %v223 = vunpack.c.l.b16 %v61
  %v224 = vunpack.c.l.b16 %v62
  %v225 = vunpack.c.l.b16 %v63
  %v226 = vunpack.c.l.b16 %v64
  %v227 = vunpack.c.l.b16 %v65
  %v228 = vunpack.c.l.b16 %v66
  %v229 = vunpack.c.l.b16 %v67
  %v230 = vunpack.c.l.b16 %v68
  %v231 = vunpack.c.l.b16 %v69
  %v232 = vunpack.c.l.b16 %v70
  %v233 = vunpack.c.l.b16 %v71
  %v234 = vunpack.c.l.b16 %v72
  %v235 = vunpack.c.l.b16 %v73
  %v236 = vunpack.c.l.b16 %v74
  %v237 = vunpack.c.l.b16 %v75
  %v238 = vunpack.c.l.b16 %v76
  %v239 = vunpack.c.l.b16 %v77
  %v240 = vunpack.c.l.b16 %v78
  %v241 = vunpack.c.l.b16 %v79
  %v242 = vunpack.c.l.b16 %v80
  %v243 = vunpack.c.l.b16 %v81
  %v244 = vunpack.c.l.b16 %v82
  %v245 = vunpack.c.l.b16 %v83
  %v246 = vunpack.c.l.b16 %v84
  %v247 = vpack.c.b16 %v175, %v174
  %v248 = vpack.c.b16 %v177, %v176
  %v249 = vpack.c.b16 %v179, %v178
  %v250 = vpack.c.b16 %v181, %v180
  %v251 = vpack.c.b16 %v183, %v182
  %v252 = vpack.c.b16 %v185, %v184
  %v253 = vpack.c.b16 %v187, %v186
  %v254 = vpack.c.b16 %v189, %v188
  %v255 = vpack.c.b16 %v191, %v190
  %v256 = vpack.c.b16 %v193, %v192
  %v257 = vpack.c.b16 %v195, %v194
  %v258 = vpack.c.b16 %v197, %v196
  %v259 = vpack.c.b16 %v199, %v198
  %v260 = vpack.c.b16 %v201, %v200
  %v261 = vpack.c.b16 %v203, %v202
  %v262 = vpack.c.b16 %v205, %v204
  %v263 = vpack.c.b16 %v207, %v206
  %v264 = vpack.c.b16 %v209, %v208
  %v265 = vpack.c.b16 %v211, %v210
  %v266 = vpack.c.b16 %v213, %v212
  %v267 = vpack.c.b16 %v215, %v214
  %v268 = vpack.c.b16 %v217, %v216
  %v269 = vpack.c.b16 %v219, %v218
  %v270 = vpack.c.b16 %v221, %v220
  %v271 = vpack.c.b16 %v223, %v222
  %v272 = vpack.c.b16 %v225, %v224
  %v273 = vpack.c.b16 %v227, %v226
  %v274 = vpack.c.b16 %v229, %v228
  %v275 = vpack.c.b16 %v231, %v230
  %v276 = vpack.c.b16 %v233, %v232
  %v277 = vpack.c.b16 %v235, %v234
  %v278 = vpack.c.b16 %v237, %v236
  %v279 = vpack.c.b16 %v239, %v238
  %v280 = vpack.c.b16 %v241, %v240
  %v281 = vpack.c.b16 %v243, %v242
  %v282 = vpack.c.b16 %v245, %v244
  %v283 = vpack.c.b16 %v246, %v246
  %v337 = vunpack.c.l.b16 %v85
  %v338 = vunpack.c.l.b16 %v86
  %v339 = vunpack.c.l.b16 %v87
  %v340 = vunpack.c.l.b16 %v88
  %v341 = vunpack.c.l.b16 %v89
  %v342 = vunpack.c.l.b16 %v90
  %v343 = vunpack.c.l.b16 %v91
  %v344 = vunpack.c.l.b16 %v92
  %v345 = vunpack.c.l.b16 %v93
  %v346 = vunpack.c.l.b16 %v94
  %v347 = vunpack.c.l.b16 %v95
  %v348 = vunpack.c.l.b16 %v96
  %v349 = vunpack.c.l.b16 %v97
  %v350 = vunpack.c.l.b16 %v98
  %v351 = vunpack.c.l.b16 %v99
  %v352 = vunpack.c.l.b16 %v100
  %v353 = vpack.c.b16 %v338, %v337
  %v354 = vpack.c.b16 %v340, %v339
  %v355 = vpack.c.b16 %v342, %v341
  %v356 = vpack.c.b16 %v344, %v343
  %v357 = vpack.c.b16 %v346, %v345
  %v358 = vpack.c.b16 %v348, %v347
  %v359 = vpack.c.b16 %v350, %v349
  %v360 = vpack.c.b16 %v352, %v351
  %369 = vmatprep.subr.bf16.mxu0 0
  %370 = vmatpush1.bf16.msra.mxu0 %v353
  %371 = vmatprep.subr.bf16.mxu0 0
  %372 = vmatpush1.bf16.msra.mxu0 %v354
  %373 = vmatprep.subr.bf16.mxu0 0
  %374 = vmatpush1.bf16.msra.mxu0 %v355
  %375 = vmatprep.subr.bf16.mxu0 0
  %376 = vmatpush1.bf16.msra.mxu0 %v356
  %377 = vmatprep.subr.bf16.mxu0 0
  %378 = vmatpush1.bf16.msra.mxu0 %v357
  %379 = vmatprep.subr.bf16.mxu0 0
  %380 = vmatpush1.bf16.msra.mxu0 %v358
  %381 = vmatprep.subr.bf16.mxu0 0
  %382 = vmatpush1.bf16.msra.mxu0 %v359
  %383 = vmatprep.subr.bf16.mxu0 0
  %384 = vmatpush1.bf16.msra.mxu0 %v360
  %385 = vmatprep.subr.bf16.mxu0 0
  %386 = vmatpush1.bf16.msra.mxu0 0
  %387 = vmatprep.subr.bf16.mxu0 0
  %388 = vmatpush1.bf16.msra.mxu0 0
  %389 = vmatprep.subr.bf16.mxu0 0
  %390 = vmatpush1.bf16.msra.mxu0 0
  %391 = vmatprep.subr.bf16.mxu0 0
  %392 = vmatpush1.bf16.msra.mxu0 0
  %393 = vmatprep.subr.bf16.mxu0 0
  %394 = vmatpush1.bf16.msra.mxu0 0
  %395 = vmatprep.subr.bf16.mxu0 0
  %396 = vmatpush1.bf16.msra.mxu0 0
  %397 = vmatprep.subr.bf16.mxu0 0
  %398 = vmatpush1.bf16.msra.mxu0 0
  %399 = vmatprep.subr.bf16.mxu0 0
  %400 = vmatpush1.bf16.msra.mxu0 0
  %401 = vmatprep.mubr.bf16.mxu0 0
  %402 = vmatmul.mubr.bf16.gmra.mrb[0].mxu0 %v247
  %v403 = vpop.f32.mrb[0].mxu0
  %v404 = vadd.f32 0.0, %v403
  %v405 = vpop.f32.mrb[0].mxu0
  %v406 = vpop.f32.mrb[0].mxu0
  %v407 = vadd.f32 0.0, %v406
  %v408 = vpop.f32.mrb[0].mxu0
  %409 = vmatprep.mubr.bf16.mxu0 0
  %410 = vmatmul.mubr.bf16.gmra.mrb[0].mxu0 %v248
  %v411 = vpop.f32.mrb[0].mxu0
  %v412 = vadd.f32 0.0, %v411
  %v413 = vpop.f32.mrb[0].mxu0
  %v414 = vpop.f32.mrb[0].mxu0
  %v415 = vadd.f32 0.0, %v414
  %v416 = vpop.f32.mrb[0].mxu0
  %417 = vmatprep.mubr.bf16.mxu0 0
  %418 = vmatmul.mubr.bf16.gmra.mrb[0].mxu0 %v249
  %v419 = vpop.f32.mrb[0].mxu0
  %v420 = vadd.f32 0.0, %v419
  %v421 = vpop.f32.mrb[0].mxu0
  %v422 = vpop.f32.mrb[0].mxu0
  %v423 = vadd.f32 0.0, %v422
  %v424 = vpop.f32.mrb[0].mxu0
  %425 = vmatprep.mubr.bf16.mxu0 0
  %426 = vmatmul.mubr.bf16.gmra.mrb[0].mxu0 %v250
  %v427 = vpop.f32.mrb[0].mxu0
  %v428 = vadd.f32 0.0, %v427
  %v429 = vpop.f32.mrb[0].mxu0
  %v430 = vpop.f32.mrb[0].mxu0
  %v431 = vadd.f32 0.0, %v430
  %v432 = vpop.f32.mrb[0].mxu0
  %433 = vmatprep.mubr.bf16.mxu0 0
  %434 = vmatmul.mubr.bf16.gmra.mrb[0].mxu0 %v251
  %v435 = vpop.f32.mrb[0].mxu0
  %v436 = vadd.f32 0.0, %v435
  %v437 = vpop.f32.mrb[0].mxu0
  %v438 = vpop.f32.mrb[0].mxu0
  %v439 = vadd.f32 0.0, %v438
  %v440 = vpop.f32.mrb[0].mxu0
  %441 = vmatprep.mubr.bf16.mxu0 0
  %442 = vmatmul.mubr.bf16.gmra.mrb[0].mxu0 %v252
  %v443 = vpop.f32.mrb[0].mxu0
  %v444 = vadd.f32 0.0, %v443
  %v445 = vpop.f32.mrb[0].mxu0
  %v446 = vpop.f32.mrb[0].mxu0
  %v447 = vadd.f32 0.0, %v446
  %v448 = vpop.f32.mrb[0].mxu0
  %449 = vmatprep.mubr.bf16.mxu0 0
  %450 = vmatmul.mubr.bf16.gmra.mrb[0].mxu0 %v253
  %v451 = vpop.f32.mrb[0].mxu0
  %v452 = vadd.f32 0.0, %v451
  %v453 = vpop.f32.mrb[0].mxu0
  %v454 = vpop.f32.mrb[0].mxu0
  %v455 = vadd.f32 0.0, %v454
  %v456 = vpop.f32.mrb[0].mxu0
  %457 = vmatprep.mubr.bf16.mxu0 0
  %458 = vmatmul.mubr.bf16.gmra.mrb[0].mxu0 %v254
  %v459 = vpop.f32.mrb[0].mxu0
  %v460 = vadd.f32 0.0, %v459
  %v461 = vpop.f32.mrb[0].mxu0
  %v462 = vpop.f32.mrb[0].mxu0
  %v463 = vadd.f32 0.0, %v462
  %v464 = vpop.f32.mrb[0].mxu0
  %465 = vmatprep.mubr.bf16.mxu0 0
  %466 = vmatmul.mubr.bf16.gmra.mrb[0].mxu0 %v255
  %v467 = vpop.f32.mrb[0].mxu0
  %v468 = vadd.f32 0.0, %v467
  %v469 = vpop.f32.mrb[0].mxu0
  %v470 = vpop.f32.mrb[0].mxu0
  %v471 = vadd.f32 0.0, %v470
  %v472 = vpop.f32.mrb[0].mxu0
  %473 = vmatprep.mubr.bf16.mxu0 0
  %474 = vmatmul.mubr.bf16.gmra.mrb[0].mxu0 %v256
  %v475 = vpop.f32.mrb[0].mxu0
  %v476 = vadd.f32 0.0, %v475
  %v477 = vpop.f32.mrb[0].mxu0
  %v478 = vpop.f32.mrb[0].mxu0
  %v479 = vadd.f32 0.0, %v478
  %v480 = vpop.f32.mrb[0].mxu0
  %481 = vmatprep.mubr.bf16.mxu0 0
  %482 = vmatmul.mubr.bf16.gmra.mrb[0].mxu0 %v257
  %v483 = vpop.f32.mrb[0].mxu0
  %v484 = vadd.f32 0.0, %v483
  %v485 = vpop.f32.mrb[0].mxu0
  %v486 = vpop.f32.mrb[0].mxu0
  %v487 = vadd.f32 0.0, %v486
  %v488 = vpop.f32.mrb[0].mxu0
  %489 = vmatprep.mubr.bf16.mxu0 0
  %490 = vmatmul.mubr.bf16.gmra.mrb[0].mxu0 %v258
  %v491 = vpop.f32.mrb[0].mxu0
  %v492 = vadd.f32 0.0, %v491
  %v493 = vpop.f32.mrb[0].mxu0
  %v494 = vpop.f32.mrb[0].mxu0
  %v495 = vadd.f32 0.0, %v494
  %v496 = vpop.f32.mrb[0].mxu0
  %497 = vmatprep.mubr.bf16.mxu0 0
  %498 = vmatmul.mubr.bf16.gmra.mrb[0].mxu0 %v259
  %v499 = vpop.f32.mrb[0].mxu0
  %v500 = vadd.f32 0.0, %v499
  %v501 = vpop.f32.mrb[0].mxu0
  %v502 = vpop.f32.mrb[0].mxu0
  %v503 = vadd.f32 0.0, %v502
  %v504 = vpop.f32.mrb[0].mxu0
  %505 = vmatprep.mubr.bf16.mxu0 0
  %506 = vmatmul.mubr.bf16.gmra.mrb[0].mxu0 %v260
  %v507 = vpop.f32.mrb[0].mxu0
  %v508 = vadd.f32 0.0, %v507
  %v509 = vpop.f32.mrb[0].mxu0
  %v510 = vpop.f32.mrb[0].mxu0
  %v511 = vadd.f32 0.0, %v510
  %v512 = vpop.f32.mrb[0].mxu0
  %513 = vmatprep.mubr.bf16.mxu0 0
  %514 = vmatmul.mubr.bf16.gmra.mrb[0].mxu0 %v261
  %v515 = vpop.f32.mrb[0].mxu0
  %v516 = vadd.f32 0.0, %v515
  %v517 = vpop.f32.mrb[0].mxu0
  %v518 = vpop.f32.mrb[0].mxu0
  %v519 = vadd.f32 0.0, %v518
  %v520 = vpop.f32.mrb[0].mxu0
  %521 = vmatprep.mubr.bf16.mxu0 0
  %522 = vmatmul.mubr.bf16.gmra.mrb[0].mxu0 %v262
  %v523 = vpop.f32.mrb[0].mxu0
  %v524 = vadd.f32 0.0, %v523
  %v525 = vpop.f32.mrb[0].mxu0
  %v526 = vpop.f32.mrb[0].mxu0
  %v527 = vadd.f32 0.0, %v526
  %v528 = vpop.f32.mrb[0].mxu0
  %529 = vmatprep.mubr.bf16.mxu0 0
  %530 = vmatmul.mubr.bf16.gmra.mrb[0].mxu0 %v263
  %v531 = vpop.f32.mrb[0].mxu0
  %v532 = vadd.f32 0.0, %v531
  %v533 = vpop.f32.mrb[0].mxu0
  %v534 = vpop.f32.mrb[0].mxu0
  %v535 = vadd.f32 0.0, %v534
  %v536 = vpop.f32.mrb[0].mxu0
  %537 = vmatprep.mubr.bf16.mxu0 0
  %538 = vmatmul.mubr.bf16.gmra.mrb[0].mxu0 %v264
  %v539 = vpop.f32.mrb[0].mxu0
  %v540 = vadd.f32 0.0, %v539
  %v541 = vpop.f32.mrb[0].mxu0
  %v542 = vpop.f32.mrb[0].mxu0
  %v543 = vadd.f32 0.0, %v542
  %v544 = vpop.f32.mrb[0].mxu0
  %545 = vmatprep.mubr.bf16.mxu0 0
  %546 = vmatmul.mubr.bf16.gmra.mrb[0].mxu0 %v265
  %v547 = vpop.f32.mrb[0].mxu0
  %v548 = vadd.f32 0.0, %v547
  %v549 = vpop.f32.mrb[0].mxu0
  %v550 = vpop.f32.mrb[0].mxu0
  %v551 = vadd.f32 0.0, %v550
  %v552 = vpop.f32.mrb[0].mxu0
  %553 = vmatprep.mubr.bf16.mxu0 0
  %554 = vmatmul.mubr.bf16.gmra.mrb[0].mxu0 %v266
  %v555 = vpop.f32.mrb[0].mxu0
  %v556 = vadd.f32 0.0, %v555
  %v557 = vpop.f32.mrb[0].mxu0
  %v558 = vpop.f32.mrb[0].mxu0
  %v559 = vadd.f32 0.0, %v558
  %v560 = vpop.f32.mrb[0].mxu0
  %561 = vmatprep.mubr.bf16.mxu0 0
  %562 = vmatmul.mubr.bf16.gmra.mrb[0].mxu0 %v267
  %v563 = vpop.f32.mrb[0].mxu0
  %v564 = vadd.f32 0.0, %v563
  %v565 = vpop.f32.mrb[0].mxu0
  %v566 = vpop.f32.mrb[0].mxu0
  %v567 = vadd.f32 0.0, %v566
  %v568 = vpop.f32.mrb[0].mxu0
  %569 = vmatprep.mubr.bf16.mxu0 0
  %570 = vmatmul.mubr.bf16.gmra.mrb[0].mxu0 %v268
  %v571 = vpop.f32.mrb[0].mxu0
  %v572 = vadd.f32 0.0, %v571
  %v573 = vpop.f32.mrb[0].mxu0
  %v574 = vpop.f32.mrb[0].mxu0
  %v575 = vadd.f32 0.0, %v574
  %v576 = vpop.f32.mrb[0].mxu0
  %577 = vmatprep.mubr.bf16.mxu0 0
  %578 = vmatmul.mubr.bf16.gmra.mrb[0].mxu0 %v269
  %v579 = vpop.f32.mrb[0].mxu0
  %v580 = vadd.f32 0.0, %v579
  %v581 = vpop.f32.mrb[0].mxu0
  %v582 = vpop.f32.mrb[0].mxu0
  %v583 = vadd.f32 0.0, %v582
  %v584 = vpop.f32.mrb[0].mxu0
  %585 = vmatprep.mubr.bf16.mxu0 0
  %586 = vmatmul.mubr.bf16.gmra.mrb[0].mxu0 %v270
  %v587 = vpop.f32.mrb[0].mxu0
  %v588 = vadd.f32 0.0, %v587
  %v589 = vpop.f32.mrb[0].mxu0
  %v590 = vpop.f32.mrb[0].mxu0
  %v591 = vadd.f32 0.0, %v590
  %v592 = vpop.f32.mrb[0].mxu0
  %593 = vmatprep.mubr.bf16.mxu0 0
  %594 = vmatmul.mubr.bf16.gmra.mrb[0].mxu0 %v271
  %v595 = vpop.f32.mrb[0].mxu0
  %v596 = vadd.f32 0.0, %v595
  %v597 = vpop.f32.mrb[0].mxu0
  %v598 = vpop.f32.mrb[0].mxu0
  %v599 = vadd.f32 0.0, %v598
  %v600 = vpop.f32.mrb[0].mxu0
  %601 = vmatprep.mubr.bf16.mxu0 0
  %602 = vmatmul.mubr.bf16.gmra.mrb[0].mxu0 %v272
  %v603 = vpop.f32.mrb[0].mxu0
  %v604 = vadd.f32 0.0, %v603
  %v605 = vpop.f32.mrb[0].mxu0
  %v606 = vpop.f32.mrb[0].mxu0
  %v607 = vadd.f32 0.0, %v606
  %v608 = vpop.f32.mrb[0].mxu0
  %609 = vmatprep.mubr.bf16.mxu0 0
  %610 = vmatmul.mubr.bf16.gmra.mrb[0].mxu0 %v273
  %v611 = vpop.f32.mrb[0].mxu0
  %v612 = vadd.f32 0.0, %v611
  %v613 = vpop.f32.mrb[0].mxu0
  %v614 = vpop.f32.mrb[0].mxu0
  %v615 = vadd.f32 0.0, %v614
  %v616 = vpop.f32.mrb[0].mxu0
  %617 = vmatprep.mubr.bf16.mxu0 0
  %618 = vmatmul.mubr.bf16.gmra.mrb[0].mxu0 %v274
  %v619 = vpop.f32.mrb[0].mxu0
  %v620 = vadd.f32 0.0, %v619
  %v621 = vpop.f32.mrb[0].mxu0
  %v622 = vpop.f32.mrb[0].mxu0
  %v623 = vadd.f32 0.0, %v622
  %v624 = vpop.f32.mrb[0].mxu0
  %625 = vmatprep.mubr.bf16.mxu0 0
  %626 = vmatmul.mubr.bf16.gmra.mrb[0].mxu0 %v275
  %v627 = vpop.f32.mrb[0].mxu0
  %v628 = vadd.f32 0.0, %v627
  %v629 = vpop.f32.mrb[0].mxu0
  %v630 = vpop.f32.mrb[0].mxu0
  %v631 = vadd.f32 0.0, %v630
  %v632 = vpop.f32.mrb[0].mxu0
  %633 = vmatprep.mubr.bf16.mxu0 0
  %634 = vmatmul.mubr.bf16.gmra.mrb[0].mxu0 %v276
  %v635 = vpop.f32.mrb[0].mxu0
  %v636 = vadd.f32 0.0, %v635
  %v637 = vpop.f32.mrb[0].mxu0
  %v638 = vpop.f32.mrb[0].mxu0
  %v639 = vadd.f32 0.0, %v638
  %v640 = vpop.f32.mrb[0].mxu0
  %641 = vmatprep.mubr.bf16.mxu0 0
  %642 = vmatmul.mubr.bf16.gmra.mrb[0].mxu0 %v277
  %v643 = vpop.f32.mrb[0].mxu0
  %v644 = vadd.f32 0.0, %v643
  %v645 = vpop.f32.mrb[0].mxu0
  %v646 = vpop.f32.mrb[0].mxu0
  %v647 = vadd.f32 0.0, %v646
  %v648 = vpop.f32.mrb[0].mxu0
  %649 = vmatprep.mubr.bf16.mxu0 0
  %650 = vmatmul.mubr.bf16.gmra.mrb[0].mxu0 %v278
  %v651 = vpop.f32.mrb[0].mxu0
  %v652 = vadd.f32 0.0, %v651
  %v653 = vpop.f32.mrb[0].mxu0
  %v654 = vpop.f32.mrb[0].mxu0
  %v655 = vadd.f32 0.0, %v654
  %v656 = vpop.f32.mrb[0].mxu0
  %657 = vmatprep.mubr.bf16.mxu0 0
  %658 = vmatmul.mubr.bf16.gmra.mrb[0].mxu0 %v279
  %v659 = vpop.f32.mrb[0].mxu0
  %v660 = vadd.f32 0.0, %v659
  %v661 = vpop.f32.mrb[0].mxu0
  %v662 = vpop.f32.mrb[0].mxu0
  %v663 = vadd.f32 0.0, %v662
  %v664 = vpop.f32.mrb[0].mxu0
  %665 = vmatprep.mubr.bf16.mxu0 0
  %666 = vmatmul.mubr.bf16.gmra.mrb[0].mxu0 %v280
  %v667 = vpop.f32.mrb[0].mxu0
  %v668 = vadd.f32 0.0, %v667
  %v669 = vpop.f32.mrb[0].mxu0
  %v670 = vpop.f32.mrb[0].mxu0
  %v671 = vadd.f32 0.0, %v670
  %v672 = vpop.f32.mrb[0].mxu0
  %673 = vmatprep.mubr.bf16.mxu0 0
  %674 = vmatmul.mubr.bf16.gmra.mrb[0].mxu0 %v281
  %v675 = vpop.f32.mrb[0].mxu0
  %v676 = vadd.f32 0.0, %v675
  %v677 = vpop.f32.mrb[0].mxu0
  %v678 = vpop.f32.mrb[0].mxu0
  %v679 = vadd.f32 0.0, %v678
  %v680 = vpop.f32.mrb[0].mxu0
  %681 = vmatprep.mubr.bf16.mxu0 0
  %682 = vmatmul.mubr.bf16.gmra.mrb[0].mxu0 %v282
  %v683 = vpop.f32.mrb[0].mxu0
  %v684 = vadd.f32 0.0, %v683
  %v685 = vpop.f32.mrb[0].mxu0
  %v686 = vpop.f32.mrb[0].mxu0
  %v687 = vadd.f32 0.0, %v686
  %v688 = vpop.f32.mrb[0].mxu0
  %689 = vmatprep.mubr.bf16.mxu0 0
  %690 = vmatmul.mubr.bf16.gmra.mrb[0].mxu0 %v283
  %v691 = vpop.f32.mrb[0].mxu0
  %v692 = vadd.f32 0.0, %v691
  %v693 = vpop.f32.mrb[0].mxu0
  %v694 = vpop.f32.mrb[0].mxu0
  %v695 = vpop.f32.mrb[0].mxu0
  %696 = vdwg.mxu0
  %v697 = vtanh.pop %v404
  %v698 = vtanh.pop %v407
  %v699 = vtanh.pop %v412
  %v700 = vtanh.pop %v415
  %v701 = vtanh.pop %v420
  %v702 = vtanh.pop %v423
  %v703 = vtanh.pop %v428
  %v704 = vtanh.pop %v431
  %v705 = vtanh.pop %v436
  %v706 = vtanh.pop %v439
  %v707 = vtanh.pop %v444
  %v708 = vtanh.pop %v447
  %v709 = vtanh.pop %v452
  %v710 = vtanh.pop %v455
  %v711 = vtanh.pop %v460
  %v712 = vtanh.pop %v463
  %v713 = vtanh.pop %v468
  %v714 = vtanh.pop %v471
  %v715 = vtanh.pop %v476
  %v716 = vtanh.pop %v479
  %v717 = vtanh.pop %v484
  %v718 = vtanh.pop %v487
  %v719 = vtanh.pop %v492
  %v720 = vtanh.pop %v495
  %v721 = vtanh.pop %v500
  %v722 = vtanh.pop %v503
  %v723 = vtanh.pop %v508
  %v724 = vtanh.pop %v511
  %v725 = vtanh.pop %v516
  %v726 = vtanh.pop %v519
  %v727 = vtanh.pop %v524
  %v728 = vtanh.pop %v527
  %v729 = vtanh.pop %v532
  %v730 = vtanh.pop %v535
  %v731 = vtanh.pop %v540
  %v732 = vtanh.pop %v543
  %v733 = vtanh.pop %v548
  %v734 = vtanh.pop %v551
  %v735 = vtanh.pop %v556
  %v736 = vtanh.pop %v559
  %v737 = vtanh.pop %v564
  %v738 = vtanh.pop %v567
  %v739 = vtanh.pop %v572
  %v740 = vtanh.pop %v575
  %v741 = vtanh.pop %v580
  %v742 = vtanh.pop %v583
  %v743 = vtanh.pop %v588
  %v744 = vtanh.pop %v591
  %v745 = vtanh.pop %v596
  %v746 = vtanh.pop %v599
  %v747 = vtanh.pop %v604
  %v748 = vtanh.pop %v607
  %v749 = vtanh.pop %v612
  %v750 = vtanh.pop %v615
  %v751 = vtanh.pop %v620
  %v752 = vtanh.pop %v623
  %v753 = vtanh.pop %v628
  %v754 = vtanh.pop %v631
  %v755 = vtanh.pop %v636
  %v756 = vtanh.pop %v639
  %v757 = vtanh.pop %v644
  %v758 = vtanh.pop %v647
  %v759 = vtanh.pop %v652
  %v760 = vtanh.pop %v655
  %v761 = vtanh.pop %v660
  %v762 = vtanh.pop %v663
  %v763 = vtanh.pop %v668
  %v764 = vtanh.pop %v671
  %v765 = vtanh.pop %v676
  %v766 = vtanh.pop %v679
  %v767 = vtanh.pop %v684
  %v768 = vtanh.pop %v687
  %v769 = vtanh.pop %v692
  %v770 = vpack.c.bf16 %v698, %v697
  %v771 = vpack.c.bf16 %v700, %v699
  %v772 = vpack.c.bf16 %v702, %v701
  %v773 = vpack.c.bf16 %v704, %v703
  %v774 = vpack.c.bf16 %v706, %v705
  %v775 = vpack.c.bf16 %v708, %v707
  %v776 = vpack.c.bf16 %v710, %v709
  %v777 = vpack.c.bf16 %v712, %v711
  %v778 = vpack.c.bf16 %v714, %v713
  %v779 = vpack.c.bf16 %v716, %v715
  %v780 = vpack.c.bf16 %v718, %v717
  %v781 = vpack.c.bf16 %v720, %v719
  %v782 = vpack.c.bf16 %v722, %v721
  %v783 = vpack.c.bf16 %v724, %v723
  %v784 = vpack.c.bf16 %v726, %v725
  %v785 = vpack.c.bf16 %v728, %v727
  %v786 = vpack.c.bf16 %v730, %v729
  %v787 = vpack.c.bf16 %v732, %v731
  %v788 = vpack.c.bf16 %v734, %v733
  %v789 = vpack.c.bf16 %v736, %v735
  %v790 = vpack.c.bf16 %v738, %v737
  %v791 = vpack.c.bf16 %v740, %v739
  %v792 = vpack.c.bf16 %v742, %v741
  %v793 = vpack.c.bf16 %v744, %v743
  %v794 = vpack.c.bf16 %v746, %v745
  %v795 = vpack.c.bf16 %v748, %v747
  %v796 = vpack.c.bf16 %v750, %v749
  %v797 = vpack.c.bf16 %v752, %v751
  %v798 = vpack.c.bf16 %v754, %v753
  %v799 = vpack.c.bf16 %v756, %v755
  %v800 = vpack.c.bf16 %v758, %v757
  %v801 = vpack.c.bf16 %v760, %v759
  %v802 = vpack.c.bf16 %v762, %v761
  %v803 = vpack.c.bf16 %v764, %v763
  %v804 = vpack.c.bf16 %v766, %v765
  %v805 = vpack.c.bf16 %v768, %v767
  %v806 = vpack.c.bf16 %v769, %v769
  %v844 = vunpack.c.l.b16 %v770
  %v845 = vunpack.c.h.b16 %v770
  %v846 = vunpack.c.l.b16 %v771
  %v847 = vunpack.c.h.b16 %v771
  %v848 = vunpack.c.l.b16 %v772
  %v849 = vunpack.c.h.b16 %v772
  %v850 = vunpack.c.l.b16 %v773
  %v851 = vunpack.c.h.b16 %v773
  %v852 = vunpack.c.l.b16 %v774
  %v853 = vunpack.c.h.b16 %v774
  %v854 = vunpack.c.l.b16 %v775
  %v855 = vunpack.c.h.b16 %v775
  %v856 = vunpack.c.l.b16 %v776
  %v857 = vunpack.c.h.b16 %v776
  %v858 = vunpack.c.l.b16 %v777
  %v859 = vunpack.c.h.b16 %v777
  %v860 = vunpack.c.l.b16 %v778
  %v861 = vunpack.c.h.b16 %v778
  %v862 = vunpack.c.l.b16 %v779
  %v863 = vunpack.c.h.b16 %v779
  %v864 = vunpack.c.l.b16 %v780
  %v865 = vunpack.c.h.b16 %v780
  %v866 = vunpack.c.l.b16 %v781
  %v867 = vunpack.c.h.b16 %v781
  %v868 = vunpack.c.l.b16 %v782
  %v869 = vunpack.c.h.b16 %v782
  %v870 = vunpack.c.l.b16 %v783
  %v871 = vunpack.c.h.b16 %v783
  %v872 = vunpack.c.l.b16 %v784
  %v873 = vunpack.c.h.b16 %v784
  %v874 = vunpack.c.l.b16 %v785
  %v875 = vunpack.c.h.b16 %v785
  %v876 = vunpack.c.l.b16 %v786
  %v877 = vunpack.c.h.b16 %v786
  %v878 = vunpack.c.l.b16 %v787
  %v879 = vunpack.c.h.b16 %v787
  %v880 = vunpack.c.l.b16 %v788
  %v881 = vunpack.c.h.b16 %v788
  %v882 = vunpack.c.l.b16 %v789
  %v883 = vunpack.c.h.b16 %v789
  %v884 = vunpack.c.l.b16 %v790
  %v885 = vunpack.c.h.b16 %v790
  %v886 = vunpack.c.l.b16 %v791
  %v887 = vunpack.c.h.b16 %v791
  %v888 = vunpack.c.l.b16 %v792
  %v889 = vunpack.c.h.b16 %v792
  %v890 = vunpack.c.l.b16 %v793
  %v891 = vunpack.c.h.b16 %v793
  %v892 = vunpack.c.l.b16 %v794
  %v893 = vunpack.c.h.b16 %v794
  %v894 = vunpack.c.l.b16 %v795
  %v895 = vunpack.c.h.b16 %v795
  %v896 = vunpack.c.l.b16 %v796
  %v897 = vunpack.c.h.b16 %v796
  %v898 = vunpack.c.l.b16 %v797
  %v899 = vunpack.c.h.b16 %v797
  %v900 = vunpack.c.l.b16 %v798
  %v901 = vunpack.c.h.b16 %v798
  %v902 = vunpack.c.l.b16 %v799
  %v903 = vunpack.c.h.b16 %v799
  %v904 = vunpack.c.l.b16 %v800
  %v905 = vunpack.c.h.b16 %v800
  %v906 = vunpack.c.l.b16 %v801
  %v907 = vunpack.c.h.b16 %v801
  %v908 = vunpack.c.l.b16 %v802
  %v909 = vunpack.c.h.b16 %v802
  %v910 = vunpack.c.l.b16 %v803
  %v911 = vunpack.c.h.b16 %v803
  %v912 = vunpack.c.l.b16 %v804
  %v913 = vunpack.c.h.b16 %v804
  %v914 = vunpack.c.l.b16 %v805
  %v915 = vunpack.c.h.b16 %v805
  %v916 = vunpack.c.l.b16 %v806
  %v917 = vpack.c.b16 %v844, %v844
  %v918 = vpack.c.b16 %v845, %v845
  %v919 = vpack.c.b16 %v846, %v846
  %v920 = vpack.c.b16 %v847, %v847
  %v921 = vpack.c.b16 %v848, %v848
  %v922 = vpack.c.b16 %v849, %v849
  %v923 = vpack.c.b16 %v850, %v850
  %v924 = vpack.c.b16 %v851, %v851
  %v925 = vpack.c.b16 %v852, %v852
  %v926 = vpack.c.b16 %v853, %v853
  %v927 = vpack.c.b16 %v854, %v854
  %v928 = vpack.c.b16 %v855, %v855
  %v929 = vpack.c.b16 %v856, %v856
  %v930 = vpack.c.b16 %v857, %v857
  %v931 = vpack.c.b16 %v858, %v858
  %v932 = vpack.c.b16 %v859, %v859
  %v933 = vpack.c.b16 %v860, %v860
  %v934 = vpack.c.b16 %v861, %v861
  %v935 = vpack.c.b16 %v862, %v862
  %v936 = vpack.c.b16 %v863, %v863
  %v937 = vpack.c.b16 %v864, %v864
  %v938 = vpack.c.b16 %v865, %v865
  %v939 = vpack.c.b16 %v866, %v866
  %v940 = vpack.c.b16 %v867, %v867
  %v941 = vpack.c.b16 %v868, %v868
  %v942 = vpack.c.b16 %v869, %v869
  %v943 = vpack.c.b16 %v870, %v870
  %v944 = vpack.c.b16 %v871, %v871
  %v945 = vpack.c.b16 %v872, %v872
  %v946 = vpack.c.b16 %v873, %v873
  %v947 = vpack.c.b16 %v874, %v874
  %v948 = vpack.c.b16 %v875, %v875
  %v949 = vpack.c.b16 %v876, %v876
  %v950 = vpack.c.b16 %v877, %v877
  %v951 = vpack.c.b16 %v878, %v878
  %v952 = vpack.c.b16 %v879, %v879
  %v953 = vpack.c.b16 %v880, %v880
  %v954 = vpack.c.b16 %v881, %v881
  %v955 = vpack.c.b16 %v882, %v882
  %v956 = vpack.c.b16 %v883, %v883
  %v957 = vpack.c.b16 %v884, %v884
  %v958 = vpack.c.b16 %v885, %v885
  %v959 = vpack.c.b16 %v886, %v886
  %v960 = vpack.c.b16 %v887, %v887
  %v961 = vpack.c.b16 %v888, %v888
  %v962 = vpack.c.b16 %v889, %v889
  %v963 = vpack.c.b16 %v890, %v890
  %v964 = vpack.c.b16 %v891, %v891
  %v965 = vpack.c.b16 %v892, %v892
  %v966 = vpack.c.b16 %v893, %v893
  %v967 = vpack.c.b16 %v894, %v894
  %v968 = vpack.c.b16 %v895, %v895
  %v969 = vpack.c.b16 %v896, %v896
  %v970 = vpack.c.b16 %v897, %v897
  %v971 = vpack.c.b16 %v898, %v898
  %v972 = vpack.c.b16 %v899, %v899
  %v973 = vpack.c.b16 %v900, %v900
  %v974 = vpack.c.b16 %v901, %v901
  %v975 = vpack.c.b16 %v902, %v902
  %v976 = vpack.c.b16 %v903, %v903
  %v977 = vpack.c.b16 %v904, %v904
  %v978 = vpack.c.b16 %v905, %v905
  %v979 = vpack.c.b16 %v906, %v906
  %v980 = vpack.c.b16 %v907, %v907
  %v981 = vpack.c.b16 %v908, %v908
  %v982 = vpack.c.b16 %v909, %v909
  %v983 = vpack.c.b16 %v910, %v910
  %v984 = vpack.c.b16 %v911, %v911
  %v985 = vpack.c.b16 %v912, %v912
  %v986 = vpack.c.b16 %v913, %v913
  %v987 = vpack.c.b16 %v914, %v914
  %v988 = vpack.c.b16 %v915, %v915
  %v989 = vpack.c.b16 %v916, %v916
  %1063 = vst [vmem:[%s2] sm:$0xf] %v917
  %1064 = vst [vmem:[%s2 + $0x4] sm:$0xf] %v918
  %1065 = vst [vmem:[%s2 + $0x8] sm:$0xf] %v919
  %1066 = vst [vmem:[%s2 + $0xc] sm:$0xf] %v920
  %1067 = vst [vmem:[%s2 + $0x10] sm:$0xf] %v921
  %1068 = vst [vmem:[%s2 + $0x14] sm:$0xf] %v922
  %1069 = vst [vmem:[%s2 + $0x18] sm:$0xf] %v923
  %1070 = vst [vmem:[%s2 + $0x1c] sm:$0xf] %v924
  %1071 = vst [vmem:[%s2 + $0x20] sm:$0xf] %v925
  %1072 = vst [vmem:[%s2 + $0x24] sm:$0xf] %v926
  %1073 = vst [vmem:[%s2 + $0x28] sm:$0xf] %v927
  %1074 = vst [vmem:[%s2 + $0x2c] sm:$0xf] %v928
  %1075 = vst [vmem:[%s2 + $0x30] sm:$0xf] %v929
  %1076 = vst [vmem:[%s2 + $0x34] sm:$0xf] %v930
  %1077 = vst [vmem:[%s2 + $0x38] sm:$0xf] %v931
  %1078 = vst [vmem:[%s2 + $0x3c] sm:$0xf] %v932
  %1079 = vst [vmem:[%s2 + $0x40] sm:$0xf] %v933
  %1080 = vst [vmem:[%s2 + $0x44] sm:$0xf] %v934
  %1081 = vst [vmem:[%s2 + $0x48] sm:$0xf] %v935
  %1082 = vst [vmem:[%s2 + $0x4c] sm:$0xf] %v936
  %1083 = vst [vmem:[%s2 + $0x50] sm:$0xf] %v937
  %1084 = vst [vmem:[%s2 + $0x54] sm:$0xf] %v938
  %1085 = vst [vmem:[%s2 + $0x58] sm:$0xf] %v939
  %1086 = vst [vmem:[%s2 + $0x5c] sm:$0xf] %v940
  %1087 = vst [vmem:[%s2 + $0x60] sm:$0xf] %v941
  %1088 = vst [vmem:[%s2 + $0x64] sm:$0xf] %v942
  %1089 = vst [vmem:[%s2 + $0x68] sm:$0xf] %v943
  %1090 = vst [vmem:[%s2 + $0x6c] sm:$0xf] %v944
  %1091 = vst [vmem:[%s2 + $0x70] sm:$0xf] %v945
  %1092 = vst [vmem:[%s2 + $0x74] sm:$0xf] %v946
  %1093 = vst [vmem:[%s2 + $0x78] sm:$0xf] %v947
  %1094 = vst [vmem:[%s2 + $0x7c] sm:$0xf] %v948
  %1095 = vst [vmem:[%s2 + $0x80] sm:$0xf] %v949
  %1096 = vst [vmem:[%s2 + $0x84] sm:$0xf] %v950
  %1097 = vst [vmem:[%s2 + $0x88] sm:$0xf] %v951
  %1098 = vst [vmem:[%s2 + $0x8c] sm:$0xf] %v952
  %1099 = vst [vmem:[%s2 + $0x90] sm:$0xf] %v953
  %1100 = vst [vmem:[%s2 + $0x94] sm:$0xf] %v954
  %1101 = vst [vmem:[%s2 + $0x98] sm:$0xf] %v955
  %1102 = vst [vmem:[%s2 + $0x9c] sm:$0xf] %v956
  %1103 = vst [vmem:[%s2 + $0xa0] sm:$0xf] %v957
  %1104 = vst [vmem:[%s2 + $0xa4] sm:$0xf] %v958
  %1105 = vst [vmem:[%s2 + $0xa8] sm:$0xf] %v959
  %1106 = vst [vmem:[%s2 + $0xac] sm:$0xf] %v960
  %1107 = vst [vmem:[%s2 + $0xb0] sm:$0xf] %v961
  %1108 = vst [vmem:[%s2 + $0xb4] sm:$0xf] %v962
  %1109 = vst [vmem:[%s2 + $0xb8] sm:$0xf] %v963
  %1110 = vst [vmem:[%s2 + $0xbc] sm:$0xf] %v964
  %1111 = vst [vmem:[%s2 + $0xc0] sm:$0xf] %v965
  %1112 = vst [vmem:[%s2 + $0xc4] sm:$0xf] %v966
  %1113 = vst [vmem:[%s2 + $0xc8] sm:$0xf] %v967
  %1114 = vst [vmem:[%s2 + $0xcc] sm:$0xf] %v968
  %1115 = vst [vmem:[%s2 + $0xd0] sm:$0xf] %v969
  %1116 = vst [vmem:[%s2 + $0xd4] sm:$0xf] %v970
  %1117 = vst [vmem:[%s2 + $0xd8] sm:$0xf] %v971
  %1118 = vst [vmem:[%s2 + $0xdc] sm:$0xf] %v972
  %1119 = vst [vmem:[%s2 + $0xe0] sm:$0xf] %v973
  %1120 = vst [vmem:[%s2 + $0xe4] sm:$0xf] %v974
  %1121 = vst [vmem:[%s2 + $0xe8] sm:$0xf] %v975
  %1122 = vst [vmem:[%s2 + $0xec] sm:$0xf] %v976
  %1123 = vst [vmem:[%s2 + $0xf0] sm:$0xf] %v977
  %1124 = vst [vmem:[%s2 + $0xf4] sm:$0xf] %v978
  %1125 = vst [vmem:[%s2 + $0xf8] sm:$0xf] %v979
  %1126 = vst [vmem:[%s2 + $0xfc] sm:$0xf] %v980
  %1127 = vst [vmem:[%s2 + $0x100] sm:$0xf] %v981
  %1128 = vst [vmem:[%s2 + $0x104] sm:$0xf] %v982
  %1129 = vst [vmem:[%s2 + $0x108] sm:$0xf] %v983
  %1130 = vst [vmem:[%s2 + $0x10c] sm:$0xf] %v984
  %1131 = vst [vmem:[%s2 + $0x110] sm:$0xf] %v985
  %1132 = vst [vmem:[%s2 + $0x114] sm:$0xf] %v986
  %1133 = vst [vmem:[%s2 + $0x118] sm:$0xf] %v987
  %1134 = vst [vmem:[%s2 + $0x11c] sm:$0xf] %v988
  %1135 = vst [vmem:[%s2 + $0x120] sm:$0x1] %v989
  // Predicated region
  $region10: #{_forward_impl.7} parent=0 // pred_check
    _
  $region11: #{_forward_impl.7} parent=0 // pred_check_branch
    %1137 = sbr.rel (0) target = $region13
  $region12: #{_forward_impl.7} parent=0 // pred_region
    _
  $region13: #{_forward_impl.7} parent=0 // pred_fallthru
    _
  // Predicated region
  $region14: #{_forward_impl.7} parent=0 // pred_check
    _
  $region15: #{_forward_impl.7} parent=0 // pred_check_branch
    %1139 = sbr.rel (0) target = $region17
  $region16: #{_forward_impl.7} parent=0 // pred_region
    _
  $region17: #{_forward_impl.7} parent=0 // pred_fallthru
    _

</llo_original>
